<compile_context>
chip_gen: v6e
topology: v6e:2x2x1
jax: 0.10.0
libtpu: 0.0.40
codegen_flags: <defaults>
</compile_context>

<pallas_src>
import jax
import jax.numpy as jnp
from jax.experimental import pallas as pl
from jax.experimental.pallas import tpu as pltpu

EPS = 1e-5  # torch.nn.InstanceNorm2d default eps


# ---------------------------------------------------------------------------
# In-kernel helpers
# ---------------------------------------------------------------------------
def _pad_conv3x3(x, w_ref, xp_ref, patch_ref, H, W, C):
    """ReflectionPad2d(1) + 3x3 'valid' conv as a single im2col matmul.

    x:        (H, W, C) float32 value.
    w_ref:    (9*C, C) VMEM ref, row index = (kh*3 + kw)*C + cin.
    xp_ref:   (H+2, W+2, C) VMEM scratch (padded tile).
    patch_ref:(H*W, 9*C) VMEM scratch (im2col matrix).
    Returns (H*W, C) float32.
    """
    # --- reflection pad (rows first, then columns; corners fall out of the
    #     column pass reading the already row-padded tile) ---
    xp_ref[1:H + 1, 1:W + 1, :] = x
    xp_ref[0:1, 1:W + 1, :] = x[1:2, :, :]
    xp_ref[H + 1:H + 2, 1:W + 1, :] = x[H - 2:H - 1, :, :]
    xp_ref[:, 0:1, :] = xp_ref[:, 2:3, :]
    xp_ref[:, W + 1:W + 2, :] = xp_ref[:, W - 1:W, :]

    # --- build the (H*W, 9*C) im2col matrix once ---
    for k in range(9):
        kh, kw = divmod(k, 3)
        patch_ref[:, k * C:(k + 1) * C] = (
            xp_ref[kh:kh + H, kw:kw + W, :].reshape(H * W, C))

    # --- single MXU matmul with K = 9*C ---
    return jnp.dot(patch_ref[...], w_ref[...],
                   preferred_element_type=jnp.float32)


def _instance_norm(z, g_ref, be_ref):
    """Affine instance norm over axis 0 of z (H*W, C); one-pass statistics."""
    inv_n = 1.0 / z.shape[0]
    mean = jnp.sum(z, axis=0, keepdims=True) * inv_n
    ex2 = jnp.sum(z * z, axis=0, keepdims=True) * inv_n
    var = ex2 - mean * mean
    scale = jax.lax.rsqrt(var + EPS) * g_ref[...]
    shift = be_ref[...] - mean * scale
    return z * scale + shift


# ---------------------------------------------------------------------------
# Fused kernel: one batch element per grid step, everything in VMEM.
# ---------------------------------------------------------------------------
def residual_block_kernel(x_ref, w1_ref, g1_ref, be1_ref, w2_ref, g2_ref,
                          be2_ref, o_ref, xp_ref, patch_ref):
    _, H, W, C = o_ref.shape
    x = x_ref[0]                                            # (H, W, C)

    # stage 1: relu(in1(conv1(x)))  (conv bias folded away by IN mean-sub)
    z1 = _pad_conv3x3(x, w1_ref, xp_ref, patch_ref, H, W, C)   # (H*W, C)
    y = jnp.maximum(_instance_norm(z1, g1_ref, be1_ref), 0.0)

    # stage 2: in2(conv2(y)) + x   (scratch tiles are reused)
    z2 = _pad_conv3x3(y.reshape(H, W, C), w2_ref, xp_ref, patch_ref, H, W, C)
    out = _instance_norm(z2, g2_ref, be2_ref) + x.reshape(H * W, C)

    o_ref[0] = out.reshape(H, W, C)


# ---------------------------------------------------------------------------
# Wrappers
# ---------------------------------------------------------------------------
def _full_spec(a):
    # Whole (small) parameter array resident in VMEM every grid step.
    return pl.BlockSpec(a.shape, lambda n: (0,) * a.ndim)


def _vmem_limit_bytes(H, W, C):
    f32 = 4
    img = H * W * C * f32
    est = (4 * img                          # x / out blocks, double-buffered
           + (H + 2) * (W + 2) * C * f32    # padded-tile scratch
           + H * W * 9 * C * f32            # im2col scratch
           + 2 * 9 * C * C * f32            # conv weights resident in VMEM
           + 6 * img)                       # compiler-managed temporaries
    # Explicit budget with headroom, capped at v7x's 64 MiB physical VMEM.
    return int(min(max(2 * est, 32 * 1024 * 1024), 64 * 1024 * 1024))


def residual_block_nhwc(x_nhwc, params):
    """Fused ResidualBlock forward on NHWC activations."""
    w1, g1, be1, w2, g2, be2 = params
    N, H, W, C = x_nhwc.shape

    return pl.pallas_call(
        residual_block_kernel,
        out_shape=jax.ShapeDtypeStruct((N, H, W, C), jnp.float32),
        grid=(N,),
        in_specs=[
            pl.BlockSpec((1, H, W, C), lambda n: (n, 0, 0, 0)),
            _full_spec(w1), _full_spec(g1), _full_spec(be1),
            _full_spec(w2), _full_spec(g2), _full_spec(be2),
        ],
        out_specs=pl.BlockSpec((1, H, W, C), lambda n: (n, 0, 0, 0)),
        scratch_shapes=[
            pltpu.VMEM((H + 2, W + 2, C), jnp.float32),   # padded tile
            pltpu.VMEM((H * W, 9 * C), jnp.float32),      # im2col matrix
        ],
        compiler_params=pltpu.CompilerParams(
            dimension_semantics=("parallel",),
            vmem_limit_bytes=_vmem_limit_bytes(H, W, C),
        ),
    )(x_nhwc, w1, g1, be1, w2, g2, be2)


def residual_block(x_nchw, params):
    """ResidualBlock forward, NCHW in / NCHW out (PyTorch convention).

    NOTE: for a chain of blocks keep activations NHWC end-to-end and call
    residual_block_nhwc directly; these transposes are per-call boundary cost.
    """
    x = jnp.transpose(x_nchw, (0, 2, 3, 1))
    out = residual_block_nhwc(x, params)
    return jnp.transpose(out, (0, 3, 1, 2))


def convert_params(w1_t, g1_t, be1_t, w2_t, g2_t, be2_t):
    """PyTorch-layout params -> kernel layout.

    Conv weights (Cout, Cin, 3, 3) -> (9*Cin, Cout) with row = (kh*3+kw)*Cin+cin.
    Conv biases are intentionally NOT taken: InstanceNorm's mean subtraction
    cancels a per-channel constant shift exactly.
    """
    C = w1_t.shape[0]

    def w(wt):
        return jnp.transpose(wt, (2, 3, 1, 0)).reshape(9 * C, C)

    return (w(w1_t), g1_t.reshape(1, C), be1_t.reshape(1, C),
            w(w2_t), g2_t.reshape(1, C), be2_t.reshape(1, C))


# ---------------------------------------------------------------------------
# Pure-JAX reference (includes the conv bias, to demonstrate it cancels).
# ---------------------------------------------------------------------------
def _ref_conv(x, w_oihw, b):
    xp = jnp.pad(x, ((0, 0), (0, 0), (1, 1), (1, 1)), mode="reflect")
    y = jax.lax.conv_general_dilated(
        xp, w_oihw, (1, 1), "VALID",
        dimension_numbers=("NCHW", "OIHW", "NCHW"),
        precision=jax.lax.Precision.HIGHEST)
    return y + b.reshape(1, -1, 1, 1)


def _ref_in(x, g, be):
    m = jnp.mean(x, axis=(2, 3), keepdims=True)
    v = jnp.mean((x - m) ** 2, axis=(2, 3), keepdims=True)
    return (x - m) * jax.lax.rsqrt(v + EPS) * g.reshape(1, -1, 1, 1) + be.reshape(1, -1, 1, 1)


def residual_block_ref(x, torch_params):
    w1, b1, g1, be1, w2, b2, g2, be2 = torch_params
    out = jnp.maximum(_ref_in(_ref_conv(x, w1, b1), g1, be1), 0.0)
    out = _ref_in(_ref_conv(out, w2, b2), g2, be2)
    return out + x


if __name__ == "__main__":
    N, C, H, W = 2, 4, 16, 16

    key = jax.random.PRNGKey(0)
    kx, kw1, kb1, kw2, kb2, kg1, kbe1, kg2, kbe2 = jax.random.split(key, 9)

    x = jax.random.normal(kx, (N, C, H, W), jnp.float32)

    # PyTorch-shaped synthetic parameters: conv (C,C,3,3)+bias(C,), IN affine (C,).
    w1_t = jax.random.normal(kw1, (C, C, 3, 3), jnp.float32) * 0.1
    b1_t = jax.random.normal(kb1, (C,), jnp.float32) * 0.1
    w2_t = jax.random.normal(kw2, (C, C, 3, 3), jnp.float32) * 0.1
    b2_t = jax.random.normal(kb2, (C,), jnp.float32) * 0.1
    g1_t = 1.0 + 0.1 * jax.random.normal(kg1, (C,), jnp.float32)
    be1_t = 0.1 * jax.random.normal(kbe1, (C,), jnp.float32)
    g2_t = 1.0 + 0.1 * jax.random.normal(kg2, (C,), jnp.float32)
    be2_t = 0.1 * jax.random.normal(kbe2, (C,), jnp.float32)

    params = convert_params(w1_t, g1_t, be1_t, w2_t, g2_t, be2_t)

    out = jax.block_until_ready(residual_block(x, params))

    ref = residual_block_ref(
        x, (w1_t, b1_t, g1_t, be1_t, w2_t, b2_t, g2_t, be2_t))
    assert out.shape == (N, C, H, W)
    max_err = float(jnp.max(jnp.abs(out - ref)))
    assert jnp.allclose(out, ref, rtol=2e-3, atol=2e-3), max_err

    print("KERNEL_OK")
</pallas_src>

<mosaic_0001>
module attributes {stable_mosaic.version = 11 : i64} {
  func.func @residual_block_kernel(%arg0: i32, %arg1: memref<1x16x16x4xf32, #tpu.memory_space<vmem>>, %arg2: memref<36x4xf32, #tpu.memory_space<vmem>>, %arg3: memref<1x4xf32, #tpu.memory_space<vmem>>, %arg4: memref<1x4xf32, #tpu.memory_space<vmem>>, %arg5: memref<36x4xf32, #tpu.memory_space<vmem>>, %arg6: memref<1x4xf32, #tpu.memory_space<vmem>>, %arg7: memref<1x4xf32, #tpu.memory_space<vmem>>, %arg8: memref<1x16x16x4xf32, #tpu.memory_space<vmem>>, %arg9: memref<18x18x4xf32, #tpu.memory_space<vmem>>, %arg10: memref<256x36xf32, #tpu.memory_space<vmem>>) attributes {dimension_semantics = [#tpu.dimension_semantics<parallel>], iteration_bounds = array<i64: 2>, scalar_prefetch = 0 : i64, scratch_operands = 2 : i64, tpu.core_type = #tpu.core_type<tc>, window_params = [{transform_indices = @transform_0, window_bounds = array<i64: 1, 16, 16, 4>}, {pipeline_mode = #tpu.pipeline_mode<synchronous>, transform_indices = @transform_1, window_bounds = array<i64: 36, 4>}, {pipeline_mode = #tpu.pipeline_mode<synchronous>, transform_indices = @transform_2, window_bounds = array<i64: 1, 4>}, {pipeline_mode = #tpu.pipeline_mode<synchronous>, transform_indices = @transform_3, window_bounds = array<i64: 1, 4>}, {pipeline_mode = #tpu.pipeline_mode<synchronous>, transform_indices = @transform_4, window_bounds = array<i64: 36, 4>}, {pipeline_mode = #tpu.pipeline_mode<synchronous>, transform_indices = @transform_5, window_bounds = array<i64: 1, 4>}, {pipeline_mode = #tpu.pipeline_mode<synchronous>, transform_indices = @transform_6, window_bounds = array<i64: 1, 4>}, {transform_indices = @transform_7, window_bounds = array<i64: 1, 16, 16, 4>}]} {
    %c0 = arith.constant 0 : index
    %c0_0 = arith.constant 0 : index
    %c0_1 = arith.constant 0 : index
    %c0_2 = arith.constant 0 : index
    %0 = vector.load %arg1[%c0, %c0_0, %c0_1, %c0_2] : memref<1x16x16x4xf32, #tpu.memory_space<vmem>>, vector<1x16x16x4xf32>
    %1 = vector.shape_cast %0 : vector<1x16x16x4xf32> to vector<16x16x4xf32>
    %c1 = arith.constant 1 : index
    %c1_3 = arith.constant 1 : index
    %c0_4 = arith.constant 0 : index
    %2 = vector.load %arg9[%c1, %c1_3, %c0_4] : memref<18x18x4xf32, #tpu.memory_space<vmem>>, vector<16x16x4xf32>
    tpu.vector_store %arg9[%c1, %c1_3, %c0_4], %1 {strides = array<i32>} : memref<18x18x4xf32, #tpu.memory_space<vmem>>, vector<16x16x4xf32>,
    %3 = vector.extract_strided_slice %1 {offsets = [1, 0, 0], sizes = [1, 16, 4], strides = [1, 1, 1]} : vector<16x16x4xf32> to vector<1x16x4xf32>
    %c0_5 = arith.constant 0 : index
    %c1_6 = arith.constant 1 : index
    %c0_7 = arith.constant 0 : index
    %4 = vector.load %arg9[%c0_5, %c1_6, %c0_7] : memref<18x18x4xf32, #tpu.memory_space<vmem>>, vector<1x16x4xf32>
    tpu.vector_store %arg9[%c0_5, %c1_6, %c0_7], %3 {strides = array<i32>} : memref<18x18x4xf32, #tpu.memory_space<vmem>>, vector<1x16x4xf32>,
    %5 = vector.extract_strided_slice %1 {offsets = [14, 0, 0], sizes = [1, 16, 4], strides = [1, 1, 1]} : vector<16x16x4xf32> to vector<1x16x4xf32>
    %c17 = arith.constant 17 : index
    %c1_8 = arith.constant 1 : index
    %c0_9 = arith.constant 0 : index
    %6 = vector.load %arg9[%c17, %c1_8, %c0_9] : memref<18x18x4xf32, #tpu.memory_space<vmem>>, vector<1x16x4xf32>
    tpu.vector_store %arg9[%c17, %c1_8, %c0_9], %5 {strides = array<i32>} : memref<18x18x4xf32, #tpu.memory_space<vmem>>, vector<1x16x4xf32>,
    %c0_10 = arith.constant 0 : index
    %c2 = arith.constant 2 : index
    %c0_11 = arith.constant 0 : index
    %7 = vector.load %arg9[%c0_10, %c2, %c0_11] : memref<18x18x4xf32, #tpu.memory_space<vmem>>, vector<18x1x4xf32>
    %c0_12 = arith.constant 0 : index
    %c0_13 = arith.constant 0 : index
    %c0_14 = arith.constant 0 : index
    %8 = vector.load %arg9[%c0_12, %c0_13, %c0_14] : memref<18x18x4xf32, #tpu.memory_space<vmem>>, vector<18x1x4xf32>
    tpu.vector_store %arg9[%c0_12, %c0_13, %c0_14], %7 {strides = array<i32>} : memref<18x18x4xf32, #tpu.memory_space<vmem>>, vector<18x1x4xf32>,
    %c0_15 = arith.constant 0 : index
    %c15 = arith.constant 15 : index
    %c0_16 = arith.constant 0 : index
    %9 = vector.load %arg9[%c0_15, %c15, %c0_16] : memref<18x18x4xf32, #tpu.memory_space<vmem>>, vector<18x1x4xf32>
    %c0_17 = arith.constant 0 : index
    %c17_18 = arith.constant 17 : index
    %c0_19 = arith.constant 0 : index
    %10 = vector.load %arg9[%c0_17, %c17_18, %c0_19] : memref<18x18x4xf32, #tpu.memory_space<vmem>>, vector<18x1x4xf32>
    tpu.vector_store %arg9[%c0_17, %c17_18, %c0_19], %9 {strides = array<i32>} : memref<18x18x4xf32, #tpu.memory_space<vmem>>, vector<18x1x4xf32>,
    %c0_20 = arith.constant 0 : index
    %c0_21 = arith.constant 0 : index
    %c0_22 = arith.constant 0 : index
    %11 = vector.load %arg9[%c0_20, %c0_21, %c0_22] : memref<18x18x4xf32, #tpu.memory_space<vmem>>, vector<16x16x4xf32>
    %12 = vector.shape_cast %11 : vector<16x16x4xf32> to vector<256x4xf32>
    %c0_23 = arith.constant 0 : index
    %c0_24 = arith.constant 0 : index
    %13 = vector.load %arg10[%c0_23, %c0_24] : memref<256x36xf32, #tpu.memory_space<vmem>>, vector<256x4xf32>
    tpu.vector_store %arg10[%c0_23, %c0_24], %12 {strides = array<i32>} : memref<256x36xf32, #tpu.memory_space<vmem>>, vector<256x4xf32>,
    %c0_25 = arith.constant 0 : index
    %c1_26 = arith.constant 1 : index
    %c0_27 = arith.constant 0 : index
    %14 = vector.load %arg9[%c0_25, %c1_26, %c0_27] : memref<18x18x4xf32, #tpu.memory_space<vmem>>, vector<16x16x4xf32>
    %15 = vector.shape_cast %14 : vector<16x16x4xf32> to vector<256x4xf32>
    %c0_28 = arith.constant 0 : index
    %c4 = arith.constant 4 : index
    %16 = vector.load %arg10[%c0_28, %c4] : memref<256x36xf32, #tpu.memory_space<vmem>>, vector<256x4xf32>
    tpu.vector_store %arg10[%c0_28, %c4], %15 {strides = array<i32>} : memref<256x36xf32, #tpu.memory_space<vmem>>, vector<256x4xf32>,
    %c0_29 = arith.constant 0 : index
    %c2_30 = arith.constant 2 : index
    %c0_31 = arith.constant 0 : index
    %17 = vector.load %arg9[%c0_29, %c2_30, %c0_31] : memref<18x18x4xf32, #tpu.memory_space<vmem>>, vector<16x16x4xf32>
    %18 = vector.shape_cast %17 : vector<16x16x4xf32> to vector<256x4xf32>
    %c0_32 = arith.constant 0 : index
    %c8 = arith.constant 8 : index
    %19 = vector.load %arg10[%c0_32, %c8] : memref<256x36xf32, #tpu.memory_space<vmem>>, vector<256x4xf32>
    tpu.vector_store %arg10[%c0_32, %c8], %18 {strides = array<i32>} : memref<256x36xf32, #tpu.memory_space<vmem>>, vector<256x4xf32>,
    %c1_33 = arith.constant 1 : index
    %c0_34 = arith.constant 0 : index
    %c0_35 = arith.constant 0 : index
    %20 = vector.load %arg9[%c1_33, %c0_34, %c0_35] : memref<18x18x4xf32, #tpu.memory_space<vmem>>, vector<16x16x4xf32>
    %21 = vector.shape_cast %20 : vector<16x16x4xf32> to vector<256x4xf32>
    %c0_36 = arith.constant 0 : index
    %c12 = arith.constant 12 : index
    %22 = vector.load %arg10[%c0_36, %c12] : memref<256x36xf32, #tpu.memory_space<vmem>>, vector<256x4xf32>
    tpu.vector_store %arg10[%c0_36, %c12], %21 {strides = array<i32>} : memref<256x36xf32, #tpu.memory_space<vmem>>, vector<256x4xf32>,
    %c1_37 = arith.constant 1 : index
    %c1_38 = arith.constant 1 : index
    %c0_39 = arith.constant 0 : index
    %23 = vector.load %arg9[%c1_37, %c1_38, %c0_39] : memref<18x18x4xf32, #tpu.memory_space<vmem>>, vector<16x16x4xf32>
    %24 = vector.shape_cast %23 : vector<16x16x4xf32> to vector<256x4xf32>
    %c0_40 = arith.constant 0 : index
    %c16 = arith.constant 16 : index
    %25 = vector.load %arg10[%c0_40, %c16] : memref<256x36xf32, #tpu.memory_space<vmem>>, vector<256x4xf32>
    tpu.vector_store %arg10[%c0_40, %c16], %24 {strides = array<i32>} : memref<256x36xf32, #tpu.memory_space<vmem>>, vector<256x4xf32>,
    %c1_41 = arith.constant 1 : index
    %c2_42 = arith.constant 2 : index
    %c0_43 = arith.constant 0 : index
    %26 = vector.load %arg9[%c1_41, %c2_42, %c0_43] : memref<18x18x4xf32, #tpu.memory_space<vmem>>, vector<16x16x4xf32>
    %27 = vector.shape_cast %26 : vector<16x16x4xf32> to vector<256x4xf32>
    %c0_44 = arith.constant 0 : index
    %c20 = arith.constant 20 : index
    %28 = vector.load %arg10[%c0_44, %c20] : memref<256x36xf32, #tpu.memory_space<vmem>>, vector<256x4xf32>
    tpu.vector_store %arg10[%c0_44, %c20], %27 {strides = array<i32>} : memref<256x36xf32, #tpu.memory_space<vmem>>, vector<256x4xf32>,
    %c2_45 = arith.constant 2 : index
    %c0_46 = arith.constant 0 : index
    %c0_47 = arith.constant 0 : index
    %29 = vector.load %arg9[%c2_45, %c0_46, %c0_47] : memref<18x18x4xf32, #tpu.memory_space<vmem>>, vector<16x16x4xf32>
    %30 = vector.shape_cast %29 : vector<16x16x4xf32> to vector<256x4xf32>
    %c0_48 = arith.constant 0 : index
    %c24 = arith.constant 24 : index
    %31 = vector.load %arg10[%c0_48, %c24] : memref<256x36xf32, #tpu.memory_space<vmem>>, vector<256x4xf32>
    tpu.vector_store %arg10[%c0_48, %c24], %30 {strides = array<i32>} : memref<256x36xf32, #tpu.memory_space<vmem>>, vector<256x4xf32>,
    %c2_49 = arith.constant 2 : index
    %c1_50 = arith.constant 1 : index
    %c0_51 = arith.constant 0 : index
    %32 = vector.load %arg9[%c2_49, %c1_50, %c0_51] : memref<18x18x4xf32, #tpu.memory_space<vmem>>, vector<16x16x4xf32>
    %33 = vector.shape_cast %32 : vector<16x16x4xf32> to vector<256x4xf32>
    %c0_52 = arith.constant 0 : index
    %c28 = arith.constant 28 : index
    %34 = vector.load %arg10[%c0_52, %c28] : memref<256x36xf32, #tpu.memory_space<vmem>>, vector<256x4xf32>
    tpu.vector_store %arg10[%c0_52, %c28], %33 {strides = array<i32>} : memref<256x36xf32, #tpu.memory_space<vmem>>, vector<256x4xf32>,
    %c2_53 = arith.constant 2 : index
    %c2_54 = arith.constant 2 : index
    %c0_55 = arith.constant 0 : index
    %35 = vector.load %arg9[%c2_53, %c2_54, %c0_55] : memref<18x18x4xf32, #tpu.memory_space<vmem>>, vector<16x16x4xf32>
    %36 = vector.shape_cast %35 : vector<16x16x4xf32> to vector<256x4xf32>
    %c0_56 = arith.constant 0 : index
    %c32 = arith.constant 32 : index
    %37 = vector.load %arg10[%c0_56, %c32] : memref<256x36xf32, #tpu.memory_space<vmem>>, vector<256x4xf32>
    tpu.vector_store %arg10[%c0_56, %c32], %36 {strides = array<i32>} : memref<256x36xf32, #tpu.memory_space<vmem>>, vector<256x4xf32>,
    %c0_57 = arith.constant 0 : index
    %c0_58 = arith.constant 0 : index
    %38 = vector.load %arg10[%c0_57, %c0_58] : memref<256x36xf32, #tpu.memory_space<vmem>>, vector<256x36xf32>
    %c0_59 = arith.constant 0 : index
    %c0_60 = arith.constant 0 : index
    %39 = vector.load %arg2[%c0_59, %c0_60] : memref<36x4xf32, #tpu.memory_space<vmem>>, vector<36x4xf32>
    %cst = arith.constant dense<0.000000e+00> : vector<256x4xf32>
    %40 = tpu.matmul %38, %39, %cst {dimension_numbers = #tpu.dot_dimension_numbers<[1], [0], [0], [1], [0, 0, 1, 1], [], []>} : vector<256x36xf32>, vector<36x4xf32>, vector<256x4xf32> -> vector<256x4xf32>
    %cst_61 = arith.constant dense<0.000000e+00> : vector<4xf32>
    %41 = vector.multi_reduction <add>, %40, %cst_61 [0] : vector<256x4xf32> to vector<4xf32>
    %42 = vector.shape_cast %41 : vector<4xf32> to vector<1x4xf32>
    %cst_62 = arith.constant 3.906250e-03 : f32
    %43 = vector.broadcast %cst_62 : f32 to vector<1x4xf32>
    %44 = arith.mulf %42, %43 : vector<1x4xf32>
    %45 = arith.mulf %40, %40 : vector<256x4xf32>
    %cst_63 = arith.constant dense<0.000000e+00> : vector<4xf32>
    %46 = vector.multi_reduction <add>, %45, %cst_63 [0] : vector<256x4xf32> to vector<4xf32>
    %47 = vector.shape_cast %46 : vector<4xf32> to vector<1x4xf32>
    %cst_64 = arith.constant 3.906250e-03 : f32
    %48 = vector.broadcast %cst_64 : f32 to vector<1x4xf32>
    %49 = arith.mulf %47, %48 : vector<1x4xf32>
    %50 = arith.mulf %44, %44 : vector<1x4xf32>
    %51 = arith.subf %49, %50 : vector<1x4xf32>
    %cst_65 = arith.constant 9.99999974E-6 : f32
    %52 = vector.broadcast %cst_65 : f32 to vector<1x4xf32>
    %53 = arith.addf %51, %52 : vector<1x4xf32>
    %54 = math.rsqrt %53 : vector<1x4xf32>
    %c0_66 = arith.constant 0 : index
    %c0_67 = arith.constant 0 : index
    %55 = vector.load %arg3[%c0_66, %c0_67] : memref<1x4xf32, #tpu.memory_space<vmem>>, vector<1x4xf32>
    %56 = arith.mulf %54, %55 : vector<1x4xf32>
    %c0_68 = arith.constant 0 : index
    %c0_69 = arith.constant 0 : index
    %57 = vector.load %arg4[%c0_68, %c0_69] : memref<1x4xf32, #tpu.memory_space<vmem>>, vector<1x4xf32>
    %58 = arith.mulf %44, %56 : vector<1x4xf32>
    %59 = arith.subf %57, %58 : vector<1x4xf32>
    %60 = vector.broadcast %56 : vector<1x4xf32> to vector<256x4xf32>
    %61 = arith.mulf %40, %60 : vector<256x4xf32>
    %62 = vector.broadcast %59 : vector<1x4xf32> to vector<256x4xf32>
    %63 = arith.addf %61, %62 : vector<256x4xf32>
    %cst_70 = arith.constant 0.000000e+00 : f32
    %64 = vector.broadcast %cst_70 : f32 to vector<256x4xf32>
    %65 = arith.maximumf %63, %64 : vector<256x4xf32>
    %66 = vector.shape_cast %65 : vector<256x4xf32> to vector<16x16x4xf32>
    %c1_71 = arith.constant 1 : index
    %c1_72 = arith.constant 1 : index
    %c0_73 = arith.constant 0 : index
    %67 = vector.load %arg9[%c1_71, %c1_72, %c0_73] : memref<18x18x4xf32, #tpu.memory_space<vmem>>, vector<16x16x4xf32>
    tpu.vector_store %arg9[%c1_71, %c1_72, %c0_73], %66 {strides = array<i32>} : memref<18x18x4xf32, #tpu.memory_space<vmem>>, vector<16x16x4xf32>,
    %68 = vector.extract_strided_slice %66 {offsets = [1, 0, 0], sizes = [1, 16, 4], strides = [1, 1, 1]} : vector<16x16x4xf32> to vector<1x16x4xf32>
    %c0_74 = arith.constant 0 : index
    %c1_75 = arith.constant 1 : index
    %c0_76 = arith.constant 0 : index
    %69 = vector.load %arg9[%c0_74, %c1_75, %c0_76] : memref<18x18x4xf32, #tpu.memory_space<vmem>>, vector<1x16x4xf32>
    tpu.vector_store %arg9[%c0_74, %c1_75, %c0_76], %68 {strides = array<i32>} : memref<18x18x4xf32, #tpu.memory_space<vmem>>, vector<1x16x4xf32>,
    %70 = vector.extract_strided_slice %66 {offsets = [14, 0, 0], sizes = [1, 16, 4], strides = [1, 1, 1]} : vector<16x16x4xf32> to vector<1x16x4xf32>
    %c17_77 = arith.constant 17 : index
    %c1_78 = arith.constant 1 : index
    %c0_79 = arith.constant 0 : index
    %71 = vector.load %arg9[%c17_77, %c1_78, %c0_79] : memref<18x18x4xf32, #tpu.memory_space<vmem>>, vector<1x16x4xf32>
    tpu.vector_store %arg9[%c17_77, %c1_78, %c0_79], %70 {strides = array<i32>} : memref<18x18x4xf32, #tpu.memory_space<vmem>>, vector<1x16x4xf32>,
    %c0_80 = arith.constant 0 : index
    %c2_81 = arith.constant 2 : index
    %c0_82 = arith.constant 0 : index
    %72 = vector.load %arg9[%c0_80, %c2_81, %c0_82] : memref<18x18x4xf32, #tpu.memory_space<vmem>>, vector<18x1x4xf32>
    %c0_83 = arith.constant 0 : index
    %c0_84 = arith.constant 0 : index
    %c0_85 = arith.constant 0 : index
    %73 = vector.load %arg9[%c0_83, %c0_84, %c0_85] : memref<18x18x4xf32, #tpu.memory_space<vmem>>, vector<18x1x4xf32>
    tpu.vector_store %arg9[%c0_83, %c0_84, %c0_85], %72 {strides = array<i32>} : memref<18x18x4xf32, #tpu.memory_space<vmem>>, vector<18x1x4xf32>,
    %c0_86 = arith.constant 0 : index
    %c15_87 = arith.constant 15 : index
    %c0_88 = arith.constant 0 : index
    %74 = vector.load %arg9[%c0_86, %c15_87, %c0_88] : memref<18x18x4xf32, #tpu.memory_space<vmem>>, vector<18x1x4xf32>
    %c0_89 = arith.constant 0 : index
    %c17_90 = arith.constant 17 : index
    %c0_91 = arith.constant 0 : index
    %75 = vector.load %arg9[%c0_89, %c17_90, %c0_91] : memref<18x18x4xf32, #tpu.memory_space<vmem>>, vector<18x1x4xf32>
    tpu.vector_store %arg9[%c0_89, %c17_90, %c0_91], %74 {strides = array<i32>} : memref<18x18x4xf32, #tpu.memory_space<vmem>>, vector<18x1x4xf32>,
    %c0_92 = arith.constant 0 : index
    %c0_93 = arith.constant 0 : index
    %c0_94 = arith.constant 0 : index
    %76 = vector.load %arg9[%c0_92, %c0_93, %c0_94] : memref<18x18x4xf32, #tpu.memory_space<vmem>>, vector<16x16x4xf32>
    %77 = vector.shape_cast %76 : vector<16x16x4xf32> to vector<256x4xf32>
    %c0_95 = arith.constant 0 : index
    %c0_96 = arith.constant 0 : index
    %78 = vector.load %arg10[%c0_95, %c0_96] : memref<256x36xf32, #tpu.memory_space<vmem>>, vector<256x4xf32>
    tpu.vector_store %arg10[%c0_95, %c0_96], %77 {strides = array<i32>} : memref<256x36xf32, #tpu.memory_space<vmem>>, vector<256x4xf32>,
    %c0_97 = arith.constant 0 : index
    %c1_98 = arith.constant 1 : index
    %c0_99 = arith.constant 0 : index
    %79 = vector.load %arg9[%c0_97, %c1_98, %c0_99] : memref<18x18x4xf32, #tpu.memory_space<vmem>>, vector<16x16x4xf32>
    %80 = vector.shape_cast %79 : vector<16x16x4xf32> to vector<256x4xf32>
    %c0_100 = arith.constant 0 : index
    %c4_101 = arith.constant 4 : index
    %81 = vector.load %arg10[%c0_100, %c4_101] : memref<256x36xf32, #tpu.memory_space<vmem>>, vector<256x4xf32>
    tpu.vector_store %arg10[%c0_100, %c4_101], %80 {strides = array<i32>} : memref<256x36xf32, #tpu.memory_space<vmem>>, vector<256x4xf32>,
    %c0_102 = arith.constant 0 : index
    %c2_103 = arith.constant 2 : index
    %c0_104 = arith.constant 0 : index
    %82 = vector.load %arg9[%c0_102, %c2_103, %c0_104] : memref<18x18x4xf32, #tpu.memory_space<vmem>>, vector<16x16x4xf32>
    %83 = vector.shape_cast %82 : vector<16x16x4xf32> to vector<256x4xf32>
    %c0_105 = arith.constant 0 : index
    %c8_106 = arith.constant 8 : index
    %84 = vector.load %arg10[%c0_105, %c8_106] : memref<256x36xf32, #tpu.memory_space<vmem>>, vector<256x4xf32>
    tpu.vector_store %arg10[%c0_105, %c8_106], %83 {strides = array<i32>} : memref<256x36xf32, #tpu.memory_space<vmem>>, vector<256x4xf32>,
    %c1_107 = arith.constant 1 : index
    %c0_108 = arith.constant 0 : index
    %c0_109 = arith.constant 0 : index
    %85 = vector.load %arg9[%c1_107, %c0_108, %c0_109] : memref<18x18x4xf32, #tpu.memory_space<vmem>>, vector<16x16x4xf32>
    %86 = vector.shape_cast %85 : vector<16x16x4xf32> to vector<256x4xf32>
    %c0_110 = arith.constant 0 : index
    %c12_111 = arith.constant 12 : index
    %87 = vector.load %arg10[%c0_110, %c12_111] : memref<256x36xf32, #tpu.memory_space<vmem>>, vector<256x4xf32>
    tpu.vector_store %arg10[%c0_110, %c12_111], %86 {strides = array<i32>} : memref<256x36xf32, #tpu.memory_space<vmem>>, vector<256x4xf32>,
    %c1_112 = arith.constant 1 : index
    %c1_113 = arith.constant 1 : index
    %c0_114 = arith.constant 0 : index
    %88 = vector.load %arg9[%c1_112, %c1_113, %c0_114] : memref<18x18x4xf32, #tpu.memory_space<vmem>>, vector<16x16x4xf32>
    %89 = vector.shape_cast %88 : vector<16x16x4xf32> to vector<256x4xf32>
    %c0_115 = arith.constant 0 : index
    %c16_116 = arith.constant 16 : index
    %90 = vector.load %arg10[%c0_115, %c16_116] : memref<256x36xf32, #tpu.memory_space<vmem>>, vector<256x4xf32>
    tpu.vector_store %arg10[%c0_115, %c16_116], %89 {strides = array<i32>} : memref<256x36xf32, #tpu.memory_space<vmem>>, vector<256x4xf32>,
    %c1_117 = arith.constant 1 : index
    %c2_118 = arith.constant 2 : index
    %c0_119 = arith.constant 0 : index
    %91 = vector.load %arg9[%c1_117, %c2_118, %c0_119] : memref<18x18x4xf32, #tpu.memory_space<vmem>>, vector<16x16x4xf32>
    %92 = vector.shape_cast %91 : vector<16x16x4xf32> to vector<256x4xf32>
    %c0_120 = arith.constant 0 : index
    %c20_121 = arith.constant 20 : index
    %93 = vector.load %arg10[%c0_120, %c20_121] : memref<256x36xf32, #tpu.memory_space<vmem>>, vector<256x4xf32>
    tpu.vector_store %arg10[%c0_120, %c20_121], %92 {strides = array<i32>} : memref<256x36xf32, #tpu.memory_space<vmem>>, vector<256x4xf32>,
    %c2_122 = arith.constant 2 : index
    %c0_123 = arith.constant 0 : index
    %c0_124 = arith.constant 0 : index
    %94 = vector.load %arg9[%c2_122, %c0_123, %c0_124] : memref<18x18x4xf32, #tpu.memory_space<vmem>>, vector<16x16x4xf32>
    %95 = vector.shape_cast %94 : vector<16x16x4xf32> to vector<256x4xf32>
    %c0_125 = arith.constant 0 : index
    %c24_126 = arith.constant 24 : index
    %96 = vector.load %arg10[%c0_125, %c24_126] : memref<256x36xf32, #tpu.memory_space<vmem>>, vector<256x4xf32>
    tpu.vector_store %arg10[%c0_125, %c24_126], %95 {strides = array<i32>} : memref<256x36xf32, #tpu.memory_space<vmem>>, vector<256x4xf32>,
    %c2_127 = arith.constant 2 : index
    %c1_128 = arith.constant 1 : index
    %c0_129 = arith.constant 0 : index
    %97 = vector.load %arg9[%c2_127, %c1_128, %c0_129] : memref<18x18x4xf32, #tpu.memory_space<vmem>>, vector<16x16x4xf32>
    %98 = vector.shape_cast %97 : vector<16x16x4xf32> to vector<256x4xf32>
    %c0_130 = arith.constant 0 : index
    %c28_131 = arith.constant 28 : index
    %99 = vector.load %arg10[%c0_130, %c28_131] : memref<256x36xf32, #tpu.memory_space<vmem>>, vector<256x4xf32>
    tpu.vector_store %arg10[%c0_130, %c28_131], %98 {strides = array<i32>} : memref<256x36xf32, #tpu.memory_space<vmem>>, vector<256x4xf32>,
    %c2_132 = arith.constant 2 : index
    %c2_133 = arith.constant 2 : index
    %c0_134 = arith.constant 0 : index
    %100 = vector.load %arg9[%c2_132, %c2_133, %c0_134] : memref<18x18x4xf32, #tpu.memory_space<vmem>>, vector<16x16x4xf32>
    %101 = vector.shape_cast %100 : vector<16x16x4xf32> to vector<256x4xf32>
    %c0_135 = arith.constant 0 : index
    %c32_136 = arith.constant 32 : index
    %102 = vector.load %arg10[%c0_135, %c32_136] : memref<256x36xf32, #tpu.memory_space<vmem>>, vector<256x4xf32>
    tpu.vector_store %arg10[%c0_135, %c32_136], %101 {strides = array<i32>} : memref<256x36xf32, #tpu.memory_space<vmem>>, vector<256x4xf32>,
    %c0_137 = arith.constant 0 : index
    %c0_138 = arith.constant 0 : index
    %103 = vector.load %arg10[%c0_137, %c0_138] : memref<256x36xf32, #tpu.memory_space<vmem>>, vector<256x36xf32>
    %c0_139 = arith.constant 0 : index
    %c0_140 = arith.constant 0 : index
    %104 = vector.load %arg5[%c0_139, %c0_140] : memref<36x4xf32, #tpu.memory_space<vmem>>, vector<36x4xf32>
    %cst_141 = arith.constant dense<0.000000e+00> : vector<256x4xf32>
    %105 = tpu.matmul %103, %104, %cst_141 {dimension_numbers = #tpu.dot_dimension_numbers<[1], [0], [0], [1], [0, 0, 1, 1], [], []>} : vector<256x36xf32>, vector<36x4xf32>, vector<256x4xf32> -> vector<256x4xf32>
    %cst_142 = arith.constant dense<0.000000e+00> : vector<4xf32>
    %106 = vector.multi_reduction <add>, %105, %cst_142 [0] : vector<256x4xf32> to vector<4xf32>
    %107 = vector.shape_cast %106 : vector<4xf32> to vector<1x4xf32>
    %cst_143 = arith.constant 3.906250e-03 : f32
    %108 = vector.broadcast %cst_143 : f32 to vector<1x4xf32>
    %109 = arith.mulf %107, %108 : vector<1x4xf32>
    %110 = arith.mulf %105, %105 : vector<256x4xf32>
    %cst_144 = arith.constant dense<0.000000e+00> : vector<4xf32>
    %111 = vector.multi_reduction <add>, %110, %cst_144 [0] : vector<256x4xf32> to vector<4xf32>
    %112 = vector.shape_cast %111 : vector<4xf32> to vector<1x4xf32>
    %cst_145 = arith.constant 3.906250e-03 : f32
    %113 = vector.broadcast %cst_145 : f32 to vector<1x4xf32>
    %114 = arith.mulf %112, %113 : vector<1x4xf32>
    %115 = arith.mulf %109, %109 : vector<1x4xf32>
    %116 = arith.subf %114, %115 : vector<1x4xf32>
    %cst_146 = arith.constant 9.99999974E-6 : f32
    %117 = vector.broadcast %cst_146 : f32 to vector<1x4xf32>
    %118 = arith.addf %116, %117 : vector<1x4xf32>
    %119 = math.rsqrt %118 : vector<1x4xf32>
    %c0_147 = arith.constant 0 : index
    %c0_148 = arith.constant 0 : index
    %120 = vector.load %arg6[%c0_147, %c0_148] : memref<1x4xf32, #tpu.memory_space<vmem>>, vector<1x4xf32>
    %121 = arith.mulf %119, %120 : vector<1x4xf32>
    %c0_149 = arith.constant 0 : index
    %c0_150 = arith.constant 0 : index
    %122 = vector.load %arg7[%c0_149, %c0_150] : memref<1x4xf32, #tpu.memory_space<vmem>>, vector<1x4xf32>
    %123 = arith.mulf %109, %121 : vector<1x4xf32>
    %124 = arith.subf %122, %123 : vector<1x4xf32>
    %125 = vector.broadcast %121 : vector<1x4xf32> to vector<256x4xf32>
    %126 = arith.mulf %105, %125 : vector<256x4xf32>
    %127 = vector.broadcast %124 : vector<1x4xf32> to vector<256x4xf32>
    %128 = arith.addf %126, %127 : vector<256x4xf32>
    %129 = vector.shape_cast %1 : vector<16x16x4xf32> to vector<256x4xf32>
    %130 = arith.addf %128, %129 : vector<256x4xf32>
    %131 = vector.shape_cast %130 : vector<256x4xf32> to vector<16x16x4xf32>
    %c0_151 = arith.constant 0 : index
    %c0_152 = arith.constant 0 : index
    %c0_153 = arith.constant 0 : index
    %c0_154 = arith.constant 0 : index
    %132 = vector.load %arg8[%c0_151, %c0_152, %c0_153, %c0_154] : memref<1x16x16x4xf32, #tpu.memory_space<vmem>>, vector<1x16x16x4xf32>
    %133 = vector.shape_cast %132 : vector<1x16x16x4xf32> to vector<16x16x4xf32>
    %134 = vector.shape_cast %131 : vector<16x16x4xf32> to vector<1x16x16x4xf32>
    tpu.vector_store %arg8[%c0_151, %c0_152, %c0_153, %c0_154], %134 {strides = array<i32>} : memref<1x16x16x4xf32, #tpu.memory_space<vmem>>, vector<1x16x16x4xf32>,
    return
  }
  func.func @transform_0(%arg0: i32) -> (i32, i32, i32, i32) {
    %c0_i32 = arith.constant 0 : i32
    %c0_i32_0 = arith.constant 0 : i32
    %c0_i32_1 = arith.constant 0 : i32
    %c0_i32_2 = arith.constant 0 : i32
    return %arg0, %c0_i32, %c0_i32_0, %c0_i32_1 : i32, i32, i32, i32
  }
  func.func @transform_1(%arg0: i32) -> (i32, i32) {
    %c0_i32 = arith.constant 0 : i32
    %c0_i32_0 = arith.constant 0 : i32
    %c0_i32_1 = arith.constant 0 : i32
    return %c0_i32, %c0_i32_0 : i32, i32
  }
  func.func @transform_2(%arg0: i32) -> (i32, i32) {
    %c0_i32 = arith.constant 0 : i32
    %c0_i32_0 = arith.constant 0 : i32
    %c0_i32_1 = arith.constant 0 : i32
    return %c0_i32, %c0_i32_0 : i32, i32
  }
  func.func @transform_3(%arg0: i32) -> (i32, i32) {
    %c0_i32 = arith.constant 0 : i32
    %c0_i32_0 = arith.constant 0 : i32
    %c0_i32_1 = arith.constant 0 : i32
    return %c0_i32, %c0_i32_0 : i32, i32
  }
  func.func @transform_4(%arg0: i32) -> (i32, i32) {
    %c0_i32 = arith.constant 0 : i32
    %c0_i32_0 = arith.constant 0 : i32
    %c0_i32_1 = arith.constant 0 : i32
    return %c0_i32, %c0_i32_0 : i32, i32
  }
  func.func @transform_5(%arg0: i32) -> (i32, i32) {
    %c0_i32 = arith.constant 0 : i32
    %c0_i32_0 = arith.constant 0 : i32
    %c0_i32_1 = arith.constant 0 : i32
    return %c0_i32, %c0_i32_0 : i32, i32
  }
  func.func @transform_6(%arg0: i32) -> (i32, i32) {
    %c0_i32 = arith.constant 0 : i32
    %c0_i32_0 = arith.constant 0 : i32
    %c0_i32_1 = arith.constant 0 : i32
    return %c0_i32, %c0_i32_0 : i32, i32
  }
  func.func @transform_7(%arg0: i32) -> (i32, i32, i32, i32) {
    %c0_i32 = arith.constant 0 : i32
    %c0_i32_0 = arith.constant 0 : i32
    %c0_i32_1 = arith.constant 0 : i32
    %c0_i32_2 = arith.constant 0 : i32
    return %arg0, %c0_i32, %c0_i32_0, %c0_i32_1 : i32, i32, i32, i32
  }
}

</mosaic_0001>

<llo_original>
// kernel: tpu_custom_call.1
$region0: #{tpu_custom_call.1}
  #allocation0 [shape = 'u32[]', space=smem, size = 0x4, offset = 0x4, fixed_abs, tag = 'smem constant byte address 0x4 - core index']
  #allocation1 [shape = 'u32[144,128]{1,0:T(1,128)}', space=vmem, size = 0x12000, scoped, tag = 'internal scratch']
  #allocation2 [shape = 'f32[18,18,4]{2,1,0:T(8,128)}', space=vmem, size = 0x36000, scoped, tag = 'scratch operand']
  #allocation3 [shape = 'f32[256,36]{1,0:T(8,128)}', space=vmem, size = 0x20000, scoped, tag = 'scratch operand']
  %s0 = inlined_call_operand.vmem [shape: f32[2,16,16,4], index: 0, kind: input, shape index: {}]
  %s1 = inlined_call_operand.vmem [shape: f32[36,4], index: 1, kind: input, shape index: {}]
  %s2 = inlined_call_operand.vmem [shape: f32[1,4], index: 2, kind: input, shape index: {}]
  %s3 = inlined_call_operand.vmem [shape: f32[1,4], index: 3, kind: input, shape index: {}]
  %s4 = inlined_call_operand.vmem [shape: f32[36,4], index: 4, kind: input, shape index: {}]
  %s5 = inlined_call_operand.vmem [shape: f32[1,4], index: 5, kind: input, shape index: {}]
  %s6 = inlined_call_operand.vmem [shape: f32[1,4], index: 6, kind: input, shape index: {}]
  %s7 = inlined_call_operand.vmem [shape: f32[2,16,16,4], index: 7, kind: output, shape index: {}]
  %s8 = sld [smem:[#allocation0]]
  $region61: #{tpu_custom_call.1} parent=0
    _
  %s10 = ssub.s32 1, %s8
  %s11 = scalar_select 0, %s10, %s8
  loop: start=0, step=1, limit=4
  $region2: #{tpu_custom_call.1} parent=0 // loop_pre_header
    _
  $region3: #{tpu_custom_call.1} parent=0 // loop_header
    %s13 = sphi 0, %s17
    %p14 = scmp.ge.s32.totalorder %s13, 4
    %s23 = sphi 0, %s25
    %s26 = sphi 0, %s23
    %s27 = sphi 0, %s26
    %s43 = sphi 0, %s27
    %s47 = sphi 0, %s47
    %s49 = sphi 0, %s47
    %s50 = sphi 0, %s49
    %s64 = sphi 0, %s50
    %s68 = sphi 0, %s68
    %s70 = sphi 0, %s68
    %s71 = sphi 0, %s70
    %s85 = sphi 0, %s71
    %s89 = sphi 0, %s89
    %s91 = sphi 0, %s89
    %s92 = sphi 0, %s91
    %s106 = sphi 0, %s92
    %s110 = sphi 0, %s110
    %s112 = sphi 0, %s110
    %s113 = sphi 0, %s112
    %s127 = sphi 0, %s113
    %s131 = sphi 0, %s131
    %s133 = sphi 0, %s131
    %s134 = sphi 0, %s133
    %s148 = sphi 0, %s134
    %s152 = sphi 0, %s152
    %s154 = sphi 0, %s152
    %s155 = sphi 0, %s154
    %s169 = sphi 0, %s155
    %s175 = sphi 0, %s177
    %s178 = sphi 0, %s175
    %s179 = sphi 0, %s178
    %s195 = sphi 0, %s179
  $region4: #{tpu_custom_call.1} parent=0 // loop_header_branch
    %16 = sbr.rel (%p14) target = $region8
  $region5: #{tpu_custom_call.1} parent=0 // loop_body
    %s18 = ssub.s32 %s13, 1
    %s19 = ssub.s32 %s13, 2
    %s20 = sadd.s32 %s13, 1
    %s21 = ssub.s32 %s13, %s20
    %p22 = scmp.eq.s32.totalorder %s21, 0
    %s24 = sadd.s32 %s23, 1
    %s25 = scalar_select %p22, %s23, %s24
    %p28 = pneg %p22
    %p29 = scmp.eq.s32.totalorder %s13, 1
    %p30 = por %p28, %p29
    %p31 = scmp.ne.s32.totalorder %s23, %s26
    %p32 = scmp.eq.s32.totalorder %s13, 0
    %p33 = por %p31, %p32
    %p34 = scmp.ne.s32.totalorder %s23, %s26
    %p35 = scmp.eq.s32.totalorder %s18, 1
    %p36 = por %p34, %p35
    %p37 = scmp.ne.s32.totalorder %s26, %s27
    %p38 = scmp.eq.s32.totalorder %s18, 0
    %p39 = por %p37, %p38
    %p40 = scmp.ne.s32.totalorder %s26, %s27
    %p41 = scmp.eq.s32.totalorder %s19, 1
    %p42 = por %p40, %p41
    %p44 = scmp.ne.s32.totalorder %s27, %s43
    %p45 = scmp.eq.s32.totalorder %s19, 0
    %p46 = por %p44, %p45
    %s48 = sadd.s32 %s47, 1
    %p51 = scmp.eq.s32.totalorder %s13, 1
    %p52 = scmp.ne.s32.totalorder %s47, %s49
    %p53 = scmp.eq.s32.totalorder %s13, 0
    %p54 = por %p52, %p53
    %p55 = scmp.ne.s32.totalorder %s47, %s49
    %p56 = scmp.eq.s32.totalorder %s18, 1
    %p57 = por %p55, %p56
    %p58 = scmp.ne.s32.totalorder %s49, %s50
    %p59 = scmp.eq.s32.totalorder %s18, 0
    %p60 = por %p58, %p59
    %p61 = scmp.ne.s32.totalorder %s49, %s50
    %p62 = scmp.eq.s32.totalorder %s19, 1
    %p63 = por %p61, %p62
    %p65 = scmp.ne.s32.totalorder %s50, %s64
    %p66 = scmp.eq.s32.totalorder %s19, 0
    %p67 = por %p65, %p66
    %s69 = sadd.s32 %s68, 1
    %p72 = scmp.eq.s32.totalorder %s13, 1
    %p73 = scmp.ne.s32.totalorder %s68, %s70
    %p74 = scmp.eq.s32.totalorder %s13, 0
    %p75 = por %p73, %p74
    %p76 = scmp.ne.s32.totalorder %s68, %s70
    %p77 = scmp.eq.s32.totalorder %s18, 1
    %p78 = por %p76, %p77
    %p79 = scmp.ne.s32.totalorder %s70, %s71
    %p80 = scmp.eq.s32.totalorder %s18, 0
    %p81 = por %p79, %p80
    %p82 = scmp.ne.s32.totalorder %s70, %s71
    %p83 = scmp.eq.s32.totalorder %s19, 1
    %p84 = por %p82, %p83
    %p86 = scmp.ne.s32.totalorder %s71, %s85
    %p87 = scmp.eq.s32.totalorder %s19, 0
    %p88 = por %p86, %p87
    %s90 = sadd.s32 %s89, 1
    %p93 = scmp.eq.s32.totalorder %s13, 1
    %p94 = scmp.ne.s32.totalorder %s89, %s91
    %p95 = scmp.eq.s32.totalorder %s13, 0
    %p96 = por %p94, %p95
    %p97 = scmp.ne.s32.totalorder %s89, %s91
    %p98 = scmp.eq.s32.totalorder %s18, 1
    %p99 = por %p97, %p98
    %p100 = scmp.ne.s32.totalorder %s91, %s92
    %p101 = scmp.eq.s32.totalorder %s18, 0
    %p102 = por %p100, %p101
    %p103 = scmp.ne.s32.totalorder %s91, %s92
    %p104 = scmp.eq.s32.totalorder %s19, 1
    %p105 = por %p103, %p104
    %p107 = scmp.ne.s32.totalorder %s92, %s106
    %p108 = scmp.eq.s32.totalorder %s19, 0
    %p109 = por %p107, %p108
    %s111 = sadd.s32 %s110, 1
    %p114 = scmp.eq.s32.totalorder %s13, 1
    %p115 = scmp.ne.s32.totalorder %s110, %s112
    %p116 = scmp.eq.s32.totalorder %s13, 0
    %p117 = por %p115, %p116
    %p118 = scmp.ne.s32.totalorder %s110, %s112
    %p119 = scmp.eq.s32.totalorder %s18, 1
    %p120 = por %p118, %p119
    %p121 = scmp.ne.s32.totalorder %s112, %s113
    %p122 = scmp.eq.s32.totalorder %s18, 0
    %p123 = por %p121, %p122
    %p124 = scmp.ne.s32.totalorder %s112, %s113
    %p125 = scmp.eq.s32.totalorder %s19, 1
    %p126 = por %p124, %p125
    %p128 = scmp.ne.s32.totalorder %s113, %s127
    %p129 = scmp.eq.s32.totalorder %s19, 0
    %p130 = por %p128, %p129
    %s132 = sadd.s32 %s131, 1
    %p135 = scmp.eq.s32.totalorder %s13, 1
    %p136 = scmp.ne.s32.totalorder %s131, %s133
    %p137 = scmp.eq.s32.totalorder %s13, 0
    %p138 = por %p136, %p137
    %p139 = scmp.ne.s32.totalorder %s131, %s133
    %p140 = scmp.eq.s32.totalorder %s18, 1
    %p141 = por %p139, %p140
    %p142 = scmp.ne.s32.totalorder %s133, %s134
    %p143 = scmp.eq.s32.totalorder %s18, 0
    %p144 = por %p142, %p143
    %p145 = scmp.ne.s32.totalorder %s133, %s134
    %p146 = scmp.eq.s32.totalorder %s19, 1
    %p147 = por %p145, %p146
    %p149 = scmp.ne.s32.totalorder %s134, %s148
    %p150 = scmp.eq.s32.totalorder %s19, 0
    %p151 = por %p149, %p150
    %s153 = sadd.s32 %s152, 1
    %p156 = scmp.eq.s32.totalorder %s13, 1
    %p157 = scmp.ne.s32.totalorder %s152, %s154
    %p158 = scmp.eq.s32.totalorder %s13, 0
    %p159 = por %p157, %p158
    %p160 = scmp.ne.s32.totalorder %s152, %s154
    %p161 = scmp.eq.s32.totalorder %s18, 1
    %p162 = por %p160, %p161
    %p163 = scmp.ne.s32.totalorder %s154, %s155
    %p164 = scmp.eq.s32.totalorder %s18, 0
    %p165 = por %p163, %p164
    %p166 = scmp.ne.s32.totalorder %s154, %s155
    %p167 = scmp.eq.s32.totalorder %s19, 1
    %p168 = por %p166, %p167
    %p170 = scmp.ne.s32.totalorder %s155, %s169
    %p171 = scmp.eq.s32.totalorder %s19, 0
    %p172 = por %p170, %p171
    %s173 = ssub.s32 %s13, %s20
    %p174 = scmp.eq.s32.totalorder %s173, 0
    %s176 = sadd.s32 %s175, 1
    %s177 = scalar_select %p174, %s175, %s176
    %p180 = pneg %p174
    %p181 = scmp.eq.s32.totalorder %s13, 1
    %p182 = por %p180, %p181
    %p183 = scmp.ne.s32.totalorder %s175, %s178
    %p184 = scmp.eq.s32.totalorder %s13, 0
    %p185 = por %p183, %p184
    %p186 = scmp.ne.s32.totalorder %s175, %s178
    %p187 = scmp.eq.s32.totalorder %s18, 1
    %p188 = por %p186, %p187
    %p189 = scmp.ne.s32.totalorder %s178, %s179
    %p190 = scmp.eq.s32.totalorder %s18, 0
    %p191 = por %p189, %p190
    %p192 = scmp.ne.s32.totalorder %s178, %s179
    %p193 = scmp.eq.s32.totalorder %s19, 1
    %p194 = por %p192, %p193
    %p196 = scmp.ne.s32.totalorder %s179, %s195
    %p197 = scmp.eq.s32.totalorder %s19, 0
    %p198 = por %p196, %p197
    %p199 = scmp.le.s32.totalorder 1, %s13
    %p200 = scmp.lt.s32.totalorder %s13, 3
    %p201 = pnand %p199, %p200
    %p202 = pneg %p201
    // Predicated region
    $region9: #{tpu_custom_call.1} parent=5 // pred_check
      _
    $region10: #{tpu_custom_call.1} parent=5 // pred_check_branch
      %204 = sbr.rel (%p201) target = $region12
    $region11: #{tpu_custom_call.1} parent=5 // pred_region
      %s205 = ssub.s32 %s13, 1
      // Predicated region
      $region13: #{tpu_custom_call.1} parent=11 // pred_check
        %p206 = pneg %p60
      $region14: #{tpu_custom_call.1} parent=11 // pred_check_branch
        %208 = sbr.rel (%p206) target = $region16
      $region15: #{tpu_custom_call.1} parent=11 // pred_region
        _
      $region16: #{tpu_custom_call.1} parent=11 // pred_fallthru
        _
      // Predicated region
      $region17: #{tpu_custom_call.1} parent=11 // pred_check
        %p209 = pneg %p81
      $region18: #{tpu_custom_call.1} parent=11 // pred_check_branch
        %211 = sbr.rel (%p209) target = $region20
      $region19: #{tpu_custom_call.1} parent=11 // pred_region
        _
      $region20: #{tpu_custom_call.1} parent=11 // pred_fallthru
        _
      // Predicated region
      $region21: #{tpu_custom_call.1} parent=11 // pred_check
        %p212 = pneg %p102
      $region22: #{tpu_custom_call.1} parent=11 // pred_check_branch
        %214 = sbr.rel (%p212) target = $region24
      $region23: #{tpu_custom_call.1} parent=11 // pred_region
        _
      $region24: #{tpu_custom_call.1} parent=11 // pred_fallthru
        _
      // Predicated region
      $region25: #{tpu_custom_call.1} parent=11 // pred_check
        %p215 = pneg %p123
      $region26: #{tpu_custom_call.1} parent=11 // pred_check_branch
        %217 = sbr.rel (%p215) target = $region28
      $region27: #{tpu_custom_call.1} parent=11 // pred_region
        _
      $region28: #{tpu_custom_call.1} parent=11 // pred_fallthru
        _
      // Predicated region
      $region29: #{tpu_custom_call.1} parent=11 // pred_check
        %p218 = pneg %p144
      $region30: #{tpu_custom_call.1} parent=11 // pred_check_branch
        %220 = sbr.rel (%p218) target = $region32
      $region31: #{tpu_custom_call.1} parent=11 // pred_region
        _
      $region32: #{tpu_custom_call.1} parent=11 // pred_fallthru
        _
      // Predicated region
      $region33: #{tpu_custom_call.1} parent=11 // pred_check
        %p221 = pneg %p165
      $region34: #{tpu_custom_call.1} parent=11 // pred_check_branch
        %223 = sbr.rel (%p221) target = $region36
      $region35: #{tpu_custom_call.1} parent=11 // pred_region
        _
      $region36: #{tpu_custom_call.1} parent=11 // pred_fallthru
        _
    $region12: #{tpu_custom_call.1} parent=5 // pred_fallthru
      _
    %p224 = scmp.lt.s32.totalorder %s13, 2
    // Predicated region
    $region37: #{tpu_custom_call.1} parent=5 // pred_check
      %p225 = pneg %p224
    $region38: #{tpu_custom_call.1} parent=5 // pred_check_branch
      %227 = sbr.rel (%p225) target = $region40
    $region39: #{tpu_custom_call.1} parent=5 // pred_region
      // Predicated region
      $region41: #{tpu_custom_call.1} parent=39 // pred_check
        %p228 = pneg %p33
      $region42: #{tpu_custom_call.1} parent=39 // pred_check_branch
        %230 = sbr.rel (%p228) target = $region44
      $region43: #{tpu_custom_call.1} parent=39 // pred_region
        %p231 = scmp.lt.s32.totalorder %s13, 1
        %s232 = scalar_select %p231, %s13, 1
        %s233 = smul.addr %s232, 32
        %s234 = smul.addr %s233, 8
        %s235 = scalar_lea.vmem %s0, %s234
      $region44: #{tpu_custom_call.1} parent=39 // pred_fallthru
        _
    $region40: #{tpu_custom_call.1} parent=5 // pred_fallthru
      _
    %p236 = scmp.le.s32.totalorder 1, %s13
    %p237 = scmp.lt.s32.totalorder %s13, 3
    %p238 = pnand %p236, %p237
    %p239 = pneg %p238
    // Predicated region
    $region45: #{tpu_custom_call.1} parent=5 // pred_check
      _
    $region46: #{tpu_custom_call.1} parent=5 // pred_check_branch
      %241 = sbr.rel (%p238) target = $region48
    $region47: #{tpu_custom_call.1} parent=5 // pred_region
      %s242 = ssub.s32 %s13, 1
      %p243 = scmp.lt.s32.totalorder %s18, 1
      %s244 = scalar_select %p243, %s18, 1
      %s245 = smul.addr %s244, 32
      %s246 = smul.addr %s245, 8
      %s247 = scalar_lea.vmem %s0, %s246
      %p248 = pneg %p39
      %p249 = pneg %p36
      %p250 = pneg %p60
      %p251 = pneg %p57
      %p252 = pneg %p81
      %p253 = pneg %p78
      %p254 = pneg %p102
      %p255 = pneg %p99
      %p256 = pneg %p123
      %p257 = pneg %p120
      %p258 = pneg %p144
      %p259 = pneg %p141
      %p260 = pneg %p165
      %p261 = pneg %p162
      %p262 = pneg %p191
      %p263 = pneg %p188
      %p264 = scmp.lt.s32.totalorder %s18, 1
      %s265 = scalar_select %p264, %s18, 1
      %s266 = smul.addr %s265, 32
      %s267 = smul.addr %s266, 8
      %s268 = scalar_lea.vmem %s7, %s267
      %p269 = scmp.lt.s32.totalorder %s18, 1
      %s270 = scalar_select %p269, %s18, 1
      %s271 = smul.addr %s270, 32
      %s272 = smul.addr %s271, 8
      %s273 = scalar_lea.vmem %s0, %s272
      %p274 = scmp.lt.s32.totalorder %s18, 1
      %s275 = scalar_select %p274, %s18, 1
      %s276 = smul.addr %s275, 32
      %s277 = smul.addr %s276, 8
      %s278 = scalar_lea.vmem %s7, %s277
      %v279 = vld [vmem:[%s273] sm:$0xff]
      %v280 = vld [vmem:[%s273 + $0x8] sm:$0xff]
      %v281 = vld [vmem:[%s273 + $0x10] sm:$0xff]
      %v282 = vld [vmem:[%s273 + $0x18] sm:$0xff]
      %v283 = vld [vmem:[%s273 + $0x20] sm:$0xff]
      %v284 = vld [vmem:[%s273 + $0x28] sm:$0xff]
      %v285 = vld [vmem:[%s273 + $0x30] sm:$0xff]
      %v286 = vld [vmem:[%s273 + $0x38] sm:$0xff]
      %v287 = vld [vmem:[%s273 + $0x40] sm:$0xff]
      %v288 = vld [vmem:[%s273 + $0x48] sm:$0xff]
      %v289 = vld [vmem:[%s273 + $0x50] sm:$0xff]
      %v290 = vld [vmem:[%s273 + $0x58] sm:$0xff]
      %v291 = vld [vmem:[%s273 + $0x60] sm:$0xff]
      %v292 = vld [vmem:[%s273 + $0x68] sm:$0xff]
      %v293 = vld [vmem:[%s273 + $0x70] sm:$0xff]
      %v294 = vld [vmem:[%s273 + $0x78] sm:$0xff]
      %v295 = vld [vmem:[%s273 + $0x80] sm:$0xff]
      %v296 = vld [vmem:[%s273 + $0x88] sm:$0xff]
      %v297 = vld [vmem:[%s273 + $0x90] sm:$0xff]
      %v298 = vld [vmem:[%s273 + $0x98] sm:$0xff]
      %v299 = vld [vmem:[%s273 + $0xa0] sm:$0xff]
      %v300 = vld [vmem:[%s273 + $0xa8] sm:$0xff]
      %v301 = vld [vmem:[%s273 + $0xb0] sm:$0xff]
      %v302 = vld [vmem:[%s273 + $0xb8] sm:$0xff]
      %v303 = vld [vmem:[%s273 + $0xc0] sm:$0xff]
      %v304 = vld [vmem:[%s273 + $0xc8] sm:$0xff]
      %v305 = vld [vmem:[%s273 + $0xd0] sm:$0xff]
      %v306 = vld [vmem:[%s273 + $0xd8] sm:$0xff]
      %v307 = vld [vmem:[%s273 + $0xe0] sm:$0xff]
      %v308 = vld [vmem:[%s273 + $0xe8] sm:$0xff]
      %v309 = vld [vmem:[%s273 + $0xf0] sm:$0xff]
      %v310 = vld [vmem:[%s273 + $0xf8] sm:$0xff]
      %s311 = scalar_lea.vmem [#allocation2], 24
      %vm312 = vcmask 31744
      %313 = vst.msk [vmem:[%s311 + $0x1] sm:$0xff] %vm312, %v279
      %314 = vst.msk [vmem:[%s311 + $0x9] sm:$0xff] %vm312, %v280
      %315 = vst.msk [vmem:[%s311 + $0x19] sm:$0xff] %vm312, %v281
      %316 = vst.msk [vmem:[%s311 + $0x21] sm:$0xff] %vm312, %v282
      %317 = vst.msk [vmem:[%s311 + $0x31] sm:$0xff] %vm312, %v283
      %318 = vst.msk [vmem:[%s311 + $0x39] sm:$0xff] %vm312, %v284
      %319 = vst.msk [vmem:[%s311 + $0x49] sm:$0xff] %vm312, %v285
      %320 = vst.msk [vmem:[%s311 + $0x51] sm:$0xff] %vm312, %v286
      %321 = vst.msk [vmem:[%s311 + $0x61] sm:$0xff] %vm312, %v287
      %322 = vst.msk [vmem:[%s311 + $0x69] sm:$0xff] %vm312, %v288
      %323 = vst.msk [vmem:[%s311 + $0x79] sm:$0xff] %vm312, %v289
      %324 = vst.msk [vmem:[%s311 + $0x81] sm:$0xff] %vm312, %v290
      %325 = vst.msk [vmem:[%s311 + $0x91] sm:$0xff] %vm312, %v291
      %326 = vst.msk [vmem:[%s311 + $0x99] sm:$0xff] %vm312, %v292
      %327 = vst.msk [vmem:[%s311 + $0xa9] sm:$0xff] %vm312, %v293
      %328 = vst.msk [vmem:[%s311 + $0xb1] sm:$0xff] %vm312, %v294
      %329 = vst.msk [vmem:[%s311 + $0xc1] sm:$0xff] %vm312, %v295
      %330 = vst.msk [vmem:[%s311 + $0xc9] sm:$0xff] %vm312, %v296
      %331 = vst.msk [vmem:[%s311 + $0xd9] sm:$0xff] %vm312, %v297
      %332 = vst.msk [vmem:[%s311 + $0xe1] sm:$0xff] %vm312, %v298
      %333 = vst.msk [vmem:[%s311 + $0xf1] sm:$0xff] %vm312, %v299
      %334 = vst.msk [vmem:[%s311 + $0xf9] sm:$0xff] %vm312, %v300
      %335 = vst.msk [vmem:[%s311 + $0x109] sm:$0xff] %vm312, %v301
      %336 = vst.msk [vmem:[%s311 + $0x111] sm:$0xff] %vm312, %v302
      %337 = vst.msk [vmem:[%s311 + $0x121] sm:$0xff] %vm312, %v303
      %338 = vst.msk [vmem:[%s311 + $0x129] sm:$0xff] %vm312, %v304
      %339 = vst.msk [vmem:[%s311 + $0x139] sm:$0xff] %vm312, %v305
      %340 = vst.msk [vmem:[%s311 + $0x141] sm:$0xff] %vm312, %v306
      %341 = vst.msk [vmem:[%s311 + $0x151] sm:$0xff] %vm312, %v307
      %342 = vst.msk [vmem:[%s311 + $0x159] sm:$0xff] %vm312, %v308
      %343 = vst.msk [vmem:[%s311 + $0x169] sm:$0xff] %vm312, %v309
      %344 = vst.msk [vmem:[%s311 + $0x171] sm:$0xff] %vm312, %v310
      %345 = vst.msk [vmem:[#allocation2 + $0x1] sm:$0xff] %vm312, %v281
      %346 = vst.msk [vmem:[#allocation2 + $0x9] sm:$0xff] %vm312, %v282
      %s347 = scalar_lea.vmem [#allocation2], 408
      %348 = vst.msk [vmem:[%s347 + $0x1] sm:$0xff] %vm312, %v307
      %349 = vst.msk [vmem:[%s347 + $0x9] sm:$0xff] %vm312, %v308
      %v350 = vld [vmem:[#allocation2 + $0x2] sm:$0x1]
      %v351 = vld [vmem:[#allocation2 + $0x1a] sm:$0x1]
      %v352 = vld [vmem:[#allocation2 + $0x32] sm:$0x1]
      %v353 = vld [vmem:[#allocation2 + $0x4a] sm:$0x1]
      %v354 = vld [vmem:[#allocation2 + $0x62] sm:$0x1]
      %v355 = vld [vmem:[#allocation2 + $0x7a] sm:$0x1]
      %v356 = vld [vmem:[#allocation2 + $0x92] sm:$0x1]
      %v357 = vld [vmem:[#allocation2 + $0xaa] sm:$0x1]
      %v358 = vld [vmem:[#allocation2 + $0xc2] sm:$0x1]
      %v359 = vld [vmem:[#allocation2 + $0xda] sm:$0x1]
      %v360 = vld [vmem:[#allocation2 + $0xf2] sm:$0x1]
      %v361 = vld [vmem:[#allocation2 + $0x10a] sm:$0x1]
      %v362 = vld [vmem:[#allocation2 + $0x122] sm:$0x1]
      %v363 = vld [vmem:[#allocation2 + $0x13a] sm:$0x1]
      %v364 = vld [vmem:[#allocation2 + $0x152] sm:$0x1]
      %v365 = vld [vmem:[#allocation2 + $0x16a] sm:$0x1]
      %v366 = vld [vmem:[#allocation2 + $0x182] sm:$0x1]
      %v367 = vld [vmem:[#allocation2 + $0x19a] sm:$0x1]
      %vm368 = vcmask 24576
      %369 = vst.msk [vmem:[#allocation2] sm:$0x1] %vm368, %v350
      %370 = vst.msk [vmem:[#allocation2 + $0x18] sm:$0x1] %vm368, %v351
      %371 = vst.msk [vmem:[#allocation2 + $0x30] sm:$0x1] %vm368, %v352
      %372 = vst.msk [vmem:[#allocation2 + $0x48] sm:$0x1] %vm368, %v353
      %373 = vst.msk [vmem:[#allocation2 + $0x60] sm:$0x1] %vm368, %v354
      %374 = vst.msk [vmem:[#allocation2 + $0x78] sm:$0x1] %vm368, %v355
      %375 = vst.msk [vmem:[#allocation2 + $0x90] sm:$0x1] %vm368, %v356
      %376 = vst.msk [vmem:[#allocation2 + $0xa8] sm:$0x1] %vm368, %v357
      %377 = vst.msk [vmem:[#allocation2 + $0xc0] sm:$0x1] %vm368, %v358
      %378 = vst.msk [vmem:[#allocation2 + $0xd8] sm:$0x1] %vm368, %v359
      %379 = vst.msk [vmem:[#allocation2 + $0xf0] sm:$0x1] %vm368, %v360
      %380 = vst.msk [vmem:[#allocation2 + $0x108] sm:$0x1] %vm368, %v361
      %381 = vst.msk [vmem:[#allocation2 + $0x120] sm:$0x1] %vm368, %v362
      %382 = vst.msk [vmem:[#allocation2 + $0x138] sm:$0x1] %vm368, %v363
      %383 = vst.msk [vmem:[#allocation2 + $0x150] sm:$0x1] %vm368, %v364
      %384 = vst.msk [vmem:[#allocation2 + $0x168] sm:$0x1] %vm368, %v365
      %385 = vst.msk [vmem:[#allocation2 + $0x180] sm:$0x1] %vm368, %v366
      %386 = vst.msk [vmem:[#allocation2 + $0x198] sm:$0x1] %vm368, %v367
      %v387 = vld [vmem:[#allocation2 + $0xf] sm:$0x1]
      %v388 = vld [vmem:[#allocation2 + $0x27] sm:$0x1]
      %v389 = vld [vmem:[#allocation2 + $0x3f] sm:$0x1]
      %v390 = vld [vmem:[#allocation2 + $0x57] sm:$0x1]
      %v391 = vld [vmem:[#allocation2 + $0x6f] sm:$0x1]
      %v392 = vld [vmem:[#allocation2 + $0x87] sm:$0x1]
      %v393 = vld [vmem:[#allocation2 + $0x9f] sm:$0x1]
      %v394 = vld [vmem:[#allocation2 + $0xb7] sm:$0x1]
      %v395 = vld [vmem:[#allocation2 + $0xcf] sm:$0x1]
      %v396 = vld [vmem:[#allocation2 + $0xe7] sm:$0x1]
      %v397 = vld [vmem:[#allocation2 + $0xff] sm:$0x1]
      %v398 = vld [vmem:[#allocation2 + $0x117] sm:$0x1]
      %v399 = vld [vmem:[#allocation2 + $0x12f] sm:$0x1]
      %v400 = vld [vmem:[#allocation2 + $0x147] sm:$0x1]
      %v401 = vld [vmem:[#allocation2 + $0x15f] sm:$0x1]
      %v402 = vld [vmem:[#allocation2 + $0x177] sm:$0x1]
      %v403 = vld [vmem:[#allocation2 + $0x18f] sm:$0x1]
      %v404 = vld [vmem:[#allocation2 + $0x1a7] sm:$0x1]
      %405 = vst.msk [vmem:[#allocation2 + $0x11] sm:$0x1] %vm368, %v387
      %406 = vst.msk [vmem:[#allocation2 + $0x29] sm:$0x1] %vm368, %v388
      %407 = vst.msk [vmem:[#allocation2 + $0x41] sm:$0x1] %vm368, %v389
      %408 = vst.msk [vmem:[#allocation2 + $0x59] sm:$0x1] %vm368, %v390
      %409 = vst.msk [vmem:[#allocation2 + $0x71] sm:$0x1] %vm368, %v391
      %410 = vst.msk [vmem:[#allocation2 + $0x89] sm:$0x1] %vm368, %v392
      %411 = vst.msk [vmem:[#allocation2 + $0xa1] sm:$0x1] %vm368, %v393
      %412 = vst.msk [vmem:[#allocation2 + $0xb9] sm:$0x1] %vm368, %v394
      %413 = vst.msk [vmem:[#allocation2 + $0xd1] sm:$0x1] %vm368, %v395
      %414 = vst.msk [vmem:[#allocation2 + $0xe9] sm:$0x1] %vm368, %v396
      %415 = vst.msk [vmem:[#allocation2 + $0x101] sm:$0x1] %vm368, %v397
      %416 = vst.msk [vmem:[#allocation2 + $0x119] sm:$0x1] %vm368, %v398
      %417 = vst.msk [vmem:[#allocation2 + $0x131] sm:$0x1] %vm368, %v399
      %418 = vst.msk [vmem:[#allocation2 + $0x149] sm:$0x1] %vm368, %v400
      %419 = vst.msk [vmem:[#allocation2 + $0x161] sm:$0x1] %vm368, %v401
      %420 = vst.msk [vmem:[#allocation2 + $0x179] sm:$0x1] %vm368, %v402
      %421 = vst.msk [vmem:[#allocation2 + $0x191] sm:$0x1] %vm368, %v403
      %422 = vst.msk [vmem:[#allocation2 + $0x1a9] sm:$0x1] %vm368, %v404
      %v423 = vld [vmem:[#allocation2] sm:$0xff]
      %v424 = vld [vmem:[#allocation2 + $0x8] sm:$0xff]
      %v425 = vld [vmem:[#allocation2 + $0x18] sm:$0xff]
      %v426 = vld [vmem:[#allocation2 + $0x20] sm:$0xff]
      %v427 = vld [vmem:[#allocation2 + $0x30] sm:$0xff]
      %v428 = vld [vmem:[#allocation2 + $0x38] sm:$0xff]
      %v429 = vld [vmem:[#allocation2 + $0x48] sm:$0xff]
      %v430 = vld [vmem:[#allocation2 + $0x50] sm:$0xff]
      %v431 = vld [vmem:[#allocation2 + $0x60] sm:$0xff]
      %v432 = vld [vmem:[#allocation2 + $0x68] sm:$0xff]
      %v433 = vld [vmem:[#allocation2 + $0x78] sm:$0xff]
      %v434 = vld [vmem:[#allocation2 + $0x80] sm:$0xff]
      %v435 = vld [vmem:[#allocation2 + $0x90] sm:$0xff]
      %v436 = vld [vmem:[#allocation2 + $0x98] sm:$0xff]
      %v437 = vld [vmem:[#allocation2 + $0xa8] sm:$0xff]
      %v438 = vld [vmem:[#allocation2 + $0xb0] sm:$0xff]
      %v439 = vld [vmem:[#allocation2 + $0xc0] sm:$0xff]
      %v440 = vld [vmem:[#allocation2 + $0xc8] sm:$0xff]
      %v441 = vld [vmem:[#allocation2 + $0xd8] sm:$0xff]
      %v442 = vld [vmem:[#allocation2 + $0xe0] sm:$0xff]
      %v443 = vld [vmem:[#allocation2 + $0xf0] sm:$0xff]
      %v444 = vld [vmem:[#allocation2 + $0xf8] sm:$0xff]
      %v445 = vld [vmem:[#allocation2 + $0x108] sm:$0xff]
      %v446 = vld [vmem:[#allocation2 + $0x110] sm:$0xff]
      %v447 = vld [vmem:[#allocation2 + $0x120] sm:$0xff]
      %v448 = vld [vmem:[#allocation2 + $0x128] sm:$0xff]
      %v449 = vld [vmem:[#allocation2 + $0x138] sm:$0xff]
      %v450 = vld [vmem:[#allocation2 + $0x140] sm:$0xff]
      %v451 = vld [vmem:[#allocation2 + $0x150] sm:$0xff]
      %v452 = vld [vmem:[#allocation2 + $0x158] sm:$0xff]
      %v453 = vld [vmem:[#allocation2 + $0x168] sm:$0xff]
      %v454 = vld [vmem:[#allocation2 + $0x170] sm:$0xff]
      %455 = vst.msk [vmem:[#allocation3] sm:$0xff] %vm312, %v423
      %456 = vst.msk [vmem:[#allocation3 + $0x8] sm:$0xff] %vm312, %v424
      %457 = vst.msk [vmem:[#allocation3 + $0x10] sm:$0xff] %vm312, %v425
      %458 = vst.msk [vmem:[#allocation3 + $0x18] sm:$0xff] %vm312, %v426
      %459 = vst.msk [vmem:[#allocation3 + $0x20] sm:$0xff] %vm312, %v427
      %460 = vst.msk [vmem:[#allocation3 + $0x28] sm:$0xff] %vm312, %v428
      %461 = vst.msk [vmem:[#allocation3 + $0x30] sm:$0xff] %vm312, %v429
      %462 = vst.msk [vmem:[#allocation3 + $0x38] sm:$0xff] %vm312, %v430
      %463 = vst.msk [vmem:[#allocation3 + $0x40] sm:$0xff] %vm312, %v431
      %464 = vst.msk [vmem:[#allocation3 + $0x48] sm:$0xff] %vm312, %v432
      %465 = vst.msk [vmem:[#allocation3 + $0x50] sm:$0xff] %vm312, %v433
      %466 = vst.msk [vmem:[#allocation3 + $0x58] sm:$0xff] %vm312, %v434
      %467 = vst.msk [vmem:[#allocation3 + $0x60] sm:$0xff] %vm312, %v435
      %468 = vst.msk [vmem:[#allocation3 + $0x68] sm:$0xff] %vm312, %v436
      %469 = vst.msk [vmem:[#allocation3 + $0x70] sm:$0xff] %vm312, %v437
      %470 = vst.msk [vmem:[#allocation3 + $0x78] sm:$0xff] %vm312, %v438
      %471 = vst.msk [vmem:[#allocation3 + $0x80] sm:$0xff] %vm312, %v439
      %472 = vst.msk [vmem:[#allocation3 + $0x88] sm:$0xff] %vm312, %v440
      %473 = vst.msk [vmem:[#allocation3 + $0x90] sm:$0xff] %vm312, %v441
      %474 = vst.msk [vmem:[#allocation3 + $0x98] sm:$0xff] %vm312, %v442
      %475 = vst.msk [vmem:[#allocation3 + $0xa0] sm:$0xff] %vm312, %v443
      %476 = vst.msk [vmem:[#allocation3 + $0xa8] sm:$0xff] %vm312, %v444
      %477 = vst.msk [vmem:[#allocation3 + $0xb0] sm:$0xff] %vm312, %v445
      %478 = vst.msk [vmem:[#allocation3 + $0xb8] sm:$0xff] %vm312, %v446
      %479 = vst.msk [vmem:[#allocation3 + $0xc0] sm:$0xff] %vm312, %v447
      %480 = vst.msk [vmem:[#allocation3 + $0xc8] sm:$0xff] %vm312, %v448
      %481 = vst.msk [vmem:[#allocation3 + $0xd0] sm:$0xff] %vm312, %v449
      %482 = vst.msk [vmem:[#allocation3 + $0xd8] sm:$0xff] %vm312, %v450
      %483 = vst.msk [vmem:[#allocation3 + $0xe0] sm:$0xff] %vm312, %v451
      %484 = vst.msk [vmem:[#allocation3 + $0xe8] sm:$0xff] %vm312, %v452
      %485 = vst.msk [vmem:[#allocation3 + $0xf0] sm:$0xff] %vm312, %v453
      %486 = vst.msk [vmem:[#allocation3 + $0xf8] sm:$0xff] %vm312, %v454
      %v487 = vld [vmem:[#allocation2 + $0x1] sm:$0xff]
      %v488 = vld [vmem:[#allocation2 + $0x9] sm:$0xff]
      %v489 = vld [vmem:[#allocation2 + $0x19] sm:$0xff]
      %v490 = vld [vmem:[#allocation2 + $0x21] sm:$0xff]
      %v491 = vld [vmem:[#allocation2 + $0x31] sm:$0xff]
      %v492 = vld [vmem:[#allocation2 + $0x39] sm:$0xff]
      %v493 = vld [vmem:[#allocation2 + $0x49] sm:$0xff]
      %v494 = vld [vmem:[#allocation2 + $0x51] sm:$0xff]
      %v495 = vld [vmem:[#allocation2 + $0x61] sm:$0xff]
      %v496 = vld [vmem:[#allocation2 + $0x69] sm:$0xff]
      %v497 = vld [vmem:[#allocation2 + $0x79] sm:$0xff]
      %v498 = vld [vmem:[#allocation2 + $0x81] sm:$0xff]
      %v499 = vld [vmem:[#allocation2 + $0x91] sm:$0xff]
      %v500 = vld [vmem:[#allocation2 + $0x99] sm:$0xff]
      %v501 = vld [vmem:[#allocation2 + $0xa9] sm:$0xff]
      %v502 = vld [vmem:[#allocation2 + $0xb1] sm:$0xff]
      %v503 = vld [vmem:[#allocation2 + $0xc1] sm:$0xff]
      %v504 = vld [vmem:[#allocation2 + $0xc9] sm:$0xff]
      %v505 = vld [vmem:[#allocation2 + $0xd9] sm:$0xff]
      %v506 = vld [vmem:[#allocation2 + $0xe1] sm:$0xff]
      %v507 = vld [vmem:[#allocation2 + $0xf1] sm:$0xff]
      %v508 = vld [vmem:[#allocation2 + $0xf9] sm:$0xff]
      %v509 = vld [vmem:[#allocation2 + $0x109] sm:$0xff]
      %v510 = vld [vmem:[#allocation2 + $0x111] sm:$0xff]
      %v511 = vld [vmem:[#allocation2 + $0x121] sm:$0xff]
      %v512 = vld [vmem:[#allocation2 + $0x129] sm:$0xff]
      %v513 = vld [vmem:[#allocation2 + $0x139] sm:$0xff]
      %v514 = vld [vmem:[#allocation2 + $0x141] sm:$0xff]
      %v515 = vld [vmem:[#allocation2 + $0x151] sm:$0xff]
      %v516 = vld [vmem:[#allocation2 + $0x159] sm:$0xff]
      %v517 = vld [vmem:[#allocation2 + $0x169] sm:$0xff]
      %v518 = vld [vmem:[#allocation2 + $0x171] sm:$0xff]
      %551 = vrot.lane.b32.xlu0 %v487, 4
      %v552 = vpop.permute.xlu0 %551
      %553 = vrot.lane.b32.xlu0 %v488, 4
      %v554 = vpop.permute.xlu0 %553
      %555 = vrot.lane.b32.xlu0 %v489, 4
      %v556 = vpop.permute.xlu0 %555
      %557 = vrot.lane.b32.xlu0 %v490, 4
      %v558 = vpop.permute.xlu0 %557
      %559 = vrot.lane.b32.xlu0 %v491, 4
      %v560 = vpop.permute.xlu0 %559
      %561 = vrot.lane.b32.xlu0 %v492, 4
      %v562 = vpop.permute.xlu0 %561
      %563 = vrot.lane.b32.xlu0 %v493, 4
      %v564 = vpop.permute.xlu0 %563
      %565 = vrot.lane.b32.xlu0 %v494, 4
      %v566 = vpop.permute.xlu0 %565
      %567 = vrot.lane.b32.xlu0 %v495, 4
      %v568 = vpop.permute.xlu0 %567
      %569 = vrot.lane.b32.xlu0 %v496, 4
      %v570 = vpop.permute.xlu0 %569
      %571 = vrot.lane.b32.xlu0 %v497, 4
      %v572 = vpop.permute.xlu0 %571
      %573 = vrot.lane.b32.xlu0 %v498, 4
      %v574 = vpop.permute.xlu0 %573
      %575 = vrot.lane.b32.xlu0 %v499, 4
      %v576 = vpop.permute.xlu0 %575
      %577 = vrot.lane.b32.xlu0 %v500, 4
      %v578 = vpop.permute.xlu0 %577
      %579 = vrot.lane.b32.xlu0 %v501, 4
      %v580 = vpop.permute.xlu0 %579
      %581 = vrot.lane.b32.xlu0 %v502, 4
      %v582 = vpop.permute.xlu0 %581
      %583 = vrot.lane.b32.xlu0 %v503, 4
      %v584 = vpop.permute.xlu0 %583
      %585 = vrot.lane.b32.xlu0 %v504, 4
      %v586 = vpop.permute.xlu0 %585
      %587 = vrot.lane.b32.xlu0 %v505, 4
      %v588 = vpop.permute.xlu0 %587
      %589 = vrot.lane.b32.xlu0 %v506, 4
      %v590 = vpop.permute.xlu0 %589
      %591 = vrot.lane.b32.xlu0 %v507, 4
      %v592 = vpop.permute.xlu0 %591
      %593 = vrot.lane.b32.xlu0 %v508, 4
      %v594 = vpop.permute.xlu0 %593
      %595 = vrot.lane.b32.xlu0 %v509, 4
      %v596 = vpop.permute.xlu0 %595
      %597 = vrot.lane.b32.xlu0 %v510, 4
      %v598 = vpop.permute.xlu0 %597
      %599 = vrot.lane.b32.xlu0 %v511, 4
      %v600 = vpop.permute.xlu0 %599
      %601 = vrot.lane.b32.xlu0 %v512, 4
      %v602 = vpop.permute.xlu0 %601
      %603 = vrot.lane.b32.xlu0 %v513, 4
      %v604 = vpop.permute.xlu0 %603
      %605 = vrot.lane.b32.xlu0 %v514, 4
      %v606 = vpop.permute.xlu0 %605
      %607 = vrot.lane.b32.xlu0 %v515, 4
      %v608 = vpop.permute.xlu0 %607
      %609 = vrot.lane.b32.xlu0 %v516, 4
      %v610 = vpop.permute.xlu0 %609
      %611 = vrot.lane.b32.xlu0 %v517, 4
      %v612 = vpop.permute.xlu0 %611
      %613 = vrot.lane.b32.xlu0 %v518, 4
      %v614 = vpop.permute.xlu0 %613
      %vm647 = vcmask 64544
      %648 = vst.msk [vmem:[#allocation3] sm:$0xff] %vm647, %v552
      %649 = vst.msk [vmem:[#allocation3 + $0x8] sm:$0xff] %vm647, %v554
      %650 = vst.msk [vmem:[#allocation3 + $0x10] sm:$0xff] %vm647, %v556
      %651 = vst.msk [vmem:[#allocation3 + $0x18] sm:$0xff] %vm647, %v558
      %652 = vst.msk [vmem:[#allocation3 + $0x20] sm:$0xff] %vm647, %v560
      %653 = vst.msk [vmem:[#allocation3 + $0x28] sm:$0xff] %vm647, %v562
      %654 = vst.msk [vmem:[#allocation3 + $0x30] sm:$0xff] %vm647, %v564
      %655 = vst.msk [vmem:[#allocation3 + $0x38] sm:$0xff] %vm647, %v566
      %656 = vst.msk [vmem:[#allocation3 + $0x40] sm:$0xff] %vm647, %v568
      %657 = vst.msk [vmem:[#allocation3 + $0x48] sm:$0xff] %vm647, %v570
      %658 = vst.msk [vmem:[#allocation3 + $0x50] sm:$0xff] %vm647, %v572
      %659 = vst.msk [vmem:[#allocation3 + $0x58] sm:$0xff] %vm647, %v574
      %660 = vst.msk [vmem:[#allocation3 + $0x60] sm:$0xff] %vm647, %v576
      %661 = vst.msk [vmem:[#allocation3 + $0x68] sm:$0xff] %vm647, %v578
      %662 = vst.msk [vmem:[#allocation3 + $0x70] sm:$0xff] %vm647, %v580
      %663 = vst.msk [vmem:[#allocation3 + $0x78] sm:$0xff] %vm647, %v582
      %664 = vst.msk [vmem:[#allocation3 + $0x80] sm:$0xff] %vm647, %v584
      %665 = vst.msk [vmem:[#allocation3 + $0x88] sm:$0xff] %vm647, %v586
      %666 = vst.msk [vmem:[#allocation3 + $0x90] sm:$0xff] %vm647, %v588
      %667 = vst.msk [vmem:[#allocation3 + $0x98] sm:$0xff] %vm647, %v590
      %668 = vst.msk [vmem:[#allocation3 + $0xa0] sm:$0xff] %vm647, %v592
      %669 = vst.msk [vmem:[#allocation3 + $0xa8] sm:$0xff] %vm647, %v594
      %670 = vst.msk [vmem:[#allocation3 + $0xb0] sm:$0xff] %vm647, %v596
      %671 = vst.msk [vmem:[#allocation3 + $0xb8] sm:$0xff] %vm647, %v598
      %672 = vst.msk [vmem:[#allocation3 + $0xc0] sm:$0xff] %vm647, %v600
      %673 = vst.msk [vmem:[#allocation3 + $0xc8] sm:$0xff] %vm647, %v602
      %674 = vst.msk [vmem:[#allocation3 + $0xd0] sm:$0xff] %vm647, %v604
      %675 = vst.msk [vmem:[#allocation3 + $0xd8] sm:$0xff] %vm647, %v606
      %676 = vst.msk [vmem:[#allocation3 + $0xe0] sm:$0xff] %vm647, %v608
      %677 = vst.msk [vmem:[#allocation3 + $0xe8] sm:$0xff] %vm647, %v610
      %678 = vst.msk [vmem:[#allocation3 + $0xf0] sm:$0xff] %vm647, %v612
      %679 = vst.msk [vmem:[#allocation3 + $0xf8] sm:$0xff] %vm647, %v614
      %v680 = vld [vmem:[#allocation2 + $0x2] sm:$0xff]
      %v681 = vld [vmem:[#allocation2 + $0xa] sm:$0xff]
      %v682 = vld [vmem:[#allocation2 + $0x1a] sm:$0xff]
      %v683 = vld [vmem:[#allocation2 + $0x22] sm:$0xff]
      %v684 = vld [vmem:[#allocation2 + $0x32] sm:$0xff]
      %v685 = vld [vmem:[#allocation2 + $0x3a] sm:$0xff]
      %v686 = vld [vmem:[#allocation2 + $0x4a] sm:$0xff]
      %v687 = vld [vmem:[#allocation2 + $0x52] sm:$0xff]
      %v688 = vld [vmem:[#allocation2 + $0x62] sm:$0xff]
      %v689 = vld [vmem:[#allocation2 + $0x6a] sm:$0xff]
      %v690 = vld [vmem:[#allocation2 + $0x7a] sm:$0xff]
      %v691 = vld [vmem:[#allocation2 + $0x82] sm:$0xff]
      %v692 = vld [vmem:[#allocation2 + $0x92] sm:$0xff]
      %v693 = vld [vmem:[#allocation2 + $0x9a] sm:$0xff]
      %v694 = vld [vmem:[#allocation2 + $0xaa] sm:$0xff]
      %v695 = vld [vmem:[#allocation2 + $0xb2] sm:$0xff]
      %v696 = vld [vmem:[#allocation2 + $0xc2] sm:$0xff]
      %v697 = vld [vmem:[#allocation2 + $0xca] sm:$0xff]
      %v698 = vld [vmem:[#allocation2 + $0xda] sm:$0xff]
      %v699 = vld [vmem:[#allocation2 + $0xe2] sm:$0xff]
      %v700 = vld [vmem:[#allocation2 + $0xf2] sm:$0xff]
      %v701 = vld [vmem:[#allocation2 + $0xfa] sm:$0xff]
      %v702 = vld [vmem:[#allocation2 + $0x10a] sm:$0xff]
      %v703 = vld [vmem:[#allocation2 + $0x112] sm:$0xff]
      %v704 = vld [vmem:[#allocation2 + $0x122] sm:$0xff]
      %v705 = vld [vmem:[#allocation2 + $0x12a] sm:$0xff]
      %v706 = vld [vmem:[#allocation2 + $0x13a] sm:$0xff]
      %v707 = vld [vmem:[#allocation2 + $0x142] sm:$0xff]
      %v708 = vld [vmem:[#allocation2 + $0x152] sm:$0xff]
      %v709 = vld [vmem:[#allocation2 + $0x15a] sm:$0xff]
      %v710 = vld [vmem:[#allocation2 + $0x16a] sm:$0xff]
      %v711 = vld [vmem:[#allocation2 + $0x172] sm:$0xff]
      %744 = vrot.lane.b32.xlu0 %v680, 8
      %v745 = vpop.permute.xlu0 %744
      %746 = vrot.lane.b32.xlu0 %v681, 8
      %v747 = vpop.permute.xlu0 %746
      %748 = vrot.lane.b32.xlu0 %v682, 8
      %v749 = vpop.permute.xlu0 %748
      %750 = vrot.lane.b32.xlu0 %v683, 8
      %v751 = vpop.permute.xlu0 %750
      %752 = vrot.lane.b32.xlu0 %v684, 8
      %v753 = vpop.permute.xlu0 %752
      %754 = vrot.lane.b32.xlu0 %v685, 8
      %v755 = vpop.permute.xlu0 %754
      %756 = vrot.lane.b32.xlu0 %v686, 8
      %v757 = vpop.permute.xlu0 %756
      %758 = vrot.lane.b32.xlu0 %v687, 8
      %v759 = vpop.permute.xlu0 %758
      %760 = vrot.lane.b32.xlu0 %v688, 8
      %v761 = vpop.permute.xlu0 %760
      %762 = vrot.lane.b32.xlu0 %v689, 8
      %v763 = vpop.permute.xlu0 %762
      %764 = vrot.lane.b32.xlu0 %v690, 8
      %v765 = vpop.permute.xlu0 %764
      %766 = vrot.lane.b32.xlu0 %v691, 8
      %v767 = vpop.permute.xlu0 %766
      %768 = vrot.lane.b32.xlu0 %v692, 8
      %v769 = vpop.permute.xlu0 %768
      %770 = vrot.lane.b32.xlu0 %v693, 8
      %v771 = vpop.permute.xlu0 %770
      %772 = vrot.lane.b32.xlu0 %v694, 8
      %v773 = vpop.permute.xlu0 %772
      %774 = vrot.lane.b32.xlu0 %v695, 8
      %v775 = vpop.permute.xlu0 %774
      %776 = vrot.lane.b32.xlu0 %v696, 8
      %v777 = vpop.permute.xlu0 %776
      %778 = vrot.lane.b32.xlu0 %v697, 8
      %v779 = vpop.permute.xlu0 %778
      %780 = vrot.lane.b32.xlu0 %v698, 8
      %v781 = vpop.permute.xlu0 %780
      %782 = vrot.lane.b32.xlu0 %v699, 8
      %v783 = vpop.permute.xlu0 %782
      %784 = vrot.lane.b32.xlu0 %v700, 8
      %v785 = vpop.permute.xlu0 %784
      %786 = vrot.lane.b32.xlu0 %v701, 8
      %v787 = vpop.permute.xlu0 %786
      %788 = vrot.lane.b32.xlu0 %v702, 8
      %v789 = vpop.permute.xlu0 %788
      %790 = vrot.lane.b32.xlu0 %v703, 8
      %v791 = vpop.permute.xlu0 %790
      %792 = vrot.lane.b32.xlu0 %v704, 8
      %v793 = vpop.permute.xlu0 %792
      %794 = vrot.lane.b32.xlu0 %v705, 8
      %v795 = vpop.permute.xlu0 %794
      %796 = vrot.lane.b32.xlu0 %v706, 8
      %v797 = vpop.permute.xlu0 %796
      %798 = vrot.lane.b32.xlu0 %v707, 8
      %v799 = vpop.permute.xlu0 %798
      %800 = vrot.lane.b32.xlu0 %v708, 8
      %v801 = vpop.permute.xlu0 %800
      %802 = vrot.lane.b32.xlu0 %v709, 8
      %v803 = vpop.permute.xlu0 %802
      %804 = vrot.lane.b32.xlu0 %v710, 8
      %v805 = vpop.permute.xlu0 %804
      %806 = vrot.lane.b32.xlu0 %v711, 8
      %v807 = vpop.permute.xlu0 %806
      %vm840 = vcmask 97344
      %841 = vst.msk [vmem:[#allocation3] sm:$0xff] %vm840, %v745
      %842 = vst.msk [vmem:[#allocation3 + $0x8] sm:$0xff] %vm840, %v747
      %843 = vst.msk [vmem:[#allocation3 + $0x10] sm:$0xff] %vm840, %v749
      %844 = vst.msk [vmem:[#allocation3 + $0x18] sm:$0xff] %vm840, %v751
      %845 = vst.msk [vmem:[#allocation3 + $0x20] sm:$0xff] %vm840, %v753
      %846 = vst.msk [vmem:[#allocation3 + $0x28] sm:$0xff] %vm840, %v755
      %847 = vst.msk [vmem:[#allocation3 + $0x30] sm:$0xff] %vm840, %v757
      %848 = vst.msk [vmem:[#allocation3 + $0x38] sm:$0xff] %vm840, %v759
      %849 = vst.msk [vmem:[#allocation3 + $0x40] sm:$0xff] %vm840, %v761
      %850 = vst.msk [vmem:[#allocation3 + $0x48] sm:$0xff] %vm840, %v763
      %851 = vst.msk [vmem:[#allocation3 + $0x50] sm:$0xff] %vm840, %v765
      %852 = vst.msk [vmem:[#allocation3 + $0x58] sm:$0xff] %vm840, %v767
      %853 = vst.msk [vmem:[#allocation3 + $0x60] sm:$0xff] %vm840, %v769
      %854 = vst.msk [vmem:[#allocation3 + $0x68] sm:$0xff] %vm840, %v771
      %855 = vst.msk [vmem:[#allocation3 + $0x70] sm:$0xff] %vm840, %v773
      %856 = vst.msk [vmem:[#allocation3 + $0x78] sm:$0xff] %vm840, %v775
      %857 = vst.msk [vmem:[#allocation3 + $0x80] sm:$0xff] %vm840, %v777
      %858 = vst.msk [vmem:[#allocation3 + $0x88] sm:$0xff] %vm840, %v779
      %859 = vst.msk [vmem:[#allocation3 + $0x90] sm:$0xff] %vm840, %v781
      %860 = vst.msk [vmem:[#allocation3 + $0x98] sm:$0xff] %vm840, %v783
      %861 = vst.msk [vmem:[#allocation3 + $0xa0] sm:$0xff] %vm840, %v785
      %862 = vst.msk [vmem:[#allocation3 + $0xa8] sm:$0xff] %vm840, %v787
      %863 = vst.msk [vmem:[#allocation3 + $0xb0] sm:$0xff] %vm840, %v789
      %864 = vst.msk [vmem:[#allocation3 + $0xb8] sm:$0xff] %vm840, %v791
      %865 = vst.msk [vmem:[#allocation3 + $0xc0] sm:$0xff] %vm840, %v793
      %866 = vst.msk [vmem:[#allocation3 + $0xc8] sm:$0xff] %vm840, %v795
      %867 = vst.msk [vmem:[#allocation3 + $0xd0] sm:$0xff] %vm840, %v797
      %868 = vst.msk [vmem:[#allocation3 + $0xd8] sm:$0xff] %vm840, %v799
      %869 = vst.msk [vmem:[#allocation3 + $0xe0] sm:$0xff] %vm840, %v801
      %870 = vst.msk [vmem:[#allocation3 + $0xe8] sm:$0xff] %vm840, %v803
      %871 = vst.msk [vmem:[#allocation3 + $0xf0] sm:$0xff] %vm840, %v805
      %872 = vst.msk [vmem:[#allocation3 + $0xf8] sm:$0xff] %vm840, %v807
      %v873 = vld [vmem:[%s311] sm:$0xff]
      %v874 = vld [vmem:[%s311 + $0x8] sm:$0xff]
      %v875 = vld [vmem:[%s311 + $0x18] sm:$0xff]
      %v876 = vld [vmem:[%s311 + $0x20] sm:$0xff]
      %v877 = vld [vmem:[%s311 + $0x30] sm:$0xff]
      %v878 = vld [vmem:[%s311 + $0x38] sm:$0xff]
      %v879 = vld [vmem:[%s311 + $0x48] sm:$0xff]
      %v880 = vld [vmem:[%s311 + $0x50] sm:$0xff]
      %v881 = vld [vmem:[%s311 + $0x60] sm:$0xff]
      %v882 = vld [vmem:[%s311 + $0x68] sm:$0xff]
      %v883 = vld [vmem:[%s311 + $0x78] sm:$0xff]
      %v884 = vld [vmem:[%s311 + $0x80] sm:$0xff]
      %v885 = vld [vmem:[%s311 + $0x90] sm:$0xff]
      %v886 = vld [vmem:[%s311 + $0x98] sm:$0xff]
      %v887 = vld [vmem:[%s311 + $0xa8] sm:$0xff]
      %v888 = vld [vmem:[%s311 + $0xb0] sm:$0xff]
      %v889 = vld [vmem:[%s311 + $0xc0] sm:$0xff]
      %v890 = vld [vmem:[%s311 + $0xc8] sm:$0xff]
      %v891 = vld [vmem:[%s311 + $0xd8] sm:$0xff]
      %v892 = vld [vmem:[%s311 + $0xe0] sm:$0xff]
      %v893 = vld [vmem:[%s311 + $0xf0] sm:$0xff]
      %v894 = vld [vmem:[%s311 + $0xf8] sm:$0xff]
      %v895 = vld [vmem:[%s311 + $0x108] sm:$0xff]
      %v896 = vld [vmem:[%s311 + $0x110] sm:$0xff]
      %v897 = vld [vmem:[%s311 + $0x120] sm:$0xff]
      %v898 = vld [vmem:[%s311 + $0x128] sm:$0xff]
      %v899 = vld [vmem:[%s311 + $0x138] sm:$0xff]
      %v900 = vld [vmem:[%s311 + $0x140] sm:$0xff]
      %v901 = vld [vmem:[%s311 + $0x150] sm:$0xff]
      %v902 = vld [vmem:[%s311 + $0x158] sm:$0xff]
      %v903 = vld [vmem:[%s311 + $0x168] sm:$0xff]
      %v904 = vld [vmem:[%s311 + $0x170] sm:$0xff]
      %937 = vrot.lane.b32.xlu0 %v873, 12
      %v938 = vpop.permute.xlu0 %937
      %939 = vrot.lane.b32.xlu0 %v874, 12
      %v940 = vpop.permute.xlu0 %939
      %941 = vrot.lane.b32.xlu0 %v875, 12
      %v942 = vpop.permute.xlu0 %941
      %943 = vrot.lane.b32.xlu0 %v876, 12
      %v944 = vpop.permute.xlu0 %943
      %945 = vrot.lane.b32.xlu0 %v877, 12
      %v946 = vpop.permute.xlu0 %945
      %947 = vrot.lane.b32.xlu0 %v878, 12
      %v948 = vpop.permute.xlu0 %947
      %949 = vrot.lane.b32.xlu0 %v879, 12
      %v950 = vpop.permute.xlu0 %949
      %951 = vrot.lane.b32.xlu0 %v880, 12
      %v952 = vpop.permute.xlu0 %951
      %953 = vrot.lane.b32.xlu0 %v881, 12
      %v954 = vpop.permute.xlu0 %953
      %955 = vrot.lane.b32.xlu0 %v882, 12
      %v956 = vpop.permute.xlu0 %955
      %957 = vrot.lane.b32.xlu0 %v883, 12
      %v958 = vpop.permute.xlu0 %957
      %959 = vrot.lane.b32.xlu0 %v884, 12
      %v960 = vpop.permute.xlu0 %959
      %961 = vrot.lane.b32.xlu0 %v885, 12
      %v962 = vpop.permute.xlu0 %961
      %963 = vrot.lane.b32.xlu0 %v886, 12
      %v964 = vpop.permute.xlu0 %963
      %965 = vrot.lane.b32.xlu0 %v887, 12
      %v966 = vpop.permute.xlu0 %965
      %967 = vrot.lane.b32.xlu0 %v888, 12
      %v968 = vpop.permute.xlu0 %967
      %969 = vrot.lane.b32.xlu0 %v889, 12
      %v970 = vpop.permute.xlu0 %969
      %971 = vrot.lane.b32.xlu0 %v890, 12
      %v972 = vpop.permute.xlu0 %971
      %973 = vrot.lane.b32.xlu0 %v891, 12
      %v974 = vpop.permute.xlu0 %973
      %975 = vrot.lane.b32.xlu0 %v892, 12
      %v976 = vpop.permute.xlu0 %975
      %977 = vrot.lane.b32.xlu0 %v893, 12
      %v978 = vpop.permute.xlu0 %977
      %979 = vrot.lane.b32.xlu0 %v894, 12
      %v980 = vpop.permute.xlu0 %979
      %981 = vrot.lane.b32.xlu0 %v895, 12
      %v982 = vpop.permute.xlu0 %981
      %983 = vrot.lane.b32.xlu0 %v896, 12
      %v984 = vpop.permute.xlu0 %983
      %985 = vrot.lane.b32.xlu0 %v897, 12
      %v986 = vpop.permute.xlu0 %985
      %987 = vrot.lane.b32.xlu0 %v898, 12
      %v988 = vpop.permute.xlu0 %987
      %989 = vrot.lane.b32.xlu0 %v899, 12
      %v990 = vpop.permute.xlu0 %989
      %991 = vrot.lane.b32.xlu0 %v900, 12
      %v992 = vpop.permute.xlu0 %991
      %993 = vrot.lane.b32.xlu0 %v901, 12
      %v994 = vpop.permute.xlu0 %993
      %995 = vrot.lane.b32.xlu0 %v902, 12
      %v996 = vpop.permute.xlu0 %995
      %997 = vrot.lane.b32.xlu0 %v903, 12
      %v998 = vpop.permute.xlu0 %997
      %999 = vrot.lane.b32.xlu0 %v904, 12
      %v1000 = vpop.permute.xlu0 %999
      %vm1033 = vcmask 130144
      %1034 = vst.msk [vmem:[#allocation3] sm:$0xff] %vm1033, %v938
      %1035 = vst.msk [vmem:[#allocation3 + $0x8] sm:$0xff] %vm1033, %v940
      %1036 = vst.msk [vmem:[#allocation3 + $0x10] sm:$0xff] %vm1033, %v942
      %1037 = vst.msk [vmem:[#allocation3 + $0x18] sm:$0xff] %vm1033, %v944
      %1038 = vst.msk [vmem:[#allocation3 + $0x20] sm:$0xff] %vm1033, %v946
      %1039 = vst.msk [vmem:[#allocation3 + $0x28] sm:$0xff] %vm1033, %v948
      %1040 = vst.msk [vmem:[#allocation3 + $0x30] sm:$0xff] %vm1033, %v950
      %1041 = vst.msk [vmem:[#allocation3 + $0x38] sm:$0xff] %vm1033, %v952
      %1042 = vst.msk [vmem:[#allocation3 + $0x40] sm:$0xff] %vm1033, %v954
      %1043 = vst.msk [vmem:[#allocation3 + $0x48] sm:$0xff] %vm1033, %v956
      %1044 = vst.msk [vmem:[#allocation3 + $0x50] sm:$0xff] %vm1033, %v958
      %1045 = vst.msk [vmem:[#allocation3 + $0x58] sm:$0xff] %vm1033, %v960
      %1046 = vst.msk [vmem:[#allocation3 + $0x60] sm:$0xff] %vm1033, %v962
      %1047 = vst.msk [vmem:[#allocation3 + $0x68] sm:$0xff] %vm1033, %v964
      %1048 = vst.msk [vmem:[#allocation3 + $0x70] sm:$0xff] %vm1033, %v966
      %1049 = vst.msk [vmem:[#allocation3 + $0x78] sm:$0xff] %vm1033, %v968
      %1050 = vst.msk [vmem:[#allocation3 + $0x80] sm:$0xff] %vm1033, %v970
      %1051 = vst.msk [vmem:[#allocation3 + $0x88] sm:$0xff] %vm1033, %v972
      %1052 = vst.msk [vmem:[#allocation3 + $0x90] sm:$0xff] %vm1033, %v974
      %1053 = vst.msk [vmem:[#allocation3 + $0x98] sm:$0xff] %vm1033, %v976
      %1054 = vst.msk [vmem:[#allocation3 + $0xa0] sm:$0xff] %vm1033, %v978
      %1055 = vst.msk [vmem:[#allocation3 + $0xa8] sm:$0xff] %vm1033, %v980
      %1056 = vst.msk [vmem:[#allocation3 + $0xb0] sm:$0xff] %vm1033, %v982
      %1057 = vst.msk [vmem:[#allocation3 + $0xb8] sm:$0xff] %vm1033, %v984
      %1058 = vst.msk [vmem:[#allocation3 + $0xc0] sm:$0xff] %vm1033, %v986
      %1059 = vst.msk [vmem:[#allocation3 + $0xc8] sm:$0xff] %vm1033, %v988
      %1060 = vst.msk [vmem:[#allocation3 + $0xd0] sm:$0xff] %vm1033, %v990
      %1061 = vst.msk [vmem:[#allocation3 + $0xd8] sm:$0xff] %vm1033, %v992
      %1062 = vst.msk [vmem:[#allocation3 + $0xe0] sm:$0xff] %vm1033, %v994
      %1063 = vst.msk [vmem:[#allocation3 + $0xe8] sm:$0xff] %vm1033, %v996
      %1064 = vst.msk [vmem:[#allocation3 + $0xf0] sm:$0xff] %vm1033, %v998
      %1065 = vst.msk [vmem:[#allocation3 + $0xf8] sm:$0xff] %vm1033, %v1000
      %v1066 = vld [vmem:[%s311 + $0x1] sm:$0xff]
      %v1067 = vld [vmem:[%s311 + $0x9] sm:$0xff]
      %v1068 = vld [vmem:[%s311 + $0x19] sm:$0xff]
      %v1069 = vld [vmem:[%s311 + $0x21] sm:$0xff]
      %v1070 = vld [vmem:[%s311 + $0x31] sm:$0xff]
      %v1071 = vld [vmem:[%s311 + $0x39] sm:$0xff]
      %v1072 = vld [vmem:[%s311 + $0x49] sm:$0xff]
      %v1073 = vld [vmem:[%s311 + $0x51] sm:$0xff]
      %v1074 = vld [vmem:[%s311 + $0x61] sm:$0xff]
      %v1075 = vld [vmem:[%s311 + $0x69] sm:$0xff]
      %v1076 = vld [vmem:[%s311 + $0x79] sm:$0xff]
      %v1077 = vld [vmem:[%s311 + $0x81] sm:$0xff]
      %v1078 = vld [vmem:[%s311 + $0x91] sm:$0xff]
      %v1079 = vld [vmem:[%s311 + $0x99] sm:$0xff]
      %v1080 = vld [vmem:[%s311 + $0xa9] sm:$0xff]
      %v1081 = vld [vmem:[%s311 + $0xb1] sm:$0xff]
      %v1082 = vld [vmem:[%s311 + $0xc1] sm:$0xff]
      %v1083 = vld [vmem:[%s311 + $0xc9] sm:$0xff]
      %v1084 = vld [vmem:[%s311 + $0xd9] sm:$0xff]
      %v1085 = vld [vmem:[%s311 + $0xe1] sm:$0xff]
      %v1086 = vld [vmem:[%s311 + $0xf1] sm:$0xff]
      %v1087 = vld [vmem:[%s311 + $0xf9] sm:$0xff]
      %v1088 = vld [vmem:[%s311 + $0x109] sm:$0xff]
      %v1089 = vld [vmem:[%s311 + $0x111] sm:$0xff]
      %v1090 = vld [vmem:[%s311 + $0x121] sm:$0xff]
      %v1091 = vld [vmem:[%s311 + $0x129] sm:$0xff]
      %v1092 = vld [vmem:[%s311 + $0x139] sm:$0xff]
      %v1093 = vld [vmem:[%s311 + $0x141] sm:$0xff]
      %v1094 = vld [vmem:[%s311 + $0x151] sm:$0xff]
      %v1095 = vld [vmem:[%s311 + $0x159] sm:$0xff]
      %v1096 = vld [vmem:[%s311 + $0x169] sm:$0xff]
      %v1097 = vld [vmem:[%s311 + $0x171] sm:$0xff]
      %1130 = vrot.lane.b32.xlu0 %v1066, 16
      %v1131 = vpop.permute.xlu0 %1130
      %1132 = vrot.lane.b32.xlu0 %v1067, 16
      %v1133 = vpop.permute.xlu0 %1132
      %1134 = vrot.lane.b32.xlu0 %v1068, 16
      %v1135 = vpop.permute.xlu0 %1134
      %1136 = vrot.lane.b32.xlu0 %v1069, 16
      %v1137 = vpop.permute.xlu0 %1136
      %1138 = vrot.lane.b32.xlu0 %v1070, 16
      %v1139 = vpop.permute.xlu0 %1138
      %1140 = vrot.lane.b32.xlu0 %v1071, 16
      %v1141 = vpop.permute.xlu0 %1140
      %1142 = vrot.lane.b32.xlu0 %v1072, 16
      %v1143 = vpop.permute.xlu0 %1142
      %1144 = vrot.lane.b32.xlu0 %v1073, 16
      %v1145 = vpop.permute.xlu0 %1144
      %1146 = vrot.lane.b32.xlu0 %v1074, 16
      %v1147 = vpop.permute.xlu0 %1146
      %1148 = vrot.lane.b32.xlu0 %v1075, 16
      %v1149 = vpop.permute.xlu0 %1148
      %1150 = vrot.lane.b32.xlu0 %v1076, 16
      %v1151 = vpop.permute.xlu0 %1150
      %1152 = vrot.lane.b32.xlu0 %v1077, 16
      %v1153 = vpop.permute.xlu0 %1152
      %1154 = vrot.lane.b32.xlu0 %v1078, 16
      %v1155 = vpop.permute.xlu0 %1154
      %1156 = vrot.lane.b32.xlu0 %v1079, 16
      %v1157 = vpop.permute.xlu0 %1156
      %1158 = vrot.lane.b32.xlu0 %v1080, 16
      %v1159 = vpop.permute.xlu0 %1158
      %1160 = vrot.lane.b32.xlu0 %v1081, 16
      %v1161 = vpop.permute.xlu0 %1160
      %1162 = vrot.lane.b32.xlu0 %v1082, 16
      %v1163 = vpop.permute.xlu0 %1162
      %1164 = vrot.lane.b32.xlu0 %v1083, 16
      %v1165 = vpop.permute.xlu0 %1164
      %1166 = vrot.lane.b32.xlu0 %v1084, 16
      %v1167 = vpop.permute.xlu0 %1166
      %1168 = vrot.lane.b32.xlu0 %v1085, 16
      %v1169 = vpop.permute.xlu0 %1168
      %1170 = vrot.lane.b32.xlu0 %v1086, 16
      %v1171 = vpop.permute.xlu0 %1170
      %1172 = vrot.lane.b32.xlu0 %v1087, 16
      %v1173 = vpop.permute.xlu0 %1172
      %1174 = vrot.lane.b32.xlu0 %v1088, 16
      %v1175 = vpop.permute.xlu0 %1174
      %1176 = vrot.lane.b32.xlu0 %v1089, 16
      %v1177 = vpop.permute.xlu0 %1176
      %1178 = vrot.lane.b32.xlu0 %v1090, 16
      %v1179 = vpop.permute.xlu0 %1178
      %1180 = vrot.lane.b32.xlu0 %v1091, 16
      %v1181 = vpop.permute.xlu0 %1180
      %1182 = vrot.lane.b32.xlu0 %v1092, 16
      %v1183 = vpop.permute.xlu0 %1182
      %1184 = vrot.lane.b32.xlu0 %v1093, 16
      %v1185 = vpop.permute.xlu0 %1184
      %1186 = vrot.lane.b32.xlu0 %v1094, 16
      %v1187 = vpop.permute.xlu0 %1186
      %1188 = vrot.lane.b32.xlu0 %v1095, 16
      %v1189 = vpop.permute.xlu0 %1188
      %1190 = vrot.lane.b32.xlu0 %v1096, 16
      %v1191 = vpop.permute.xlu0 %1190
      %1192 = vrot.lane.b32.xlu0 %v1097, 16
      %v1193 = vpop.permute.xlu0 %1192
      %vm1226 = vcmask 162944
      %1227 = vst.msk [vmem:[#allocation3] sm:$0xff] %vm1226, %v1131
      %1228 = vst.msk [vmem:[#allocation3 + $0x8] sm:$0xff] %vm1226, %v1133
      %1229 = vst.msk [vmem:[#allocation3 + $0x10] sm:$0xff] %vm1226, %v1135
      %1230 = vst.msk [vmem:[#allocation3 + $0x18] sm:$0xff] %vm1226, %v1137
      %1231 = vst.msk [vmem:[#allocation3 + $0x20] sm:$0xff] %vm1226, %v1139
      %1232 = vst.msk [vmem:[#allocation3 + $0x28] sm:$0xff] %vm1226, %v1141
      %1233 = vst.msk [vmem:[#allocation3 + $0x30] sm:$0xff] %vm1226, %v1143
      %1234 = vst.msk [vmem:[#allocation3 + $0x38] sm:$0xff] %vm1226, %v1145
      %1235 = vst.msk [vmem:[#allocation3 + $0x40] sm:$0xff] %vm1226, %v1147
      %1236 = vst.msk [vmem:[#allocation3 + $0x48] sm:$0xff] %vm1226, %v1149
      %1237 = vst.msk [vmem:[#allocation3 + $0x50] sm:$0xff] %vm1226, %v1151
      %1238 = vst.msk [vmem:[#allocation3 + $0x58] sm:$0xff] %vm1226, %v1153
      %1239 = vst.msk [vmem:[#allocation3 + $0x60] sm:$0xff] %vm1226, %v1155
      %1240 = vst.msk [vmem:[#allocation3 + $0x68] sm:$0xff] %vm1226, %v1157
      %1241 = vst.msk [vmem:[#allocation3 + $0x70] sm:$0xff] %vm1226, %v1159
      %1242 = vst.msk [vmem:[#allocation3 + $0x78] sm:$0xff] %vm1226, %v1161
      %1243 = vst.msk [vmem:[#allocation3 + $0x80] sm:$0xff] %vm1226, %v1163
      %1244 = vst.msk [vmem:[#allocation3 + $0x88] sm:$0xff] %vm1226, %v1165
      %1245 = vst.msk [vmem:[#allocation3 + $0x90] sm:$0xff] %vm1226, %v1167
      %1246 = vst.msk [vmem:[#allocation3 + $0x98] sm:$0xff] %vm1226, %v1169
      %1247 = vst.msk [vmem:[#allocation3 + $0xa0] sm:$0xff] %vm1226, %v1171
      %1248 = vst.msk [vmem:[#allocation3 + $0xa8] sm:$0xff] %vm1226, %v1173
      %1249 = vst.msk [vmem:[#allocation3 + $0xb0] sm:$0xff] %vm1226, %v1175
      %1250 = vst.msk [vmem:[#allocation3 + $0xb8] sm:$0xff] %vm1226, %v1177
      %1251 = vst.msk [vmem:[#allocation3 + $0xc0] sm:$0xff] %vm1226, %v1179
      %1252 = vst.msk [vmem:[#allocation3 + $0xc8] sm:$0xff] %vm1226, %v1181
      %1253 = vst.msk [vmem:[#allocation3 + $0xd0] sm:$0xff] %vm1226, %v1183
      %1254 = vst.msk [vmem:[#allocation3 + $0xd8] sm:$0xff] %vm1226, %v1185
      %1255 = vst.msk [vmem:[#allocation3 + $0xe0] sm:$0xff] %vm1226, %v1187
      %1256 = vst.msk [vmem:[#allocation3 + $0xe8] sm:$0xff] %vm1226, %v1189
      %1257 = vst.msk [vmem:[#allocation3 + $0xf0] sm:$0xff] %vm1226, %v1191
      %1258 = vst.msk [vmem:[#allocation3 + $0xf8] sm:$0xff] %vm1226, %v1193
      %v1259 = vld [vmem:[%s311 + $0x2] sm:$0xff]
      %v1260 = vld [vmem:[%s311 + $0xa] sm:$0xff]
      %v1261 = vld [vmem:[%s311 + $0x1a] sm:$0xff]
      %v1262 = vld [vmem:[%s311 + $0x22] sm:$0xff]
      %v1263 = vld [vmem:[%s311 + $0x32] sm:$0xff]
      %v1264 = vld [vmem:[%s311 + $0x3a] sm:$0xff]
      %v1265 = vld [vmem:[%s311 + $0x4a] sm:$0xff]
      %v1266 = vld [vmem:[%s311 + $0x52] sm:$0xff]
      %v1267 = vld [vmem:[%s311 + $0x62] sm:$0xff]
      %v1268 = vld [vmem:[%s311 + $0x6a] sm:$0xff]
      %v1269 = vld [vmem:[%s311 + $0x7a] sm:$0xff]
      %v1270 = vld [vmem:[%s311 + $0x82] sm:$0xff]
      %v1271 = vld [vmem:[%s311 + $0x92] sm:$0xff]
      %v1272 = vld [vmem:[%s311 + $0x9a] sm:$0xff]
      %v1273 = vld [vmem:[%s311 + $0xaa] sm:$0xff]
      %v1274 = vld [vmem:[%s311 + $0xb2] sm:$0xff]
      %v1275 = vld [vmem:[%s311 + $0xc2] sm:$0xff]
      %v1276 = vld [vmem:[%s311 + $0xca] sm:$0xff]
      %v1277 = vld [vmem:[%s311 + $0xda] sm:$0xff]
      %v1278 = vld [vmem:[%s311 + $0xe2] sm:$0xff]
      %v1279 = vld [vmem:[%s311 + $0xf2] sm:$0xff]
      %v1280 = vld [vmem:[%s311 + $0xfa] sm:$0xff]
      %v1281 = vld [vmem:[%s311 + $0x10a] sm:$0xff]
      %v1282 = vld [vmem:[%s311 + $0x112] sm:$0xff]
      %v1283 = vld [vmem:[%s311 + $0x122] sm:$0xff]
      %v1284 = vld [vmem:[%s311 + $0x12a] sm:$0xff]
      %v1285 = vld [vmem:[%s311 + $0x13a] sm:$0xff]
      %v1286 = vld [vmem:[%s311 + $0x142] sm:$0xff]
      %v1287 = vld [vmem:[%s311 + $0x152] sm:$0xff]
      %v1288 = vld [vmem:[%s311 + $0x15a] sm:$0xff]
      %v1289 = vld [vmem:[%s311 + $0x16a] sm:$0xff]
      %v1290 = vld [vmem:[%s311 + $0x172] sm:$0xff]
      %1323 = vrot.lane.b32.xlu0 %v1259, 20
      %v1324 = vpop.permute.xlu0 %1323
      %1325 = vrot.lane.b32.xlu0 %v1260, 20
      %v1326 = vpop.permute.xlu0 %1325
      %1327 = vrot.lane.b32.xlu0 %v1261, 20
      %v1328 = vpop.permute.xlu0 %1327
      %1329 = vrot.lane.b32.xlu0 %v1262, 20
      %v1330 = vpop.permute.xlu0 %1329
      %1331 = vrot.lane.b32.xlu0 %v1263, 20
      %v1332 = vpop.permute.xlu0 %1331
      %1333 = vrot.lane.b32.xlu0 %v1264, 20
      %v1334 = vpop.permute.xlu0 %1333
      %1335 = vrot.lane.b32.xlu0 %v1265, 20
      %v1336 = vpop.permute.xlu0 %1335
      %1337 = vrot.lane.b32.xlu0 %v1266, 20
      %v1338 = vpop.permute.xlu0 %1337
      %1339 = vrot.lane.b32.xlu0 %v1267, 20
      %v1340 = vpop.permute.xlu0 %1339
      %1341 = vrot.lane.b32.xlu0 %v1268, 20
      %v1342 = vpop.permute.xlu0 %1341
      %1343 = vrot.lane.b32.xlu0 %v1269, 20
      %v1344 = vpop.permute.xlu0 %1343
      %1345 = vrot.lane.b32.xlu0 %v1270, 20
      %v1346 = vpop.permute.xlu0 %1345
      %1347 = vrot.lane.b32.xlu0 %v1271, 20
      %v1348 = vpop.permute.xlu0 %1347
      %1349 = vrot.lane.b32.xlu0 %v1272, 20
      %v1350 = vpop.permute.xlu0 %1349
      %1351 = vrot.lane.b32.xlu0 %v1273, 20
      %v1352 = vpop.permute.xlu0 %1351
      %1353 = vrot.lane.b32.xlu0 %v1274, 20
      %v1354 = vpop.permute.xlu0 %1353
      %1355 = vrot.lane.b32.xlu0 %v1275, 20
      %v1356 = vpop.permute.xlu0 %1355
      %1357 = vrot.lane.b32.xlu0 %v1276, 20
      %v1358 = vpop.permute.xlu0 %1357
      %1359 = vrot.lane.b32.xlu0 %v1277, 20
      %v1360 = vpop.permute.xlu0 %1359
      %1361 = vrot.lane.b32.xlu0 %v1278, 20
      %v1362 = vpop.permute.xlu0 %1361
      %1363 = vrot.lane.b32.xlu0 %v1279, 20
      %v1364 = vpop.permute.xlu0 %1363
      %1365 = vrot.lane.b32.xlu0 %v1280, 20
      %v1366 = vpop.permute.xlu0 %1365
      %1367 = vrot.lane.b32.xlu0 %v1281, 20
      %v1368 = vpop.permute.xlu0 %1367
      %1369 = vrot.lane.b32.xlu0 %v1282, 20
      %v1370 = vpop.permute.xlu0 %1369
      %1371 = vrot.lane.b32.xlu0 %v1283, 20
      %v1372 = vpop.permute.xlu0 %1371
      %1373 = vrot.lane.b32.xlu0 %v1284, 20
      %v1374 = vpop.permute.xlu0 %1373
      %1375 = vrot.lane.b32.xlu0 %v1285, 20
      %v1376 = vpop.permute.xlu0 %1375
      %1377 = vrot.lane.b32.xlu0 %v1286, 20
      %v1378 = vpop.permute.xlu0 %1377
      %1379 = vrot.lane.b32.xlu0 %v1287, 20
      %v1380 = vpop.permute.xlu0 %1379
      %1381 = vrot.lane.b32.xlu0 %v1288, 20
      %v1382 = vpop.permute.xlu0 %1381
      %1383 = vrot.lane.b32.xlu0 %v1289, 20
      %v1384 = vpop.permute.xlu0 %1383
      %1385 = vrot.lane.b32.xlu0 %v1290, 20
      %v1386 = vpop.permute.xlu0 %1385
      %vm1419 = vcmask 195744
      %1420 = vst.msk [vmem:[#allocation3] sm:$0xff] %vm1419, %v1324
      %1421 = vst.msk [vmem:[#allocation3 + $0x8] sm:$0xff] %vm1419, %v1326
      %1422 = vst.msk [vmem:[#allocation3 + $0x10] sm:$0xff] %vm1419, %v1328
      %1423 = vst.msk [vmem:[#allocation3 + $0x18] sm:$0xff] %vm1419, %v1330
      %1424 = vst.msk [vmem:[#allocation3 + $0x20] sm:$0xff] %vm1419, %v1332
      %1425 = vst.msk [vmem:[#allocation3 + $0x28] sm:$0xff] %vm1419, %v1334
      %1426 = vst.msk [vmem:[#allocation3 + $0x30] sm:$0xff] %vm1419, %v1336
      %1427 = vst.msk [vmem:[#allocation3 + $0x38] sm:$0xff] %vm1419, %v1338
      %1428 = vst.msk [vmem:[#allocation3 + $0x40] sm:$0xff] %vm1419, %v1340
      %1429 = vst.msk [vmem:[#allocation3 + $0x48] sm:$0xff] %vm1419, %v1342
      %1430 = vst.msk [vmem:[#allocation3 + $0x50] sm:$0xff] %vm1419, %v1344
      %1431 = vst.msk [vmem:[#allocation3 + $0x58] sm:$0xff] %vm1419, %v1346
      %1432 = vst.msk [vmem:[#allocation3 + $0x60] sm:$0xff] %vm1419, %v1348
      %1433 = vst.msk [vmem:[#allocation3 + $0x68] sm:$0xff] %vm1419, %v1350
      %1434 = vst.msk [vmem:[#allocation3 + $0x70] sm:$0xff] %vm1419, %v1352
      %1435 = vst.msk [vmem:[#allocation3 + $0x78] sm:$0xff] %vm1419, %v1354
      %1436 = vst.msk [vmem:[#allocation3 + $0x80] sm:$0xff] %vm1419, %v1356
      %1437 = vst.msk [vmem:[#allocation3 + $0x88] sm:$0xff] %vm1419, %v1358
      %1438 = vst.msk [vmem:[#allocation3 + $0x90] sm:$0xff] %vm1419, %v1360
      %1439 = vst.msk [vmem:[#allocation3 + $0x98] sm:$0xff] %vm1419, %v1362
      %1440 = vst.msk [vmem:[#allocation3 + $0xa0] sm:$0xff] %vm1419, %v1364
      %1441 = vst.msk [vmem:[#allocation3 + $0xa8] sm:$0xff] %vm1419, %v1366
      %1442 = vst.msk [vmem:[#allocation3 + $0xb0] sm:$0xff] %vm1419, %v1368
      %1443 = vst.msk [vmem:[#allocation3 + $0xb8] sm:$0xff] %vm1419, %v1370
      %1444 = vst.msk [vmem:[#allocation3 + $0xc0] sm:$0xff] %vm1419, %v1372
      %1445 = vst.msk [vmem:[#allocation3 + $0xc8] sm:$0xff] %vm1419, %v1374
      %1446 = vst.msk [vmem:[#allocation3 + $0xd0] sm:$0xff] %vm1419, %v1376
      %1447 = vst.msk [vmem:[#allocation3 + $0xd8] sm:$0xff] %vm1419, %v1378
      %1448 = vst.msk [vmem:[#allocation3 + $0xe0] sm:$0xff] %vm1419, %v1380
      %1449 = vst.msk [vmem:[#allocation3 + $0xe8] sm:$0xff] %vm1419, %v1382
      %1450 = vst.msk [vmem:[#allocation3 + $0xf0] sm:$0xff] %vm1419, %v1384
      %1451 = vst.msk [vmem:[#allocation3 + $0xf8] sm:$0xff] %vm1419, %v1386
      %s1452 = scalar_lea.vmem [#allocation2], 48
      %v1453 = vld [vmem:[%s1452] sm:$0xff]
      %v1454 = vld [vmem:[%s1452 + $0x8] sm:$0xff]
      %v1455 = vld [vmem:[%s1452 + $0x18] sm:$0xff]
      %v1456 = vld [vmem:[%s1452 + $0x20] sm:$0xff]
      %v1457 = vld [vmem:[%s1452 + $0x30] sm:$0xff]
      %v1458 = vld [vmem:[%s1452 + $0x38] sm:$0xff]
      %v1459 = vld [vmem:[%s1452 + $0x48] sm:$0xff]
      %v1460 = vld [vmem:[%s1452 + $0x50] sm:$0xff]
      %v1461 = vld [vmem:[%s1452 + $0x60] sm:$0xff]
      %v1462 = vld [vmem:[%s1452 + $0x68] sm:$0xff]
      %v1463 = vld [vmem:[%s1452 + $0x78] sm:$0xff]
      %v1464 = vld [vmem:[%s1452 + $0x80] sm:$0xff]
      %v1465 = vld [vmem:[%s1452 + $0x90] sm:$0xff]
      %v1466 = vld [vmem:[%s1452 + $0x98] sm:$0xff]
      %v1467 = vld [vmem:[%s1452 + $0xa8] sm:$0xff]
      %v1468 = vld [vmem:[%s1452 + $0xb0] sm:$0xff]
      %v1469 = vld [vmem:[%s1452 + $0xc0] sm:$0xff]
      %v1470 = vld [vmem:[%s1452 + $0xc8] sm:$0xff]
      %v1471 = vld [vmem:[%s1452 + $0xd8] sm:$0xff]
      %v1472 = vld [vmem:[%s1452 + $0xe0] sm:$0xff]
      %v1473 = vld [vmem:[%s1452 + $0xf0] sm:$0xff]
      %v1474 = vld [vmem:[%s1452 + $0xf8] sm:$0xff]
      %v1475 = vld [vmem:[%s1452 + $0x108] sm:$0xff]
      %v1476 = vld [vmem:[%s1452 + $0x110] sm:$0xff]
      %v1477 = vld [vmem:[%s1452 + $0x120] sm:$0xff]
      %v1478 = vld [vmem:[%s1452 + $0x128] sm:$0xff]
      %v1479 = vld [vmem:[%s1452 + $0x138] sm:$0xff]
      %v1480 = vld [vmem:[%s1452 + $0x140] sm:$0xff]
      %v1481 = vld [vmem:[%s1452 + $0x150] sm:$0xff]
      %v1482 = vld [vmem:[%s1452 + $0x158] sm:$0xff]
      %v1483 = vld [vmem:[%s1452 + $0x168] sm:$0xff]
      %v1484 = vld [vmem:[%s1452 + $0x170] sm:$0xff]
      %1517 = vrot.lane.b32.xlu0 %v1453, 24
      %v1518 = vpop.permute.xlu0 %1517
      %1519 = vrot.lane.b32.xlu0 %v1454, 24
      %v1520 = vpop.permute.xlu0 %1519
      %1521 = vrot.lane.b32.xlu0 %v1455, 24
      %v1522 = vpop.permute.xlu0 %1521
      %1523 = vrot.lane.b32.xlu0 %v1456, 24
      %v1524 = vpop.permute.xlu0 %1523
      %1525 = vrot.lane.b32.xlu0 %v1457, 24
      %v1526 = vpop.permute.xlu0 %1525
      %1527 = vrot.lane.b32.xlu0 %v1458, 24
      %v1528 = vpop.permute.xlu0 %1527
      %1529 = vrot.lane.b32.xlu0 %v1459, 24
      %v1530 = vpop.permute.xlu0 %1529
      %1531 = vrot.lane.b32.xlu0 %v1460, 24
      %v1532 = vpop.permute.xlu0 %1531
      %1533 = vrot.lane.b32.xlu0 %v1461, 24
      %v1534 = vpop.permute.xlu0 %1533
      %1535 = vrot.lane.b32.xlu0 %v1462, 24
      %v1536 = vpop.permute.xlu0 %1535
      %1537 = vrot.lane.b32.xlu0 %v1463, 24
      %v1538 = vpop.permute.xlu0 %1537
      %1539 = vrot.lane.b32.xlu0 %v1464, 24
      %v1540 = vpop.permute.xlu0 %1539
      %1541 = vrot.lane.b32.xlu0 %v1465, 24
      %v1542 = vpop.permute.xlu0 %1541
      %1543 = vrot.lane.b32.xlu0 %v1466, 24
      %v1544 = vpop.permute.xlu0 %1543
      %1545 = vrot.lane.b32.xlu0 %v1467, 24
      %v1546 = vpop.permute.xlu0 %1545
      %1547 = vrot.lane.b32.xlu0 %v1468, 24
      %v1548 = vpop.permute.xlu0 %1547
      %1549 = vrot.lane.b32.xlu0 %v1469, 24
      %v1550 = vpop.permute.xlu0 %1549
      %1551 = vrot.lane.b32.xlu0 %v1470, 24
      %v1552 = vpop.permute.xlu0 %1551
      %1553 = vrot.lane.b32.xlu0 %v1471, 24
      %v1554 = vpop.permute.xlu0 %1553
      %1555 = vrot.lane.b32.xlu0 %v1472, 24
      %v1556 = vpop.permute.xlu0 %1555
      %1557 = vrot.lane.b32.xlu0 %v1473, 24
      %v1558 = vpop.permute.xlu0 %1557
      %1559 = vrot.lane.b32.xlu0 %v1474, 24
      %v1560 = vpop.permute.xlu0 %1559
      %1561 = vrot.lane.b32.xlu0 %v1475, 24
      %v1562 = vpop.permute.xlu0 %1561
      %1563 = vrot.lane.b32.xlu0 %v1476, 24
      %v1564 = vpop.permute.xlu0 %1563
      %1565 = vrot.lane.b32.xlu0 %v1477, 24
      %v1566 = vpop.permute.xlu0 %1565
      %1567 = vrot.lane.b32.xlu0 %v1478, 24
      %v1568 = vpop.permute.xlu0 %1567
      %1569 = vrot.lane.b32.xlu0 %v1479, 24
      %v1570 = vpop.permute.xlu0 %1569
      %1571 = vrot.lane.b32.xlu0 %v1480, 24
      %v1572 = vpop.permute.xlu0 %1571
      %1573 = vrot.lane.b32.xlu0 %v1481, 24
      %v1574 = vpop.permute.xlu0 %1573
      %1575 = vrot.lane.b32.xlu0 %v1482, 24
      %v1576 = vpop.permute.xlu0 %1575
      %1577 = vrot.lane.b32.xlu0 %v1483, 24
      %v1578 = vpop.permute.xlu0 %1577
      %1579 = vrot.lane.b32.xlu0 %v1484, 24
      %v1580 = vpop.permute.xlu0 %1579
      %vm1613 = vcmask 228544
      %1614 = vst.msk [vmem:[#allocation3] sm:$0xff] %vm1613, %v1518
      %1615 = vst.msk [vmem:[#allocation3 + $0x8] sm:$0xff] %vm1613, %v1520
      %1616 = vst.msk [vmem:[#allocation3 + $0x10] sm:$0xff] %vm1613, %v1522
      %1617 = vst.msk [vmem:[#allocation3 + $0x18] sm:$0xff] %vm1613, %v1524
      %1618 = vst.msk [vmem:[#allocation3 + $0x20] sm:$0xff] %vm1613, %v1526
      %1619 = vst.msk [vmem:[#allocation3 + $0x28] sm:$0xff] %vm1613, %v1528
      %1620 = vst.msk [vmem:[#allocation3 + $0x30] sm:$0xff] %vm1613, %v1530
      %1621 = vst.msk [vmem:[#allocation3 + $0x38] sm:$0xff] %vm1613, %v1532
      %1622 = vst.msk [vmem:[#allocation3 + $0x40] sm:$0xff] %vm1613, %v1534
      %1623 = vst.msk [vmem:[#allocation3 + $0x48] sm:$0xff] %vm1613, %v1536
      %1624 = vst.msk [vmem:[#allocation3 + $0x50] sm:$0xff] %vm1613, %v1538
      %1625 = vst.msk [vmem:[#allocation3 + $0x58] sm:$0xff] %vm1613, %v1540
      %1626 = vst.msk [vmem:[#allocation3 + $0x60] sm:$0xff] %vm1613, %v1542
      %1627 = vst.msk [vmem:[#allocation3 + $0x68] sm:$0xff] %vm1613, %v1544
      %1628 = vst.msk [vmem:[#allocation3 + $0x70] sm:$0xff] %vm1613, %v1546
      %1629 = vst.msk [vmem:[#allocation3 + $0x78] sm:$0xff] %vm1613, %v1548
      %1630 = vst.msk [vmem:[#allocation3 + $0x80] sm:$0xff] %vm1613, %v1550
      %1631 = vst.msk [vmem:[#allocation3 + $0x88] sm:$0xff] %vm1613, %v1552
      %1632 = vst.msk [vmem:[#allocation3 + $0x90] sm:$0xff] %vm1613, %v1554
      %1633 = vst.msk [vmem:[#allocation3 + $0x98] sm:$0xff] %vm1613, %v1556
      %1634 = vst.msk [vmem:[#allocation3 + $0xa0] sm:$0xff] %vm1613, %v1558
      %1635 = vst.msk [vmem:[#allocation3 + $0xa8] sm:$0xff] %vm1613, %v1560
      %1636 = vst.msk [vmem:[#allocation3 + $0xb0] sm:$0xff] %vm1613, %v1562
      %1637 = vst.msk [vmem:[#allocation3 + $0xb8] sm:$0xff] %vm1613, %v1564
      %1638 = vst.msk [vmem:[#allocation3 + $0xc0] sm:$0xff] %vm1613, %v1566
      %1639 = vst.msk [vmem:[#allocation3 + $0xc8] sm:$0xff] %vm1613, %v1568
      %1640 = vst.msk [vmem:[#allocation3 + $0xd0] sm:$0xff] %vm1613, %v1570
      %1641 = vst.msk [vmem:[#allocation3 + $0xd8] sm:$0xff] %vm1613, %v1572
      %1642 = vst.msk [vmem:[#allocation3 + $0xe0] sm:$0xff] %vm1613, %v1574
      %1643 = vst.msk [vmem:[#allocation3 + $0xe8] sm:$0xff] %vm1613, %v1576
      %1644 = vst.msk [vmem:[#allocation3 + $0xf0] sm:$0xff] %vm1613, %v1578
      %1645 = vst.msk [vmem:[#allocation3 + $0xf8] sm:$0xff] %vm1613, %v1580
      %v1646 = vld [vmem:[%s1452 + $0x1] sm:$0xff]
      %v1647 = vld [vmem:[%s1452 + $0x9] sm:$0xff]
      %v1648 = vld [vmem:[%s1452 + $0x19] sm:$0xff]
      %v1649 = vld [vmem:[%s1452 + $0x21] sm:$0xff]
      %v1650 = vld [vmem:[%s1452 + $0x31] sm:$0xff]
      %v1651 = vld [vmem:[%s1452 + $0x39] sm:$0xff]
      %v1652 = vld [vmem:[%s1452 + $0x49] sm:$0xff]
      %v1653 = vld [vmem:[%s1452 + $0x51] sm:$0xff]
      %v1654 = vld [vmem:[%s1452 + $0x61] sm:$0xff]
      %v1655 = vld [vmem:[%s1452 + $0x69] sm:$0xff]
      %v1656 = vld [vmem:[%s1452 + $0x79] sm:$0xff]
      %v1657 = vld [vmem:[%s1452 + $0x81] sm:$0xff]
      %v1658 = vld [vmem:[%s1452 + $0x91] sm:$0xff]
      %v1659 = vld [vmem:[%s1452 + $0x99] sm:$0xff]
      %v1660 = vld [vmem:[%s1452 + $0xa9] sm:$0xff]
      %v1661 = vld [vmem:[%s1452 + $0xb1] sm:$0xff]
      %v1662 = vld [vmem:[%s1452 + $0xc1] sm:$0xff]
      %v1663 = vld [vmem:[%s1452 + $0xc9] sm:$0xff]
      %v1664 = vld [vmem:[%s1452 + $0xd9] sm:$0xff]
      %v1665 = vld [vmem:[%s1452 + $0xe1] sm:$0xff]
      %v1666 = vld [vmem:[%s1452 + $0xf1] sm:$0xff]
      %v1667 = vld [vmem:[%s1452 + $0xf9] sm:$0xff]
      %v1668 = vld [vmem:[%s1452 + $0x109] sm:$0xff]
      %v1669 = vld [vmem:[%s1452 + $0x111] sm:$0xff]
      %v1670 = vld [vmem:[%s1452 + $0x121] sm:$0xff]
      %v1671 = vld [vmem:[%s1452 + $0x129] sm:$0xff]
      %v1672 = vld [vmem:[%s1452 + $0x139] sm:$0xff]
      %v1673 = vld [vmem:[%s1452 + $0x141] sm:$0xff]
      %v1674 = vld [vmem:[%s1452 + $0x151] sm:$0xff]
      %v1675 = vld [vmem:[%s1452 + $0x159] sm:$0xff]
      %v1676 = vld [vmem:[%s1452 + $0x169] sm:$0xff]
      %v1677 = vld [vmem:[%s1452 + $0x171] sm:$0xff]
      %1710 = vrot.lane.b32.xlu0 %v1646, 28
      %v1711 = vpop.permute.xlu0 %1710
      %1712 = vrot.lane.b32.xlu0 %v1647, 28
      %v1713 = vpop.permute.xlu0 %1712
      %1714 = vrot.lane.b32.xlu0 %v1648, 28
      %v1715 = vpop.permute.xlu0 %1714
      %1716 = vrot.lane.b32.xlu0 %v1649, 28
      %v1717 = vpop.permute.xlu0 %1716
      %1718 = vrot.lane.b32.xlu0 %v1650, 28
      %v1719 = vpop.permute.xlu0 %1718
      %1720 = vrot.lane.b32.xlu0 %v1651, 28
      %v1721 = vpop.permute.xlu0 %1720
      %1722 = vrot.lane.b32.xlu0 %v1652, 28
      %v1723 = vpop.permute.xlu0 %1722
      %1724 = vrot.lane.b32.xlu0 %v1653, 28
      %v1725 = vpop.permute.xlu0 %1724
      %1726 = vrot.lane.b32.xlu0 %v1654, 28
      %v1727 = vpop.permute.xlu0 %1726
      %1728 = vrot.lane.b32.xlu0 %v1655, 28
      %v1729 = vpop.permute.xlu0 %1728
      %1730 = vrot.lane.b32.xlu0 %v1656, 28
      %v1731 = vpop.permute.xlu0 %1730
      %1732 = vrot.lane.b32.xlu0 %v1657, 28
      %v1733 = vpop.permute.xlu0 %1732
      %1734 = vrot.lane.b32.xlu0 %v1658, 28
      %v1735 = vpop.permute.xlu0 %1734
      %1736 = vrot.lane.b32.xlu0 %v1659, 28
      %v1737 = vpop.permute.xlu0 %1736
      %1738 = vrot.lane.b32.xlu0 %v1660, 28
      %v1739 = vpop.permute.xlu0 %1738
      %1740 = vrot.lane.b32.xlu0 %v1661, 28
      %v1741 = vpop.permute.xlu0 %1740
      %1742 = vrot.lane.b32.xlu0 %v1662, 28
      %v1743 = vpop.permute.xlu0 %1742
      %1744 = vrot.lane.b32.xlu0 %v1663, 28
      %v1745 = vpop.permute.xlu0 %1744
      %1746 = vrot.lane.b32.xlu0 %v1664, 28
      %v1747 = vpop.permute.xlu0 %1746
      %1748 = vrot.lane.b32.xlu0 %v1665, 28
      %v1749 = vpop.permute.xlu0 %1748
      %1750 = vrot.lane.b32.xlu0 %v1666, 28
      %v1751 = vpop.permute.xlu0 %1750
      %1752 = vrot.lane.b32.xlu0 %v1667, 28
      %v1753 = vpop.permute.xlu0 %1752
      %1754 = vrot.lane.b32.xlu0 %v1668, 28
      %v1755 = vpop.permute.xlu0 %1754
      %1756 = vrot.lane.b32.xlu0 %v1669, 28
      %v1757 = vpop.permute.xlu0 %1756
      %1758 = vrot.lane.b32.xlu0 %v1670, 28
      %v1759 = vpop.permute.xlu0 %1758
      %1760 = vrot.lane.b32.xlu0 %v1671, 28
      %v1761 = vpop.permute.xlu0 %1760
      %1762 = vrot.lane.b32.xlu0 %v1672, 28
      %v1763 = vpop.permute.xlu0 %1762
      %1764 = vrot.lane.b32.xlu0 %v1673, 28
      %v1765 = vpop.permute.xlu0 %1764
      %1766 = vrot.lane.b32.xlu0 %v1674, 28
      %v1767 = vpop.permute.xlu0 %1766
      %1768 = vrot.lane.b32.xlu0 %v1675, 28
      %v1769 = vpop.permute.xlu0 %1768
      %1770 = vrot.lane.b32.xlu0 %v1676, 28
      %v1771 = vpop.permute.xlu0 %1770
      %1772 = vrot.lane.b32.xlu0 %v1677, 28
      %v1773 = vpop.permute.xlu0 %1772
      %vm1806 = vcmask 261344
      %1807 = vst.msk [vmem:[#allocation3] sm:$0xff] %vm1806, %v1711
      %1808 = vst.msk [vmem:[#allocation3 + $0x8] sm:$0xff] %vm1806, %v1713
      %1809 = vst.msk [vmem:[#allocation3 + $0x10] sm:$0xff] %vm1806, %v1715
      %1810 = vst.msk [vmem:[#allocation3 + $0x18] sm:$0xff] %vm1806, %v1717
      %1811 = vst.msk [vmem:[#allocation3 + $0x20] sm:$0xff] %vm1806, %v1719
      %1812 = vst.msk [vmem:[#allocation3 + $0x28] sm:$0xff] %vm1806, %v1721
      %1813 = vst.msk [vmem:[#allocation3 + $0x30] sm:$0xff] %vm1806, %v1723
      %1814 = vst.msk [vmem:[#allocation3 + $0x38] sm:$0xff] %vm1806, %v1725
      %1815 = vst.msk [vmem:[#allocation3 + $0x40] sm:$0xff] %vm1806, %v1727
      %1816 = vst.msk [vmem:[#allocation3 + $0x48] sm:$0xff] %vm1806, %v1729
      %1817 = vst.msk [vmem:[#allocation3 + $0x50] sm:$0xff] %vm1806, %v1731
      %1818 = vst.msk [vmem:[#allocation3 + $0x58] sm:$0xff] %vm1806, %v1733
      %1819 = vst.msk [vmem:[#allocation3 + $0x60] sm:$0xff] %vm1806, %v1735
      %1820 = vst.msk [vmem:[#allocation3 + $0x68] sm:$0xff] %vm1806, %v1737
      %1821 = vst.msk [vmem:[#allocation3 + $0x70] sm:$0xff] %vm1806, %v1739
      %1822 = vst.msk [vmem:[#allocation3 + $0x78] sm:$0xff] %vm1806, %v1741
      %1823 = vst.msk [vmem:[#allocation3 + $0x80] sm:$0xff] %vm1806, %v1743
      %1824 = vst.msk [vmem:[#allocation3 + $0x88] sm:$0xff] %vm1806, %v1745
      %1825 = vst.msk [vmem:[#allocation3 + $0x90] sm:$0xff] %vm1806, %v1747
      %1826 = vst.msk [vmem:[#allocation3 + $0x98] sm:$0xff] %vm1806, %v1749
      %1827 = vst.msk [vmem:[#allocation3 + $0xa0] sm:$0xff] %vm1806, %v1751
      %1828 = vst.msk [vmem:[#allocation3 + $0xa8] sm:$0xff] %vm1806, %v1753
      %1829 = vst.msk [vmem:[#allocation3 + $0xb0] sm:$0xff] %vm1806, %v1755
      %1830 = vst.msk [vmem:[#allocation3 + $0xb8] sm:$0xff] %vm1806, %v1757
      %1831 = vst.msk [vmem:[#allocation3 + $0xc0] sm:$0xff] %vm1806, %v1759
      %1832 = vst.msk [vmem:[#allocation3 + $0xc8] sm:$0xff] %vm1806, %v1761
      %1833 = vst.msk [vmem:[#allocation3 + $0xd0] sm:$0xff] %vm1806, %v1763
      %1834 = vst.msk [vmem:[#allocation3 + $0xd8] sm:$0xff] %vm1806, %v1765
      %1835 = vst.msk [vmem:[#allocation3 + $0xe0] sm:$0xff] %vm1806, %v1767
      %1836 = vst.msk [vmem:[#allocation3 + $0xe8] sm:$0xff] %vm1806, %v1769
      %1837 = vst.msk [vmem:[#allocation3 + $0xf0] sm:$0xff] %vm1806, %v1771
      %1838 = vst.msk [vmem:[#allocation3 + $0xf8] sm:$0xff] %vm1806, %v1773
      %v1839 = vld [vmem:[%s1452 + $0x2] sm:$0xff]
      %v1840 = vld [vmem:[%s1452 + $0xa] sm:$0xff]
      %v1841 = vld [vmem:[%s1452 + $0x1a] sm:$0xff]
      %v1842 = vld [vmem:[%s1452 + $0x22] sm:$0xff]
      %v1843 = vld [vmem:[%s1452 + $0x32] sm:$0xff]
      %v1844 = vld [vmem:[%s1452 + $0x3a] sm:$0xff]
      %v1845 = vld [vmem:[%s1452 + $0x4a] sm:$0xff]
      %v1846 = vld [vmem:[%s1452 + $0x52] sm:$0xff]
      %v1847 = vld [vmem:[%s1452 + $0x62] sm:$0xff]
      %v1848 = vld [vmem:[%s1452 + $0x6a] sm:$0xff]
      %v1849 = vld [vmem:[%s1452 + $0x7a] sm:$0xff]
      %v1850 = vld [vmem:[%s1452 + $0x82] sm:$0xff]
      %v1851 = vld [vmem:[%s1452 + $0x92] sm:$0xff]
      %v1852 = vld [vmem:[%s1452 + $0x9a] sm:$0xff]
      %v1853 = vld [vmem:[%s1452 + $0xaa] sm:$0xff]
      %v1854 = vld [vmem:[%s1452 + $0xb2] sm:$0xff]
      %v1855 = vld [vmem:[%s1452 + $0xc2] sm:$0xff]
      %v1856 = vld [vmem:[%s1452 + $0xca] sm:$0xff]
      %v1857 = vld [vmem:[%s1452 + $0xda] sm:$0xff]
      %v1858 = vld [vmem:[%s1452 + $0xe2] sm:$0xff]
      %v1859 = vld [vmem:[%s1452 + $0xf2] sm:$0xff]
      %v1860 = vld [vmem:[%s1452 + $0xfa] sm:$0xff]
      %v1861 = vld [vmem:[%s1452 + $0x10a] sm:$0xff]
      %v1862 = vld [vmem:[%s1452 + $0x112] sm:$0xff]
      %v1863 = vld [vmem:[%s1452 + $0x122] sm:$0xff]
      %v1864 = vld [vmem:[%s1452 + $0x12a] sm:$0xff]
      %v1865 = vld [vmem:[%s1452 + $0x13a] sm:$0xff]
      %v1866 = vld [vmem:[%s1452 + $0x142] sm:$0xff]
      %v1867 = vld [vmem:[%s1452 + $0x152] sm:$0xff]
      %v1868 = vld [vmem:[%s1452 + $0x15a] sm:$0xff]
      %v1869 = vld [vmem:[%s1452 + $0x16a] sm:$0xff]
      %v1870 = vld [vmem:[%s1452 + $0x172] sm:$0xff]
      %1903 = vrot.lane.b32.xlu0 %v1839, 32
      %v1904 = vpop.permute.xlu0 %1903
      %1905 = vrot.lane.b32.xlu0 %v1840, 32
      %v1906 = vpop.permute.xlu0 %1905
      %1907 = vrot.lane.b32.xlu0 %v1841, 32
      %v1908 = vpop.permute.xlu0 %1907
      %1909 = vrot.lane.b32.xlu0 %v1842, 32
      %v1910 = vpop.permute.xlu0 %1909
      %1911 = vrot.lane.b32.xlu0 %v1843, 32
      %v1912 = vpop.permute.xlu0 %1911
      %1913 = vrot.lane.b32.xlu0 %v1844, 32
      %v1914 = vpop.permute.xlu0 %1913
      %1915 = vrot.lane.b32.xlu0 %v1845, 32
      %v1916 = vpop.permute.xlu0 %1915
      %1917 = vrot.lane.b32.xlu0 %v1846, 32
      %v1918 = vpop.permute.xlu0 %1917
      %1919 = vrot.lane.b32.xlu0 %v1847, 32
      %v1920 = vpop.permute.xlu0 %1919
      %1921 = vrot.lane.b32.xlu0 %v1848, 32
      %v1922 = vpop.permute.xlu0 %1921
      %1923 = vrot.lane.b32.xlu0 %v1849, 32
      %v1924 = vpop.permute.xlu0 %1923
      %1925 = vrot.lane.b32.xlu0 %v1850, 32
      %v1926 = vpop.permute.xlu0 %1925
      %1927 = vrot.lane.b32.xlu0 %v1851, 32
      %v1928 = vpop.permute.xlu0 %1927
      %1929 = vrot.lane.b32.xlu0 %v1852, 32
      %v1930 = vpop.permute.xlu0 %1929
      %1931 = vrot.lane.b32.xlu0 %v1853, 32
      %v1932 = vpop.permute.xlu0 %1931
      %1933 = vrot.lane.b32.xlu0 %v1854, 32
      %v1934 = vpop.permute.xlu0 %1933
      %1935 = vrot.lane.b32.xlu0 %v1855, 32
      %v1936 = vpop.permute.xlu0 %1935
      %1937 = vrot.lane.b32.xlu0 %v1856, 32
      %v1938 = vpop.permute.xlu0 %1937
      %1939 = vrot.lane.b32.xlu0 %v1857, 32
      %v1940 = vpop.permute.xlu0 %1939
      %1941 = vrot.lane.b32.xlu0 %v1858, 32
      %v1942 = vpop.permute.xlu0 %1941
      %1943 = vrot.lane.b32.xlu0 %v1859, 32
      %v1944 = vpop.permute.xlu0 %1943
      %1945 = vrot.lane.b32.xlu0 %v1860, 32
      %v1946 = vpop.permute.xlu0 %1945
      %1947 = vrot.lane.b32.xlu0 %v1861, 32
      %v1948 = vpop.permute.xlu0 %1947
      %1949 = vrot.lane.b32.xlu0 %v1862, 32
      %v1950 = vpop.permute.xlu0 %1949
      %1951 = vrot.lane.b32.xlu0 %v1863, 32
      %v1952 = vpop.permute.xlu0 %1951
      %1953 = vrot.lane.b32.xlu0 %v1864, 32
      %v1954 = vpop.permute.xlu0 %1953
      %1955 = vrot.lane.b32.xlu0 %v1865, 32
      %v1956 = vpop.permute.xlu0 %1955
      %1957 = vrot.lane.b32.xlu0 %v1866, 32
      %v1958 = vpop.permute.xlu0 %1957
      %1959 = vrot.lane.b32.xlu0 %v1867, 32
      %v1960 = vpop.permute.xlu0 %1959
      %1961 = vrot.lane.b32.xlu0 %v1868, 32
      %v1962 = vpop.permute.xlu0 %1961
      %1963 = vrot.lane.b32.xlu0 %v1869, 32
      %v1964 = vpop.permute.xlu0 %1963
      %1965 = vrot.lane.b32.xlu0 %v1870, 32
      %v1966 = vpop.permute.xlu0 %1965
      %vm1999 = vcmask 294144
      %2000 = vst.msk [vmem:[#allocation3] sm:$0xff] %vm1999, %v1904
      %2001 = vst.msk [vmem:[#allocation3 + $0x8] sm:$0xff] %vm1999, %v1906
      %2002 = vst.msk [vmem:[#allocation3 + $0x10] sm:$0xff] %vm1999, %v1908
      %2003 = vst.msk [vmem:[#allocation3 + $0x18] sm:$0xff] %vm1999, %v1910
      %2004 = vst.msk [vmem:[#allocation3 + $0x20] sm:$0xff] %vm1999, %v1912
      %2005 = vst.msk [vmem:[#allocation3 + $0x28] sm:$0xff] %vm1999, %v1914
      %2006 = vst.msk [vmem:[#allocation3 + $0x30] sm:$0xff] %vm1999, %v1916
      %2007 = vst.msk [vmem:[#allocation3 + $0x38] sm:$0xff] %vm1999, %v1918
      %2008 = vst.msk [vmem:[#allocation3 + $0x40] sm:$0xff] %vm1999, %v1920
      %2009 = vst.msk [vmem:[#allocation3 + $0x48] sm:$0xff] %vm1999, %v1922
      %2010 = vst.msk [vmem:[#allocation3 + $0x50] sm:$0xff] %vm1999, %v1924
      %2011 = vst.msk [vmem:[#allocation3 + $0x58] sm:$0xff] %vm1999, %v1926
      %2012 = vst.msk [vmem:[#allocation3 + $0x60] sm:$0xff] %vm1999, %v1928
      %2013 = vst.msk [vmem:[#allocation3 + $0x68] sm:$0xff] %vm1999, %v1930
      %2014 = vst.msk [vmem:[#allocation3 + $0x70] sm:$0xff] %vm1999, %v1932
      %2015 = vst.msk [vmem:[#allocation3 + $0x78] sm:$0xff] %vm1999, %v1934
      %2016 = vst.msk [vmem:[#allocation3 + $0x80] sm:$0xff] %vm1999, %v1936
      %2017 = vst.msk [vmem:[#allocation3 + $0x88] sm:$0xff] %vm1999, %v1938
      %2018 = vst.msk [vmem:[#allocation3 + $0x90] sm:$0xff] %vm1999, %v1940
      %2019 = vst.msk [vmem:[#allocation3 + $0x98] sm:$0xff] %vm1999, %v1942
      %2020 = vst.msk [vmem:[#allocation3 + $0xa0] sm:$0xff] %vm1999, %v1944
      %2021 = vst.msk [vmem:[#allocation3 + $0xa8] sm:$0xff] %vm1999, %v1946
      %2022 = vst.msk [vmem:[#allocation3 + $0xb0] sm:$0xff] %vm1999, %v1948
      %2023 = vst.msk [vmem:[#allocation3 + $0xb8] sm:$0xff] %vm1999, %v1950
      %2024 = vst.msk [vmem:[#allocation3 + $0xc0] sm:$0xff] %vm1999, %v1952
      %2025 = vst.msk [vmem:[#allocation3 + $0xc8] sm:$0xff] %vm1999, %v1954
      %2026 = vst.msk [vmem:[#allocation3 + $0xd0] sm:$0xff] %vm1999, %v1956
      %2027 = vst.msk [vmem:[#allocation3 + $0xd8] sm:$0xff] %vm1999, %v1958
      %2028 = vst.msk [vmem:[#allocation3 + $0xe0] sm:$0xff] %vm1999, %v1960
      %2029 = vst.msk [vmem:[#allocation3 + $0xe8] sm:$0xff] %vm1999, %v1962
      %2030 = vst.msk [vmem:[#allocation3 + $0xf0] sm:$0xff] %vm1999, %v1964
      %2031 = vst.msk [vmem:[#allocation3 + $0xf8] sm:$0xff] %vm1999, %v1966
      %v2032 = vld [vmem:[#allocation3] sm:$0xff]
      %v2033 = vld [vmem:[#allocation3 + $0x8] sm:$0xff]
      %v2034 = vld [vmem:[#allocation3 + $0x10] sm:$0xff]
      %v2035 = vld [vmem:[#allocation3 + $0x18] sm:$0xff]
      %v2036 = vld [vmem:[#allocation3 + $0x20] sm:$0xff]
      %v2037 = vld [vmem:[#allocation3 + $0x28] sm:$0xff]
      %v2038 = vld [vmem:[#allocation3 + $0x30] sm:$0xff]
      %v2039 = vld [vmem:[#allocation3 + $0x38] sm:$0xff]
      %v2040 = vld [vmem:[#allocation3 + $0x40] sm:$0xff]
      %v2041 = vld [vmem:[#allocation3 + $0x48] sm:$0xff]
      %v2042 = vld [vmem:[#allocation3 + $0x50] sm:$0xff]
      %v2043 = vld [vmem:[#allocation3 + $0x58] sm:$0xff]
      %v2044 = vld [vmem:[#allocation3 + $0x60] sm:$0xff]
      %v2045 = vld [vmem:[#allocation3 + $0x68] sm:$0xff]
      %v2046 = vld [vmem:[#allocation3 + $0x70] sm:$0xff]
      %v2047 = vld [vmem:[#allocation3 + $0x78] sm:$0xff]
      %v2048 = vld [vmem:[#allocation3 + $0x80] sm:$0xff]
      %v2049 = vld [vmem:[#allocation3 + $0x88] sm:$0xff]
      %v2050 = vld [vmem:[#allocation3 + $0x90] sm:$0xff]
      %v2051 = vld [vmem:[#allocation3 + $0x98] sm:$0xff]
      %v2052 = vld [vmem:[#allocation3 + $0xa0] sm:$0xff]
      %v2053 = vld [vmem:[#allocation3 + $0xa8] sm:$0xff]
      %v2054 = vld [vmem:[#allocation3 + $0xb0] sm:$0xff]
      %v2055 = vld [vmem:[#allocation3 + $0xb8] sm:$0xff]
      %v2056 = vld [vmem:[#allocation3 + $0xc0] sm:$0xff]
      %v2057 = vld [vmem:[#allocation3 + $0xc8] sm:$0xff]
      %v2058 = vld [vmem:[#allocation3 + $0xd0] sm:$0xff]
      %v2059 = vld [vmem:[#allocation3 + $0xd8] sm:$0xff]
      %v2060 = vld [vmem:[#allocation3 + $0xe0] sm:$0xff]
      %v2061 = vld [vmem:[#allocation3 + $0xe8] sm:$0xff]
      %v2062 = vld [vmem:[#allocation3 + $0xf0] sm:$0xff]
      %v2063 = vld [vmem:[#allocation3 + $0xf8] sm:$0xff]
      %v2064 = vld [vmem:[%s1] sm:$0xff]
      %v2065 = vld [vmem:[%s1 + $0x8] sm:$0xff]
      %v2066 = vld [vmem:[%s1 + $0x10] sm:$0xff]
      %v2067 = vld [vmem:[%s1 + $0x18] sm:$0xff]
      %v2068 = vld [vmem:[%s1 + $0x20] sm:$0xf]
      %vm2069 = vcmask 293888
      %v2071 = vsel %vm2069, %v2032, 0
      %v2074 = vsel %vm2069, %v2033, 0
      %v2077 = vsel %vm2069, %v2034, 0
      %v2080 = vsel %vm2069, %v2035, 0
      %v2083 = vsel %vm2069, %v2036, 0
      %v2086 = vsel %vm2069, %v2037, 0
      %v2089 = vsel %vm2069, %v2038, 0
      %v2092 = vsel %vm2069, %v2039, 0
      %v2095 = vsel %vm2069, %v2040, 0
      %v2098 = vsel %vm2069, %v2041, 0
      %v2101 = vsel %vm2069, %v2042, 0
      %v2104 = vsel %vm2069, %v2043, 0
      %v2107 = vsel %vm2069, %v2044, 0
      %v2110 = vsel %vm2069, %v2045, 0
      %v2113 = vsel %vm2069, %v2046, 0
      %v2116 = vsel %vm2069, %v2047, 0
      %v2119 = vsel %vm2069, %v2048, 0
      %v2122 = vsel %vm2069, %v2049, 0
      %v2125 = vsel %vm2069, %v2050, 0
      %v2128 = vsel %vm2069, %v2051, 0
      %v2131 = vsel %vm2069, %v2052, 0
      %v2134 = vsel %vm2069, %v2053, 0
      %v2137 = vsel %vm2069, %v2054, 0
      %v2140 = vsel %vm2069, %v2055, 0
      %v2143 = vsel %vm2069, %v2056, 0
      %v2146 = vsel %vm2069, %v2057, 0
      %v2149 = vsel %vm2069, %v2058, 0
      %v2152 = vsel %vm2069, %v2059, 0
      %v2155 = vsel %vm2069, %v2060, 0
      %v2158 = vsel %vm2069, %v2061, 0
      %v2161 = vsel %vm2069, %v2062, 0
      %v2164 = vsel %vm2069, %v2063, 0
      %vm2166 = vcmask 1043456
      %v2168 = vsel %vm2166, %v2068, 0
      %2170 = vmatprep.subr.mxu0 0.0
      %2171 = vmatpush1.msra.mxu0 0.0
      %2172 = vmatprep.subr.mxu0 0.0
      %2173 = vmatpush1.msra.mxu0 0.0
      %2174 = vmatprep.subr.mxu0 0.0
      %2175 = vmatpush1.msra.mxu0 0.0
      %2176 = vmatprep.subr.mxu0 0.0
      %2177 = vmatpush1.msra.mxu0 0.0
      %2178 = vmatprep.subr.mxu0 0.0
      %2179 = vmatpush1.msra.mxu0 0.0
      %2180 = vmatprep.subr.mxu0 0.0
      %2181 = vmatpush1.msra.mxu0 0.0
      %2182 = vmatprep.subr.mxu0 0.0
      %2183 = vmatpush1.msra.mxu0 0.0
      %2184 = vmatprep.subr.mxu0 0.0
      %2185 = vmatpush1.msra.mxu0 0.0
      %2186 = vmatprep.subr.mxu0 0.0
      %2187 = vmatpush1.msra.mxu0 0.0
      %2188 = vmatprep.subr.mxu0 0.0
      %2189 = vmatpush1.msra.mxu0 0.0
      %2190 = vmatprep.subr.mxu0 0.0
      %2191 = vmatpush1.msra.mxu0 0.0
      %2192 = vmatprep.subr.mxu0 0.0
      %2193 = vmatpush1.msra.mxu0 %v2168
      %2194 = vmatprep.subr.mxu0 0.0
      %2195 = vmatpush1.msra.mxu0 %v2067
      %2196 = vmatprep.subr.mxu0 0.0
      %2197 = vmatpush1.msra.mxu0 %v2066
      %2198 = vmatprep.subr.mxu0 0.0
      %2199 = vmatpush1.msra.mxu0 %v2065
      %2200 = vmatprep.subr.mxu0 0.0
      %2201 = vmatpush1.msra.mxu0 %v2064
      %2202 = vmatprep.subr.mxu0 0.0
      %2203 = vmatpush2.msra.mxu0 0.0
      %2204 = vmatprep.subr.mxu0 0.0
      %2205 = vmatpush2.msra.mxu0 0.0
      %2206 = vmatprep.subr.mxu0 0.0
      %2207 = vmatpush2.msra.mxu0 0.0
      %2208 = vmatprep.subr.mxu0 0.0
      %2209 = vmatpush2.msra.mxu0 0.0
      %2210 = vmatprep.subr.mxu0 0.0
      %2211 = vmatpush2.msra.mxu0 0.0
      %2212 = vmatprep.subr.mxu0 0.0
      %2213 = vmatpush2.msra.mxu0 0.0
      %2214 = vmatprep.subr.mxu0 0.0
      %2215 = vmatpush2.msra.mxu0 0.0
      %2216 = vmatprep.subr.mxu0 0.0
      %2217 = vmatpush2.msra.mxu0 0.0
      %2218 = vmatprep.subr.mxu0 0.0
      %2219 = vmatpush2.msra.mxu0 0.0
      %2220 = vmatprep.subr.mxu0 0.0
      %2221 = vmatpush2.msra.mxu0 0.0
      %2222 = vmatprep.subr.mxu0 0.0
      %2223 = vmatpush2.msra.mxu0 0.0
      %2224 = vmatprep.subr.mxu0 0.0
      %2225 = vmatpush2.msra.mxu0 0.0
      %2226 = vmatprep.subr.mxu0 0.0
      %2227 = vmatpush2.msra.mxu0 0.0
      %2228 = vmatprep.subr.mxu0 0.0
      %2229 = vmatpush2.msra.mxu0 0.0
      %2230 = vmatprep.subr.mxu0 0.0
      %2231 = vmatpush2.msra.mxu0 0.0
      %2232 = vmatprep.subr.mxu0 0.0
      %2233 = vmatpush2.msra.mxu0 0.0
      %2234 = vmatprep.mubr.f32.mxu0 0.0
      %2235 = vmatmul.mubr.f32.gmra.mxu0 %v2071
      %v2236 = vpop.f32.mrf.mxu0
      %v2237 = vadd.f32 0.0, %v2236
      %v2238 = vpop.f32.mrf.mxu0
      %2239 = vmatprep.mubr.f32.mxu0 0.0
      %2240 = vmatmul.mubr.f32.gmra.mxu0 %v2074
      %v2241 = vpop.f32.mrf.mxu0
      %v2242 = vadd.f32 0.0, %v2241
      %v2243 = vpop.f32.mrf.mxu0
      %2244 = vmatprep.mubr.f32.mxu0 0.0
      %2245 = vmatmul.mubr.f32.gmra.mxu0 %v2077
      %v2246 = vpop.f32.mrf.mxu0
      %v2247 = vadd.f32 0.0, %v2246
      %v2248 = vpop.f32.mrf.mxu0
      %2249 = vmatprep.mubr.f32.mxu0 0.0
      %2250 = vmatmul.mubr.f32.gmra.mxu0 %v2080
      %v2251 = vpop.f32.mrf.mxu0
      %v2252 = vadd.f32 0.0, %v2251
      %v2253 = vpop.f32.mrf.mxu0
      %2254 = vmatprep.mubr.f32.mxu0 0.0
      %2255 = vmatmul.mubr.f32.gmra.mxu0 %v2083
      %v2256 = vpop.f32.mrf.mxu0
      %v2257 = vadd.f32 0.0, %v2256
      %v2258 = vpop.f32.mrf.mxu0
      %2259 = vmatprep.mubr.f32.mxu0 0.0
      %2260 = vmatmul.mubr.f32.gmra.mxu0 %v2086
      %v2261 = vpop.f32.mrf.mxu0
      %v2262 = vadd.f32 0.0, %v2261
      %v2263 = vpop.f32.mrf.mxu0
      %2264 = vmatprep.mubr.f32.mxu0 0.0
      %2265 = vmatmul.mubr.f32.gmra.mxu0 %v2089
      %v2266 = vpop.f32.mrf.mxu0
      %v2267 = vadd.f32 0.0, %v2266
      %v2268 = vpop.f32.mrf.mxu0
      %2269 = vmatprep.mubr.f32.mxu0 0.0
      %2270 = vmatmul.mubr.f32.gmra.mxu0 %v2092
      %v2271 = vpop.f32.mrf.mxu0
      %v2272 = vadd.f32 0.0, %v2271
      %v2273 = vpop.f32.mrf.mxu0
      %2274 = vmatprep.mubr.f32.mxu0 0.0
      %2275 = vmatmul.mubr.f32.gmra.mxu0 %v2095
      %v2276 = vpop.f32.mrf.mxu0
      %v2277 = vadd.f32 0.0, %v2276
      %v2278 = vpop.f32.mrf.mxu0
      %2279 = vmatprep.mubr.f32.mxu0 0.0
      %2280 = vmatmul.mubr.f32.gmra.mxu0 %v2098
      %v2281 = vpop.f32.mrf.mxu0
      %v2282 = vadd.f32 0.0, %v2281
      %v2283 = vpop.f32.mrf.mxu0
      %2284 = vmatprep.mubr.f32.mxu0 0.0
      %2285 = vmatmul.mubr.f32.gmra.mxu0 %v2101
      %v2286 = vpop.f32.mrf.mxu0
      %v2287 = vadd.f32 0.0, %v2286
      %v2288 = vpop.f32.mrf.mxu0
      %2289 = vmatprep.mubr.f32.mxu0 0.0
      %2290 = vmatmul.mubr.f32.gmra.mxu0 %v2104
      %v2291 = vpop.f32.mrf.mxu0
      %v2292 = vadd.f32 0.0, %v2291
      %v2293 = vpop.f32.mrf.mxu0
      %2294 = vmatprep.mubr.f32.mxu0 0.0
      %2295 = vmatmul.mubr.f32.gmra.mxu0 %v2107
      %v2296 = vpop.f32.mrf.mxu0
      %v2297 = vadd.f32 0.0, %v2296
      %v2298 = vpop.f32.mrf.mxu0
      %2299 = vmatprep.mubr.f32.mxu0 0.0
      %2300 = vmatmul.mubr.f32.gmra.mxu0 %v2110
      %v2301 = vpop.f32.mrf.mxu0
      %v2302 = vadd.f32 0.0, %v2301
      %v2303 = vpop.f32.mrf.mxu0
      %2304 = vmatprep.mubr.f32.mxu0 0.0
      %2305 = vmatmul.mubr.f32.gmra.mxu0 %v2113
      %v2306 = vpop.f32.mrf.mxu0
      %v2307 = vadd.f32 0.0, %v2306
      %v2308 = vpop.f32.mrf.mxu0
      %2309 = vmatprep.mubr.f32.mxu0 0.0
      %2310 = vmatmul.mubr.f32.gmra.mxu0 %v2116
      %v2311 = vpop.f32.mrf.mxu0
      %v2312 = vadd.f32 0.0, %v2311
      %v2313 = vpop.f32.mrf.mxu0
      %2314 = vmatprep.mubr.f32.mxu0 0.0
      %2315 = vmatmul.mubr.f32.gmra.mxu0 %v2119
      %v2316 = vpop.f32.mrf.mxu0
      %v2317 = vadd.f32 0.0, %v2316
      %v2318 = vpop.f32.mrf.mxu0
      %2319 = vmatprep.mubr.f32.mxu0 0.0
      %2320 = vmatmul.mubr.f32.gmra.mxu0 %v2122
      %v2321 = vpop.f32.mrf.mxu0
      %v2322 = vadd.f32 0.0, %v2321
      %v2323 = vpop.f32.mrf.mxu0
      %2324 = vmatprep.mubr.f32.mxu0 0.0
      %2325 = vmatmul.mubr.f32.gmra.mxu0 %v2125
      %v2326 = vpop.f32.mrf.mxu0
      %v2327 = vadd.f32 0.0, %v2326
      %v2328 = vpop.f32.mrf.mxu0
      %2329 = vmatprep.mubr.f32.mxu0 0.0
      %2330 = vmatmul.mubr.f32.gmra.mxu0 %v2128
      %v2331 = vpop.f32.mrf.mxu0
      %v2332 = vadd.f32 0.0, %v2331
      %v2333 = vpop.f32.mrf.mxu0
      %2334 = vmatprep.mubr.f32.mxu0 0.0
      %2335 = vmatmul.mubr.f32.gmra.mxu0 %v2131
      %v2336 = vpop.f32.mrf.mxu0
      %v2337 = vadd.f32 0.0, %v2336
      %v2338 = vpop.f32.mrf.mxu0
      %2339 = vmatprep.mubr.f32.mxu0 0.0
      %2340 = vmatmul.mubr.f32.gmra.mxu0 %v2134
      %v2341 = vpop.f32.mrf.mxu0
      %v2342 = vadd.f32 0.0, %v2341
      %v2343 = vpop.f32.mrf.mxu0
      %2344 = vmatprep.mubr.f32.mxu0 0.0
      %2345 = vmatmul.mubr.f32.gmra.mxu0 %v2137
      %v2346 = vpop.f32.mrf.mxu0
      %v2347 = vadd.f32 0.0, %v2346
      %v2348 = vpop.f32.mrf.mxu0
      %2349 = vmatprep.mubr.f32.mxu0 0.0
      %2350 = vmatmul.mubr.f32.gmra.mxu0 %v2140
      %v2351 = vpop.f32.mrf.mxu0
      %v2352 = vadd.f32 0.0, %v2351
      %v2353 = vpop.f32.mrf.mxu0
      %2354 = vmatprep.mubr.f32.mxu0 0.0
      %2355 = vmatmul.mubr.f32.gmra.mxu0 %v2143
      %v2356 = vpop.f32.mrf.mxu0
      %v2357 = vadd.f32 0.0, %v2356
      %v2358 = vpop.f32.mrf.mxu0
      %2359 = vmatprep.mubr.f32.mxu0 0.0
      %2360 = vmatmul.mubr.f32.gmra.mxu0 %v2146
      %v2361 = vpop.f32.mrf.mxu0
      %v2362 = vadd.f32 0.0, %v2361
      %v2363 = vpop.f32.mrf.mxu0
      %2364 = vmatprep.mubr.f32.mxu0 0.0
      %2365 = vmatmul.mubr.f32.gmra.mxu0 %v2149
      %v2366 = vpop.f32.mrf.mxu0
      %v2367 = vadd.f32 0.0, %v2366
      %v2368 = vpop.f32.mrf.mxu0
      %2369 = vmatprep.mubr.f32.mxu0 0.0
      %2370 = vmatmul.mubr.f32.gmra.mxu0 %v2152
      %v2371 = vpop.f32.mrf.mxu0
      %v2372 = vadd.f32 0.0, %v2371
      %v2373 = vpop.f32.mrf.mxu0
      %2374 = vmatprep.mubr.f32.mxu0 0.0
      %2375 = vmatmul.mubr.f32.gmra.mxu0 %v2155
      %v2376 = vpop.f32.mrf.mxu0
      %v2377 = vadd.f32 0.0, %v2376
      %v2378 = vpop.f32.mrf.mxu0
      %2379 = vmatprep.mubr.f32.mxu0 0.0
      %2380 = vmatmul.mubr.f32.gmra.mxu0 %v2158
      %v2381 = vpop.f32.mrf.mxu0
      %v2382 = vadd.f32 0.0, %v2381
      %v2383 = vpop.f32.mrf.mxu0
      %2384 = vmatprep.mubr.f32.mxu0 0.0
      %2385 = vmatmul.mubr.f32.gmra.mxu0 %v2161
      %v2386 = vpop.f32.mrf.mxu0
      %v2387 = vadd.f32 0.0, %v2386
      %v2388 = vpop.f32.mrf.mxu0
      %2389 = vmatprep.mubr.f32.mxu0 0.0
      %2390 = vmatmul.mubr.f32.gmra.mxu0 %v2164
      %v2391 = vpop.f32.mrf.mxu0
      %v2392 = vadd.f32 0.0, %v2391
      %v2393 = vpop.f32.mrf.mxu0
      %2394 = vdwg.mxu0
      %v2395 = vsel %vm312, %v2237, 0.0
      %v2396 = vsel %vm312, %v2242, 0.0
      %v2397 = vadd.f32 %v2395, %v2396
      %v2398 = vsel %vm312, %v2247, 0.0
      %v2399 = vadd.f32 %v2397, %v2398
      %v2400 = vsel %vm312, %v2252, 0.0
      %v2401 = vadd.f32 %v2399, %v2400
      %v2402 = vsel %vm312, %v2257, 0.0
      %v2403 = vadd.f32 %v2401, %v2402
      %v2404 = vsel %vm312, %v2262, 0.0
      %v2405 = vadd.f32 %v2403, %v2404
      %v2406 = vsel %vm312, %v2267, 0.0
      %v2407 = vadd.f32 %v2405, %v2406
      %v2408 = vsel %vm312, %v2272, 0.0
      %v2409 = vadd.f32 %v2407, %v2408
      %v2410 = vsel %vm312, %v2277, 0.0
      %v2411 = vadd.f32 %v2409, %v2410
      %v2412 = vsel %vm312, %v2282, 0.0
      %v2413 = vadd.f32 %v2411, %v2412
      %v2414 = vsel %vm312, %v2287, 0.0
      %v2415 = vadd.f32 %v2413, %v2414
      %v2416 = vsel %vm312, %v2292, 0.0
      %v2417 = vadd.f32 %v2415, %v2416
      %v2418 = vsel %vm312, %v2297, 0.0
      %v2419 = vadd.f32 %v2417, %v2418
      %v2420 = vsel %vm312, %v2302, 0.0
      %v2421 = vadd.f32 %v2419, %v2420
      %v2422 = vsel %vm312, %v2307, 0.0
      %v2423 = vadd.f32 %v2421, %v2422
      %v2424 = vsel %vm312, %v2312, 0.0
      %v2425 = vadd.f32 %v2423, %v2424
      %v2426 = vsel %vm312, %v2317, 0.0
      %v2427 = vadd.f32 %v2425, %v2426
      %v2428 = vsel %vm312, %v2322, 0.0
      %v2429 = vadd.f32 %v2427, %v2428
      %v2430 = vsel %vm312, %v2327, 0.0
      %v2431 = vadd.f32 %v2429, %v2430
      %v2432 = vsel %vm312, %v2332, 0.0
      %v2433 = vadd.f32 %v2431, %v2432
      %v2434 = vsel %vm312, %v2337, 0.0
      %v2435 = vadd.f32 %v2433, %v2434
      %v2436 = vsel %vm312, %v2342, 0.0
      %v2437 = vadd.f32 %v2435, %v2436
      %v2438 = vsel %vm312, %v2347, 0.0
      %v2439 = vadd.f32 %v2437, %v2438
      %v2440 = vsel %vm312, %v2352, 0.0
      %v2441 = vadd.f32 %v2439, %v2440
      %v2442 = vsel %vm312, %v2357, 0.0
      %v2443 = vadd.f32 %v2441, %v2442
      %v2444 = vsel %vm312, %v2362, 0.0
      %v2445 = vadd.f32 %v2443, %v2444
      %v2446 = vsel %vm312, %v2367, 0.0
      %v2447 = vadd.f32 %v2445, %v2446
      %v2448 = vsel %vm312, %v2372, 0.0
      %v2449 = vadd.f32 %v2447, %v2448
      %v2450 = vsel %vm312, %v2377, 0.0
      %v2451 = vadd.f32 %v2449, %v2450
      %v2452 = vsel %vm312, %v2382, 0.0
      %v2453 = vadd.f32 %v2451, %v2452
      %v2454 = vsel %vm312, %v2387, 0.0
      %v2455 = vadd.f32 %v2453, %v2454
      %v2456 = vsel %vm312, %v2392, 0.0
      %v2457 = vadd.f32 %v2455, %v2456
      %v2458 = vrot.slane %v2457, 4
      %v2459 = vadd.f32 %v2457, %v2458
      %v2460 = vrot.slane %v2459, 2
      %v2461 = vadd.f32 %v2459, %v2460
      %v2462 = vrot.slane %v2461, 1
      %v2463 = vadd.f32 %v2461, %v2462
      %v2464 = vmul.f32 %v2463, 0.00390625
      %v2465 = vmul.f32 %v2237, %v2237
      %v2466 = vmul.f32 %v2242, %v2242
      %v2467 = vmul.f32 %v2247, %v2247
      %v2468 = vmul.f32 %v2252, %v2252
      %v2469 = vmul.f32 %v2257, %v2257
      %v2470 = vmul.f32 %v2262, %v2262
      %v2471 = vmul.f32 %v2267, %v2267
      %v2472 = vmul.f32 %v2272, %v2272
      %v2473 = vmul.f32 %v2277, %v2277
      %v2474 = vmul.f32 %v2282, %v2282
      %v2475 = vmul.f32 %v2287, %v2287
      %v2476 = vmul.f32 %v2292, %v2292
      %v2477 = vmul.f32 %v2297, %v2297
      %v2478 = vmul.f32 %v2302, %v2302
      %v2479 = vmul.f32 %v2307, %v2307
      %v2480 = vmul.f32 %v2312, %v2312
      %v2481 = vmul.f32 %v2317, %v2317
      %v2482 = vmul.f32 %v2322, %v2322
      %v2483 = vmul.f32 %v2327, %v2327
      %v2484 = vmul.f32 %v2332, %v2332
      %v2485 = vmul.f32 %v2337, %v2337
      %v2486 = vmul.f32 %v2342, %v2342
      %v2487 = vmul.f32 %v2347, %v2347
      %v2488 = vmul.f32 %v2352, %v2352
      %v2489 = vmul.f32 %v2357, %v2357
      %v2490 = vmul.f32 %v2362, %v2362
      %v2491 = vmul.f32 %v2367, %v2367
      %v2492 = vmul.f32 %v2372, %v2372
      %v2493 = vmul.f32 %v2377, %v2377
      %v2494 = vmul.f32 %v2382, %v2382
      %v2495 = vmul.f32 %v2387, %v2387
      %v2496 = vmul.f32 %v2392, %v2392
      %v2497 = vsel %vm312, %v2465, 0.0
      %v2498 = vsel %vm312, %v2466, 0.0
      %v2499 = vadd.f32 %v2497, %v2498
      %v2500 = vsel %vm312, %v2467, 0.0
      %v2501 = vadd.f32 %v2499, %v2500
      %v2502 = vsel %vm312, %v2468, 0.0
      %v2503 = vadd.f32 %v2501, %v2502
      %v2504 = vsel %vm312, %v2469, 0.0
      %v2505 = vadd.f32 %v2503, %v2504
      %v2506 = vsel %vm312, %v2470, 0.0
      %v2507 = vadd.f32 %v2505, %v2506
      %v2508 = vsel %vm312, %v2471, 0.0
      %v2509 = vadd.f32 %v2507, %v2508
      %v2510 = vsel %vm312, %v2472, 0.0
      %v2511 = vadd.f32 %v2509, %v2510
      %v2512 = vsel %vm312, %v2473, 0.0
      %v2513 = vadd.f32 %v2511, %v2512
      %v2514 = vsel %vm312, %v2474, 0.0
      %v2515 = vadd.f32 %v2513, %v2514
      %v2516 = vsel %vm312, %v2475, 0.0
      %v2517 = vadd.f32 %v2515, %v2516
      %v2518 = vsel %vm312, %v2476, 0.0
      %v2519 = vadd.f32 %v2517, %v2518
      %v2520 = vsel %vm312, %v2477, 0.0
      %v2521 = vadd.f32 %v2519, %v2520
      %v2522 = vsel %vm312, %v2478, 0.0
      %v2523 = vadd.f32 %v2521, %v2522
      %v2524 = vsel %vm312, %v2479, 0.0
      %v2525 = vadd.f32 %v2523, %v2524
      %v2526 = vsel %vm312, %v2480, 0.0
      %v2527 = vadd.f32 %v2525, %v2526
      %v2528 = vsel %vm312, %v2481, 0.0
      %v2529 = vadd.f32 %v2527, %v2528
      %v2530 = vsel %vm312, %v2482, 0.0
      %v2531 = vadd.f32 %v2529, %v2530
      %v2532 = vsel %vm312, %v2483, 0.0
      %v2533 = vadd.f32 %v2531, %v2532
      %v2534 = vsel %vm312, %v2484, 0.0
      %v2535 = vadd.f32 %v2533, %v2534
      %v2536 = vsel %vm312, %v2485, 0.0
      %v2537 = vadd.f32 %v2535, %v2536
      %v2538 = vsel %vm312, %v2486, 0.0
      %v2539 = vadd.f32 %v2537, %v2538
      %v2540 = vsel %vm312, %v2487, 0.0
      %v2541 = vadd.f32 %v2539, %v2540
      %v2542 = vsel %vm312, %v2488, 0.0
      %v2543 = vadd.f32 %v2541, %v2542
      %v2544 = vsel %vm312, %v2489, 0.0
      %v2545 = vadd.f32 %v2543, %v2544
      %v2546 = vsel %vm312, %v2490, 0.0
      %v2547 = vadd.f32 %v2545, %v2546
      %v2548 = vsel %vm312, %v2491, 0.0
      %v2549 = vadd.f32 %v2547, %v2548
      %v2550 = vsel %vm312, %v2492, 0.0
      %v2551 = vadd.f32 %v2549, %v2550
      %v2552 = vsel %vm312, %v2493, 0.0
      %v2553 = vadd.f32 %v2551, %v2552
      %v2554 = vsel %vm312, %v2494, 0.0
      %v2555 = vadd.f32 %v2553, %v2554
      %v2556 = vsel %vm312, %v2495, 0.0
      %v2557 = vadd.f32 %v2555, %v2556
      %v2558 = vsel %vm312, %v2496, 0.0
      %v2559 = vadd.f32 %v2557, %v2558
      %v2560 = vrot.slane %v2559, 4
      %v2561 = vadd.f32 %v2559, %v2560
      %v2562 = vrot.slane %v2561, 2
      %v2563 = vadd.f32 %v2561, %v2562
      %v2564 = vrot.slane %v2563, 1
      %v2565 = vadd.f32 %v2563, %v2564
      %v2566 = vmul.f32 %v2565, 0.00390625
      %v2567 = vmul.f32 %v2464, %v2464
      %v2568 = vsub.f32 %v2566, %v2567
      %v2569 = vadd.f32 %v2568, 1e-05
      %v2570 = vrsqrt.pop %v2569
      %v2571 = vld [vmem:[%s2] sm:$0x1]
      %v2572 = vmul.f32 %v2570, %v2571
      %v2573 = vld [vmem:[%s3] sm:$0x1]
      %v2574 = vmul.f32 %v2464, %v2572
      %v2575 = vsub.f32 %v2573, %v2574
      %v2576 = vlaneseq
      %v2577 = vshrl.u32 %v2576, 7
      %v2578 = vsub.s32 0, %v2577
      %v2579 = vrot.slane %v2572, %v2578
      %v2580 = vmul.f32 %v2237, %v2579
      %v2581 = vmul.f32 %v2242, %v2579
      %v2582 = vmul.f32 %v2247, %v2579
      %v2583 = vmul.f32 %v2252, %v2579
      %v2584 = vmul.f32 %v2257, %v2579
      %v2585 = vmul.f32 %v2262, %v2579
      %v2586 = vmul.f32 %v2267, %v2579
      %v2587 = vmul.f32 %v2272, %v2579
      %v2588 = vmul.f32 %v2277, %v2579
      %v2589 = vmul.f32 %v2282, %v2579
      %v2590 = vmul.f32 %v2287, %v2579
      %v2591 = vmul.f32 %v2292, %v2579
      %v2592 = vmul.f32 %v2297, %v2579
      %v2593 = vmul.f32 %v2302, %v2579
      %v2594 = vmul.f32 %v2307, %v2579
      %v2595 = vmul.f32 %v2312, %v2579
      %v2596 = vmul.f32 %v2317, %v2579
      %v2597 = vmul.f32 %v2322, %v2579
      %v2598 = vmul.f32 %v2327, %v2579
      %v2599 = vmul.f32 %v2332, %v2579
      %v2600 = vmul.f32 %v2337, %v2579
      %v2601 = vmul.f32 %v2342, %v2579
      %v2602 = vmul.f32 %v2347, %v2579
      %v2603 = vmul.f32 %v2352, %v2579
      %v2604 = vmul.f32 %v2357, %v2579
      %v2605 = vmul.f32 %v2362, %v2579
      %v2606 = vmul.f32 %v2367, %v2579
      %v2607 = vmul.f32 %v2372, %v2579
      %v2608 = vmul.f32 %v2377, %v2579
      %v2609 = vmul.f32 %v2382, %v2579
      %v2610 = vmul.f32 %v2387, %v2579
      %v2611 = vmul.f32 %v2392, %v2579
      %v2613 = vlaneseq
      %v2614 = vshrl.u32 %v2613, 7
      %v2615 = vsub.s32 0, %v2614
      %v2616 = vrot.slane %v2575, %v2615
      %v2618 = vadd.f32 %v2580, %v2616
      %v2619 = vadd.f32 %v2581, %v2616
      %v2620 = vadd.f32 %v2582, %v2616
      %v2621 = vadd.f32 %v2583, %v2616
      %v2622 = vadd.f32 %v2584, %v2616
      %v2623 = vadd.f32 %v2585, %v2616
      %v2624 = vadd.f32 %v2586, %v2616
      %v2625 = vadd.f32 %v2587, %v2616
      %v2626 = vadd.f32 %v2588, %v2616
      %v2627 = vadd.f32 %v2589, %v2616
      %v2628 = vadd.f32 %v2590, %v2616
      %v2629 = vadd.f32 %v2591, %v2616
      %v2630 = vadd.f32 %v2592, %v2616
      %v2631 = vadd.f32 %v2593, %v2616
      %v2632 = vadd.f32 %v2594, %v2616
      %v2633 = vadd.f32 %v2595, %v2616
      %v2634 = vadd.f32 %v2596, %v2616
      %v2635 = vadd.f32 %v2597, %v2616
      %v2636 = vadd.f32 %v2598, %v2616
      %v2637 = vadd.f32 %v2599, %v2616
      %v2638 = vadd.f32 %v2600, %v2616
      %v2639 = vadd.f32 %v2601, %v2616
      %v2640 = vadd.f32 %v2602, %v2616
      %v2641 = vadd.f32 %v2603, %v2616
      %v2642 = vadd.f32 %v2604, %v2616
      %v2643 = vadd.f32 %v2605, %v2616
      %v2644 = vadd.f32 %v2606, %v2616
      %v2645 = vadd.f32 %v2607, %v2616
      %v2646 = vadd.f32 %v2608, %v2616
      %v2647 = vadd.f32 %v2609, %v2616
      %v2648 = vadd.f32 %v2610, %v2616
      %v2649 = vadd.f32 %v2611, %v2616
      %v2650 = vmax.f32 %v2618, 0.0
      %v2651 = vmax.f32 %v2619, 0.0
      %v2652 = vmax.f32 %v2620, 0.0
      %v2653 = vmax.f32 %v2621, 0.0
      %v2654 = vmax.f32 %v2622, 0.0
      %v2655 = vmax.f32 %v2623, 0.0
      %v2656 = vmax.f32 %v2624, 0.0
      %v2657 = vmax.f32 %v2625, 0.0
      %v2658 = vmax.f32 %v2626, 0.0
      %v2659 = vmax.f32 %v2627, 0.0
      %v2660 = vmax.f32 %v2628, 0.0
      %v2661 = vmax.f32 %v2629, 0.0
      %v2662 = vmax.f32 %v2630, 0.0
      %v2663 = vmax.f32 %v2631, 0.0
      %v2664 = vmax.f32 %v2632, 0.0
      %v2665 = vmax.f32 %v2633, 0.0
      %v2666 = vmax.f32 %v2634, 0.0
      %v2667 = vmax.f32 %v2635, 0.0
      %v2668 = vmax.f32 %v2636, 0.0
      %v2669 = vmax.f32 %v2637, 0.0
      %v2670 = vmax.f32 %v2638, 0.0
      %v2671 = vmax.f32 %v2639, 0.0
      %v2672 = vmax.f32 %v2640, 0.0
      %v2673 = vmax.f32 %v2641, 0.0
      %v2674 = vmax.f32 %v2642, 0.0
      %v2675 = vmax.f32 %v2643, 0.0
      %v2676 = vmax.f32 %v2644, 0.0
      %v2677 = vmax.f32 %v2645, 0.0
      %v2678 = vmax.f32 %v2646, 0.0
      %v2679 = vmax.f32 %v2647, 0.0
      %v2680 = vmax.f32 %v2648, 0.0
      %v2681 = vmax.f32 %v2649, 0.0
      %2682 = vst.msk [vmem:[%s311 + $0x1] sm:$0xff] %vm312, %v2650
      %2683 = vst.msk [vmem:[%s311 + $0x9] sm:$0xff] %vm312, %v2651
      %2684 = vst.msk [vmem:[%s311 + $0x19] sm:$0xff] %vm312, %v2652
      %2685 = vst.msk [vmem:[%s311 + $0x21] sm:$0xff] %vm312, %v2653
      %2686 = vst.msk [vmem:[%s311 + $0x31] sm:$0xff] %vm312, %v2654
      %2687 = vst.msk [vmem:[%s311 + $0x39] sm:$0xff] %vm312, %v2655
      %2688 = vst.msk [vmem:[%s311 + $0x49] sm:$0xff] %vm312, %v2656
      %2689 = vst.msk [vmem:[%s311 + $0x51] sm:$0xff] %vm312, %v2657
      %2690 = vst.msk [vmem:[%s311 + $0x61] sm:$0xff] %vm312, %v2658
      %2691 = vst.msk [vmem:[%s311 + $0x69] sm:$0xff] %vm312, %v2659
      %2692 = vst.msk [vmem:[%s311 + $0x79] sm:$0xff] %vm312, %v2660
      %2693 = vst.msk [vmem:[%s311 + $0x81] sm:$0xff] %vm312, %v2661
      %2694 = vst.msk [vmem:[%s311 + $0x91] sm:$0xff] %vm312, %v2662
      %2695 = vst.msk [vmem:[%s311 + $0x99] sm:$0xff] %vm312, %v2663
      %2696 = vst.msk [vmem:[%s311 + $0xa9] sm:$0xff] %vm312, %v2664
      %2697 = vst.msk [vmem:[%s311 + $0xb1] sm:$0xff] %vm312, %v2665
      %2698 = vst.msk [vmem:[%s311 + $0xc1] sm:$0xff] %vm312, %v2666
      %2699 = vst.msk [vmem:[%s311 + $0xc9] sm:$0xff] %vm312, %v2667
      %2700 = vst.msk [vmem:[%s311 + $0xd9] sm:$0xff] %vm312, %v2668
      %2701 = vst.msk [vmem:[%s311 + $0xe1] sm:$0xff] %vm312, %v2669
      %2702 = vst.msk [vmem:[%s311 + $0xf1] sm:$0xff] %vm312, %v2670
      %2703 = vst.msk [vmem:[%s311 + $0xf9] sm:$0xff] %vm312, %v2671
      %2704 = vst.msk [vmem:[%s311 + $0x109] sm:$0xff] %vm312, %v2672
      %2705 = vst.msk [vmem:[%s311 + $0x111] sm:$0xff] %vm312, %v2673
      %2706 = vst.msk [vmem:[%s311 + $0x121] sm:$0xff] %vm312, %v2674
      %2707 = vst.msk [vmem:[%s311 + $0x129] sm:$0xff] %vm312, %v2675
      %2708 = vst.msk [vmem:[%s311 + $0x139] sm:$0xff] %vm312, %v2676
      %2709 = vst.msk [vmem:[%s311 + $0x141] sm:$0xff] %vm312, %v2677
      %2710 = vst.msk [vmem:[%s311 + $0x151] sm:$0xff] %vm312, %v2678
      %2711 = vst.msk [vmem:[%s311 + $0x159] sm:$0xff] %vm312, %v2679
      %2712 = vst.msk [vmem:[%s311 + $0x169] sm:$0xff] %vm312, %v2680
      %2713 = vst.msk [vmem:[%s311 + $0x171] sm:$0xff] %vm312, %v2681
      %2714 = vst.msk [vmem:[#allocation2 + $0x1] sm:$0xff] %vm312, %v2652
      %2715 = vst.msk [vmem:[#allocation2 + $0x9] sm:$0xff] %vm312, %v2653
      %2716 = vst.msk [vmem:[%s347 + $0x1] sm:$0xff] %vm312, %v2678
      %2717 = vst.msk [vmem:[%s347 + $0x9] sm:$0xff] %vm312, %v2679
      %v2718 = vld [vmem:[#allocation2 + $0x2] sm:$0x1]
      %v2719 = vld [vmem:[#allocation2 + $0x1a] sm:$0x1]
      %v2720 = vld [vmem:[#allocation2 + $0x32] sm:$0x1]
      %v2721 = vld [vmem:[#allocation2 + $0x4a] sm:$0x1]
      %v2722 = vld [vmem:[#allocation2 + $0x62] sm:$0x1]
      %v2723 = vld [vmem:[#allocation2 + $0x7a] sm:$0x1]
      %v2724 = vld [vmem:[#allocation2 + $0x92] sm:$0x1]
      %v2725 = vld [vmem:[#allocation2 + $0xaa] sm:$0x1]
      %v2726 = vld [vmem:[#allocation2 + $0xc2] sm:$0x1]
      %v2727 = vld [vmem:[#allocation2 + $0xda] sm:$0x1]
      %v2728 = vld [vmem:[#allocation2 + $0xf2] sm:$0x1]
      %v2729 = vld [vmem:[#allocation2 + $0x10a] sm:$0x1]
      %v2730 = vld [vmem:[#allocation2 + $0x122] sm:$0x1]
      %v2731 = vld [vmem:[#allocation2 + $0x13a] sm:$0x1]
      %v2732 = vld [vmem:[#allocation2 + $0x152] sm:$0x1]
      %v2733 = vld [vmem:[#allocation2 + $0x16a] sm:$0x1]
      %v2734 = vld [vmem:[#allocation2 + $0x182] sm:$0x1]
      %v2735 = vld [vmem:[#allocation2 + $0x19a] sm:$0x1]
      %2736 = vst.msk [vmem:[#allocation2] sm:$0x1] %vm368, %v2718
      %2737 = vst.msk [vmem:[#allocation2 + $0x18] sm:$0x1] %vm368, %v2719
      %2738 = vst.msk [vmem:[#allocation2 + $0x30] sm:$0x1] %vm368, %v2720
      %2739 = vst.msk [vmem:[#allocation2 + $0x48] sm:$0x1] %vm368, %v2721
      %2740 = vst.msk [vmem:[#allocation2 + $0x60] sm:$0x1] %vm368, %v2722
      %2741 = vst.msk [vmem:[#allocation2 + $0x78] sm:$0x1] %vm368, %v2723
      %2742 = vst.msk [vmem:[#allocation2 + $0x90] sm:$0x1] %vm368, %v2724
      %2743 = vst.msk [vmem:[#allocation2 + $0xa8] sm:$0x1] %vm368, %v2725
      %2744 = vst.msk [vmem:[#allocation2 + $0xc0] sm:$0x1] %vm368, %v2726
      %2745 = vst.msk [vmem:[#allocation2 + $0xd8] sm:$0x1] %vm368, %v2727
      %2746 = vst.msk [vmem:[#allocation2 + $0xf0] sm:$0x1] %vm368, %v2728
      %2747 = vst.msk [vmem:[#allocation2 + $0x108] sm:$0x1] %vm368, %v2729
      %2748 = vst.msk [vmem:[#allocation2 + $0x120] sm:$0x1] %vm368, %v2730
      %2749 = vst.msk [vmem:[#allocation2 + $0x138] sm:$0x1] %vm368, %v2731
      %2750 = vst.msk [vmem:[#allocation2 + $0x150] sm:$0x1] %vm368, %v2732
      %2751 = vst.msk [vmem:[#allocation2 + $0x168] sm:$0x1] %vm368, %v2733
      %2752 = vst.msk [vmem:[#allocation2 + $0x180] sm:$0x1] %vm368, %v2734
      %2753 = vst.msk [vmem:[#allocation2 + $0x198] sm:$0x1] %vm368, %v2735
      %v2754 = vld [vmem:[#allocation2 + $0xf] sm:$0x1]
      %v2755 = vld [vmem:[#allocation2 + $0x27] sm:$0x1]
      %v2756 = vld [vmem:[#allocation2 + $0x3f] sm:$0x1]
      %v2757 = vld [vmem:[#allocation2 + $0x57] sm:$0x1]
      %v2758 = vld [vmem:[#allocation2 + $0x6f] sm:$0x1]
      %v2759 = vld [vmem:[#allocation2 + $0x87] sm:$0x1]
      %v2760 = vld [vmem:[#allocation2 + $0x9f] sm:$0x1]
      %v2761 = vld [vmem:[#allocation2 + $0xb7] sm:$0x1]
      %v2762 = vld [vmem:[#allocation2 + $0xcf] sm:$0x1]
      %v2763 = vld [vmem:[#allocation2 + $0xe7] sm:$0x1]
      %v2764 = vld [vmem:[#allocation2 + $0xff] sm:$0x1]
      %v2765 = vld [vmem:[#allocation2 + $0x117] sm:$0x1]
      %v2766 = vld [vmem:[#allocation2 + $0x12f] sm:$0x1]
      %v2767 = vld [vmem:[#allocation2 + $0x147] sm:$0x1]
      %v2768 = vld [vmem:[#allocation2 + $0x15f] sm:$0x1]
      %v2769 = vld [vmem:[#allocation2 + $0x177] sm:$0x1]
      %v2770 = vld [vmem:[#allocation2 + $0x18f] sm:$0x1]
      %v2771 = vld [vmem:[#allocation2 + $0x1a7] sm:$0x1]
      %2772 = vst.msk [vmem:[#allocation2 + $0x11] sm:$0x1] %vm368, %v2754
      %2773 = vst.msk [vmem:[#allocation2 + $0x29] sm:$0x1] %vm368, %v2755
      %2774 = vst.msk [vmem:[#allocation2 + $0x41] sm:$0x1] %vm368, %v2756
      %2775 = vst.msk [vmem:[#allocation2 + $0x59] sm:$0x1] %vm368, %v2757
      %2776 = vst.msk [vmem:[#allocation2 + $0x71] sm:$0x1] %vm368, %v2758
      %2777 = vst.msk [vmem:[#allocation2 + $0x89] sm:$0x1] %vm368, %v2759
      %2778 = vst.msk [vmem:[#allocation2 + $0xa1] sm:$0x1] %vm368, %v2760
      %2779 = vst.msk [vmem:[#allocation2 + $0xb9] sm:$0x1] %vm368, %v2761
      %2780 = vst.msk [vmem:[#allocation2 + $0xd1] sm:$0x1] %vm368, %v2762
      %2781 = vst.msk [vmem:[#allocation2 + $0xe9] sm:$0x1] %vm368, %v2763
      %2782 = vst.msk [vmem:[#allocation2 + $0x101] sm:$0x1] %vm368, %v2764
      %2783 = vst.msk [vmem:[#allocation2 + $0x119] sm:$0x1] %vm368, %v2765
      %2784 = vst.msk [vmem:[#allocation2 + $0x131] sm:$0x1] %vm368, %v2766
      %2785 = vst.msk [vmem:[#allocation2 + $0x149] sm:$0x1] %vm368, %v2767
      %2786 = vst.msk [vmem:[#allocation2 + $0x161] sm:$0x1] %vm368, %v2768
      %2787 = vst.msk [vmem:[#allocation2 + $0x179] sm:$0x1] %vm368, %v2769
      %2788 = vst.msk [vmem:[#allocation2 + $0x191] sm:$0x1] %vm368, %v2770
      %2789 = vst.msk [vmem:[#allocation2 + $0x1a9] sm:$0x1] %vm368, %v2771
      %v2790 = vld [vmem:[#allocation2] sm:$0xff]
      %v2791 = vld [vmem:[#allocation2 + $0x8] sm:$0xff]
      %v2792 = vld [vmem:[#allocation2 + $0x18] sm:$0xff]
      %v2793 = vld [vmem:[#allocation2 + $0x20] sm:$0xff]
      %v2794 = vld [vmem:[#allocation2 + $0x30] sm:$0xff]
      %v2795 = vld [vmem:[#allocation2 + $0x38] sm:$0xff]
      %v2796 = vld [vmem:[#allocation2 + $0x48] sm:$0xff]
      %v2797 = vld [vmem:[#allocation2 + $0x50] sm:$0xff]
      %v2798 = vld [vmem:[#allocation2 + $0x60] sm:$0xff]
      %v2799 = vld [vmem:[#allocation2 + $0x68] sm:$0xff]
      %v2800 = vld [vmem:[#allocation2 + $0x78] sm:$0xff]
      %v2801 = vld [vmem:[#allocation2 + $0x80] sm:$0xff]
      %v2802 = vld [vmem:[#allocation2 + $0x90] sm:$0xff]
      %v2803 = vld [vmem:[#allocation2 + $0x98] sm:$0xff]
      %v2804 = vld [vmem:[#allocation2 + $0xa8] sm:$0xff]
      %v2805 = vld [vmem:[#allocation2 + $0xb0] sm:$0xff]
      %v2806 = vld [vmem:[#allocation2 + $0xc0] sm:$0xff]
      %v2807 = vld [vmem:[#allocation2 + $0xc8] sm:$0xff]
      %v2808 = vld [vmem:[#allocation2 + $0xd8] sm:$0xff]
      %v2809 = vld [vmem:[#allocation2 + $0xe0] sm:$0xff]
      %v2810 = vld [vmem:[#allocation2 + $0xf0] sm:$0xff]
      %v2811 = vld [vmem:[#allocation2 + $0xf8] sm:$0xff]
      %v2812 = vld [vmem:[#allocation2 + $0x108] sm:$0xff]
      %v2813 = vld [vmem:[#allocation2 + $0x110] sm:$0xff]
      %v2814 = vld [vmem:[#allocation2 + $0x120] sm:$0xff]
      %v2815 = vld [vmem:[#allocation2 + $0x128] sm:$0xff]
      %v2816 = vld [vmem:[#allocation2 + $0x138] sm:$0xff]
      %v2817 = vld [vmem:[#allocation2 + $0x140] sm:$0xff]
      %v2818 = vld [vmem:[#allocation2 + $0x150] sm:$0xff]
      %v2819 = vld [vmem:[#allocation2 + $0x158] sm:$0xff]
      %v2820 = vld [vmem:[#allocation2 + $0x168] sm:$0xff]
      %v2821 = vld [vmem:[#allocation2 + $0x170] sm:$0xff]
      %2822 = vst.msk [vmem:[#allocation3] sm:$0xff] %vm312, %v2790
      %2823 = vst.msk [vmem:[#allocation3 + $0x8] sm:$0xff] %vm312, %v2791
      %2824 = vst.msk [vmem:[#allocation3 + $0x10] sm:$0xff] %vm312, %v2792
      %2825 = vst.msk [vmem:[#allocation3 + $0x18] sm:$0xff] %vm312, %v2793
      %2826 = vst.msk [vmem:[#allocation3 + $0x20] sm:$0xff] %vm312, %v2794
      %2827 = vst.msk [vmem:[#allocation3 + $0x28] sm:$0xff] %vm312, %v2795
      %2828 = vst.msk [vmem:[#allocation3 + $0x30] sm:$0xff] %vm312, %v2796
      %2829 = vst.msk [vmem:[#allocation3 + $0x38] sm:$0xff] %vm312, %v2797
      %2830 = vst.msk [vmem:[#allocation3 + $0x40] sm:$0xff] %vm312, %v2798
      %2831 = vst.msk [vmem:[#allocation3 + $0x48] sm:$0xff] %vm312, %v2799
      %2832 = vst.msk [vmem:[#allocation3 + $0x50] sm:$0xff] %vm312, %v2800
      %2833 = vst.msk [vmem:[#allocation3 + $0x58] sm:$0xff] %vm312, %v2801
      %2834 = vst.msk [vmem:[#allocation3 + $0x60] sm:$0xff] %vm312, %v2802
      %2835 = vst.msk [vmem:[#allocation3 + $0x68] sm:$0xff] %vm312, %v2803
      %2836 = vst.msk [vmem:[#allocation3 + $0x70] sm:$0xff] %vm312, %v2804
      %2837 = vst.msk [vmem:[#allocation3 + $0x78] sm:$0xff] %vm312, %v2805
      %2838 = vst.msk [vmem:[#allocation3 + $0x80] sm:$0xff] %vm312, %v2806
      %2839 = vst.msk [vmem:[#allocation3 + $0x88] sm:$0xff] %vm312, %v2807
      %2840 = vst.msk [vmem:[#allocation3 + $0x90] sm:$0xff] %vm312, %v2808
      %2841 = vst.msk [vmem:[#allocation3 + $0x98] sm:$0xff] %vm312, %v2809
      %2842 = vst.msk [vmem:[#allocation3 + $0xa0] sm:$0xff] %vm312, %v2810
      %2843 = vst.msk [vmem:[#allocation3 + $0xa8] sm:$0xff] %vm312, %v2811
      %2844 = vst.msk [vmem:[#allocation3 + $0xb0] sm:$0xff] %vm312, %v2812
      %2845 = vst.msk [vmem:[#allocation3 + $0xb8] sm:$0xff] %vm312, %v2813
      %2846 = vst.msk [vmem:[#allocation3 + $0xc0] sm:$0xff] %vm312, %v2814
      %2847 = vst.msk [vmem:[#allocation3 + $0xc8] sm:$0xff] %vm312, %v2815
      %2848 = vst.msk [vmem:[#allocation3 + $0xd0] sm:$0xff] %vm312, %v2816
      %2849 = vst.msk [vmem:[#allocation3 + $0xd8] sm:$0xff] %vm312, %v2817
      %2850 = vst.msk [vmem:[#allocation3 + $0xe0] sm:$0xff] %vm312, %v2818
      %2851 = vst.msk [vmem:[#allocation3 + $0xe8] sm:$0xff] %vm312, %v2819
      %2852 = vst.msk [vmem:[#allocation3 + $0xf0] sm:$0xff] %vm312, %v2820
      %2853 = vst.msk [vmem:[#allocation3 + $0xf8] sm:$0xff] %vm312, %v2821
      %v2854 = vld [vmem:[#allocation2 + $0x1] sm:$0xff]
      %v2855 = vld [vmem:[#allocation2 + $0x9] sm:$0xff]
      %v2856 = vld [vmem:[#allocation2 + $0x19] sm:$0xff]
      %v2857 = vld [vmem:[#allocation2 + $0x21] sm:$0xff]
      %v2858 = vld [vmem:[#allocation2 + $0x31] sm:$0xff]
      %v2859 = vld [vmem:[#allocation2 + $0x39] sm:$0xff]
      %v2860 = vld [vmem:[#allocation2 + $0x49] sm:$0xff]
      %v2861 = vld [vmem:[#allocation2 + $0x51] sm:$0xff]
      %v2862 = vld [vmem:[#allocation2 + $0x61] sm:$0xff]
      %v2863 = vld [vmem:[#allocation2 + $0x69] sm:$0xff]
      %v2864 = vld [vmem:[#allocation2 + $0x79] sm:$0xff]
      %v2865 = vld [vmem:[#allocation2 + $0x81] sm:$0xff]
      %v2866 = vld [vmem:[#allocation2 + $0x91] sm:$0xff]
      %v2867 = vld [vmem:[#allocation2 + $0x99] sm:$0xff]
      %v2868 = vld [vmem:[#allocation2 + $0xa9] sm:$0xff]
      %v2869 = vld [vmem:[#allocation2 + $0xb1] sm:$0xff]
      %v2870 = vld [vmem:[#allocation2 + $0xc1] sm:$0xff]
      %v2871 = vld [vmem:[#allocation2 + $0xc9] sm:$0xff]
      %v2872 = vld [vmem:[#allocation2 + $0xd9] sm:$0xff]
      %v2873 = vld [vmem:[#allocation2 + $0xe1] sm:$0xff]
      %v2874 = vld [vmem:[#allocation2 + $0xf1] sm:$0xff]
      %v2875 = vld [vmem:[#allocation2 + $0xf9] sm:$0xff]
      %v2876 = vld [vmem:[#allocation2 + $0x109] sm:$0xff]
      %v2877 = vld [vmem:[#allocation2 + $0x111] sm:$0xff]
      %v2878 = vld [vmem:[#allocation2 + $0x121] sm:$0xff]
      %v2879 = vld [vmem:[#allocation2 + $0x129] sm:$0xff]
      %v2880 = vld [vmem:[#allocation2 + $0x139] sm:$0xff]
      %v2881 = vld [vmem:[#allocation2 + $0x141] sm:$0xff]
      %v2882 = vld [vmem:[#allocation2 + $0x151] sm:$0xff]
      %v2883 = vld [vmem:[#allocation2 + $0x159] sm:$0xff]
      %v2884 = vld [vmem:[#allocation2 + $0x169] sm:$0xff]
      %v2885 = vld [vmem:[#allocation2 + $0x171] sm:$0xff]
      %2918 = vrot.lane.b32.xlu0 %v2854, 4
      %v2919 = vpop.permute.xlu0 %2918
      %2920 = vrot.lane.b32.xlu0 %v2855, 4
      %v2921 = vpop.permute.xlu0 %2920
      %2922 = vrot.lane.b32.xlu0 %v2856, 4
      %v2923 = vpop.permute.xlu0 %2922
      %2924 = vrot.lane.b32.xlu0 %v2857, 4
      %v2925 = vpop.permute.xlu0 %2924
      %2926 = vrot.lane.b32.xlu0 %v2858, 4
      %v2927 = vpop.permute.xlu0 %2926
      %2928 = vrot.lane.b32.xlu0 %v2859, 4
      %v2929 = vpop.permute.xlu0 %2928
      %2930 = vrot.lane.b32.xlu0 %v2860, 4
      %v2931 = vpop.permute.xlu0 %2930
      %2932 = vrot.lane.b32.xlu0 %v2861, 4
      %v2933 = vpop.permute.xlu0 %2932
      %2934 = vrot.lane.b32.xlu0 %v2862, 4
      %v2935 = vpop.permute.xlu0 %2934
      %2936 = vrot.lane.b32.xlu0 %v2863, 4
      %v2937 = vpop.permute.xlu0 %2936
      %2938 = vrot.lane.b32.xlu0 %v2864, 4
      %v2939 = vpop.permute.xlu0 %2938
      %2940 = vrot.lane.b32.xlu0 %v2865, 4
      %v2941 = vpop.permute.xlu0 %2940
      %2942 = vrot.lane.b32.xlu0 %v2866, 4
      %v2943 = vpop.permute.xlu0 %2942
      %2944 = vrot.lane.b32.xlu0 %v2867, 4
      %v2945 = vpop.permute.xlu0 %2944
      %2946 = vrot.lane.b32.xlu0 %v2868, 4
      %v2947 = vpop.permute.xlu0 %2946
      %2948 = vrot.lane.b32.xlu0 %v2869, 4
      %v2949 = vpop.permute.xlu0 %2948
      %2950 = vrot.lane.b32.xlu0 %v2870, 4
      %v2951 = vpop.permute.xlu0 %2950
      %2952 = vrot.lane.b32.xlu0 %v2871, 4
      %v2953 = vpop.permute.xlu0 %2952
      %2954 = vrot.lane.b32.xlu0 %v2872, 4
      %v2955 = vpop.permute.xlu0 %2954
      %2956 = vrot.lane.b32.xlu0 %v2873, 4
      %v2957 = vpop.permute.xlu0 %2956
      %2958 = vrot.lane.b32.xlu0 %v2874, 4
      %v2959 = vpop.permute.xlu0 %2958
      %2960 = vrot.lane.b32.xlu0 %v2875, 4
      %v2961 = vpop.permute.xlu0 %2960
      %2962 = vrot.lane.b32.xlu0 %v2876, 4
      %v2963 = vpop.permute.xlu0 %2962
      %2964 = vrot.lane.b32.xlu0 %v2877, 4
      %v2965 = vpop.permute.xlu0 %2964
      %2966 = vrot.lane.b32.xlu0 %v2878, 4
      %v2967 = vpop.permute.xlu0 %2966
      %2968 = vrot.lane.b32.xlu0 %v2879, 4
      %v2969 = vpop.permute.xlu0 %2968
      %2970 = vrot.lane.b32.xlu0 %v2880, 4
      %v2971 = vpop.permute.xlu0 %2970
      %2972 = vrot.lane.b32.xlu0 %v2881, 4
      %v2973 = vpop.permute.xlu0 %2972
      %2974 = vrot.lane.b32.xlu0 %v2882, 4
      %v2975 = vpop.permute.xlu0 %2974
      %2976 = vrot.lane.b32.xlu0 %v2883, 4
      %v2977 = vpop.permute.xlu0 %2976
      %2978 = vrot.lane.b32.xlu0 %v2884, 4
      %v2979 = vpop.permute.xlu0 %2978
      %2980 = vrot.lane.b32.xlu0 %v2885, 4
      %v2981 = vpop.permute.xlu0 %2980
      %3014 = vst.msk [vmem:[#allocation3] sm:$0xff] %vm647, %v2919
      %3015 = vst.msk [vmem:[#allocation3 + $0x8] sm:$0xff] %vm647, %v2921
      %3016 = vst.msk [vmem:[#allocation3 + $0x10] sm:$0xff] %vm647, %v2923
      %3017 = vst.msk [vmem:[#allocation3 + $0x18] sm:$0xff] %vm647, %v2925
      %3018 = vst.msk [vmem:[#allocation3 + $0x20] sm:$0xff] %vm647, %v2927
      %3019 = vst.msk [vmem:[#allocation3 + $0x28] sm:$0xff] %vm647, %v2929
      %3020 = vst.msk [vmem:[#allocation3 + $0x30] sm:$0xff] %vm647, %v2931
      %3021 = vst.msk [vmem:[#allocation3 + $0x38] sm:$0xff] %vm647, %v2933
      %3022 = vst.msk [vmem:[#allocation3 + $0x40] sm:$0xff] %vm647, %v2935
      %3023 = vst.msk [vmem:[#allocation3 + $0x48] sm:$0xff] %vm647, %v2937
      %3024 = vst.msk [vmem:[#allocation3 + $0x50] sm:$0xff] %vm647, %v2939
      %3025 = vst.msk [vmem:[#allocation3 + $0x58] sm:$0xff] %vm647, %v2941
      %3026 = vst.msk [vmem:[#allocation3 + $0x60] sm:$0xff] %vm647, %v2943
      %3027 = vst.msk [vmem:[#allocation3 + $0x68] sm:$0xff] %vm647, %v2945
      %3028 = vst.msk [vmem:[#allocation3 + $0x70] sm:$0xff] %vm647, %v2947
      %3029 = vst.msk [vmem:[#allocation3 + $0x78] sm:$0xff] %vm647, %v2949
      %3030 = vst.msk [vmem:[#allocation3 + $0x80] sm:$0xff] %vm647, %v2951
      %3031 = vst.msk [vmem:[#allocation3 + $0x88] sm:$0xff] %vm647, %v2953
      %3032 = vst.msk [vmem:[#allocation3 + $0x90] sm:$0xff] %vm647, %v2955
      %3033 = vst.msk [vmem:[#allocation3 + $0x98] sm:$0xff] %vm647, %v2957
      %3034 = vst.msk [vmem:[#allocation3 + $0xa0] sm:$0xff] %vm647, %v2959
      %3035 = vst.msk [vmem:[#allocation3 + $0xa8] sm:$0xff] %vm647, %v2961
      %3036 = vst.msk [vmem:[#allocation3 + $0xb0] sm:$0xff] %vm647, %v2963
      %3037 = vst.msk [vmem:[#allocation3 + $0xb8] sm:$0xff] %vm647, %v2965
      %3038 = vst.msk [vmem:[#allocation3 + $0xc0] sm:$0xff] %vm647, %v2967
      %3039 = vst.msk [vmem:[#allocation3 + $0xc8] sm:$0xff] %vm647, %v2969
      %3040 = vst.msk [vmem:[#allocation3 + $0xd0] sm:$0xff] %vm647, %v2971
      %3041 = vst.msk [vmem:[#allocation3 + $0xd8] sm:$0xff] %vm647, %v2973
      %3042 = vst.msk [vmem:[#allocation3 + $0xe0] sm:$0xff] %vm647, %v2975
      %3043 = vst.msk [vmem:[#allocation3 + $0xe8] sm:$0xff] %vm647, %v2977
      %3044 = vst.msk [vmem:[#allocation3 + $0xf0] sm:$0xff] %vm647, %v2979
      %3045 = vst.msk [vmem:[#allocation3 + $0xf8] sm:$0xff] %vm647, %v2981
      %v3046 = vld [vmem:[#allocation2 + $0x2] sm:$0xff]
      %v3047 = vld [vmem:[#allocation2 + $0xa] sm:$0xff]
      %v3048 = vld [vmem:[#allocation2 + $0x1a] sm:$0xff]
      %v3049 = vld [vmem:[#allocation2 + $0x22] sm:$0xff]
      %v3050 = vld [vmem:[#allocation2 + $0x32] sm:$0xff]
      %v3051 = vld [vmem:[#allocation2 + $0x3a] sm:$0xff]
      %v3052 = vld [vmem:[#allocation2 + $0x4a] sm:$0xff]
      %v3053 = vld [vmem:[#allocation2 + $0x52] sm:$0xff]
      %v3054 = vld [vmem:[#allocation2 + $0x62] sm:$0xff]
      %v3055 = vld [vmem:[#allocation2 + $0x6a] sm:$0xff]
      %v3056 = vld [vmem:[#allocation2 + $0x7a] sm:$0xff]
      %v3057 = vld [vmem:[#allocation2 + $0x82] sm:$0xff]
      %v3058 = vld [vmem:[#allocation2 + $0x92] sm:$0xff]
      %v3059 = vld [vmem:[#allocation2 + $0x9a] sm:$0xff]
      %v3060 = vld [vmem:[#allocation2 + $0xaa] sm:$0xff]
      %v3061 = vld [vmem:[#allocation2 + $0xb2] sm:$0xff]
      %v3062 = vld [vmem:[#allocation2 + $0xc2] sm:$0xff]
      %v3063 = vld [vmem:[#allocation2 + $0xca] sm:$0xff]
      %v3064 = vld [vmem:[#allocation2 + $0xda] sm:$0xff]
      %v3065 = vld [vmem:[#allocation2 + $0xe2] sm:$0xff]
      %v3066 = vld [vmem:[#allocation2 + $0xf2] sm:$0xff]
      %v3067 = vld [vmem:[#allocation2 + $0xfa] sm:$0xff]
      %v3068 = vld [vmem:[#allocation2 + $0x10a] sm:$0xff]
      %v3069 = vld [vmem:[#allocation2 + $0x112] sm:$0xff]
      %v3070 = vld [vmem:[#allocation2 + $0x122] sm:$0xff]
      %v3071 = vld [vmem:[#allocation2 + $0x12a] sm:$0xff]
      %v3072 = vld [vmem:[#allocation2 + $0x13a] sm:$0xff]
      %v3073 = vld [vmem:[#allocation2 + $0x142] sm:$0xff]
      %v3074 = vld [vmem:[#allocation2 + $0x152] sm:$0xff]
      %v3075 = vld [vmem:[#allocation2 + $0x15a] sm:$0xff]
      %v3076 = vld [vmem:[#allocation2 + $0x16a] sm:$0xff]
      %v3077 = vld [vmem:[#allocation2 + $0x172] sm:$0xff]
      %3110 = vrot.lane.b32.xlu0 %v3046, 8
      %v3111 = vpop.permute.xlu0 %3110
      %3112 = vrot.lane.b32.xlu0 %v3047, 8
      %v3113 = vpop.permute.xlu0 %3112
      %3114 = vrot.lane.b32.xlu0 %v3048, 8
      %v3115 = vpop.permute.xlu0 %3114
      %3116 = vrot.lane.b32.xlu0 %v3049, 8
      %v3117 = vpop.permute.xlu0 %3116
      %3118 = vrot.lane.b32.xlu0 %v3050, 8
      %v3119 = vpop.permute.xlu0 %3118
      %3120 = vrot.lane.b32.xlu0 %v3051, 8
      %v3121 = vpop.permute.xlu0 %3120
      %3122 = vrot.lane.b32.xlu0 %v3052, 8
      %v3123 = vpop.permute.xlu0 %3122
      %3124 = vrot.lane.b32.xlu0 %v3053, 8
      %v3125 = vpop.permute.xlu0 %3124
      %3126 = vrot.lane.b32.xlu0 %v3054, 8
      %v3127 = vpop.permute.xlu0 %3126
      %3128 = vrot.lane.b32.xlu0 %v3055, 8
      %v3129 = vpop.permute.xlu0 %3128
      %3130 = vrot.lane.b32.xlu0 %v3056, 8
      %v3131 = vpop.permute.xlu0 %3130
      %3132 = vrot.lane.b32.xlu0 %v3057, 8
      %v3133 = vpop.permute.xlu0 %3132
      %3134 = vrot.lane.b32.xlu0 %v3058, 8
      %v3135 = vpop.permute.xlu0 %3134
      %3136 = vrot.lane.b32.xlu0 %v3059, 8
      %v3137 = vpop.permute.xlu0 %3136
      %3138 = vrot.lane.b32.xlu0 %v3060, 8
      %v3139 = vpop.permute.xlu0 %3138
      %3140 = vrot.lane.b32.xlu0 %v3061, 8
      %v3141 = vpop.permute.xlu0 %3140
      %3142 = vrot.lane.b32.xlu0 %v3062, 8
      %v3143 = vpop.permute.xlu0 %3142
      %3144 = vrot.lane.b32.xlu0 %v3063, 8
      %v3145 = vpop.permute.xlu0 %3144
      %3146 = vrot.lane.b32.xlu0 %v3064, 8
      %v3147 = vpop.permute.xlu0 %3146
      %3148 = vrot.lane.b32.xlu0 %v3065, 8
      %v3149 = vpop.permute.xlu0 %3148
      %3150 = vrot.lane.b32.xlu0 %v3066, 8
      %v3151 = vpop.permute.xlu0 %3150
      %3152 = vrot.lane.b32.xlu0 %v3067, 8
      %v3153 = vpop.permute.xlu0 %3152
      %3154 = vrot.lane.b32.xlu0 %v3068, 8
      %v3155 = vpop.permute.xlu0 %3154
      %3156 = vrot.lane.b32.xlu0 %v3069, 8
      %v3157 = vpop.permute.xlu0 %3156
      %3158 = vrot.lane.b32.xlu0 %v3070, 8
      %v3159 = vpop.permute.xlu0 %3158
      %3160 = vrot.lane.b32.xlu0 %v3071, 8
      %v3161 = vpop.permute.xlu0 %3160
      %3162 = vrot.lane.b32.xlu0 %v3072, 8
      %v3163 = vpop.permute.xlu0 %3162
      %3164 = vrot.lane.b32.xlu0 %v3073, 8
      %v3165 = vpop.permute.xlu0 %3164
      %3166 = vrot.lane.b32.xlu0 %v3074, 8
      %v3167 = vpop.permute.xlu0 %3166
      %3168 = vrot.lane.b32.xlu0 %v3075, 8
      %v3169 = vpop.permute.xlu0 %3168
      %3170 = vrot.lane.b32.xlu0 %v3076, 8
      %v3171 = vpop.permute.xlu0 %3170
      %3172 = vrot.lane.b32.xlu0 %v3077, 8
      %v3173 = vpop.permute.xlu0 %3172
      %3206 = vst.msk [vmem:[#allocation3] sm:$0xff] %vm840, %v3111
      %3207 = vst.msk [vmem:[#allocation3 + $0x8] sm:$0xff] %vm840, %v3113
      %3208 = vst.msk [vmem:[#allocation3 + $0x10] sm:$0xff] %vm840, %v3115
      %3209 = vst.msk [vmem:[#allocation3 + $0x18] sm:$0xff] %vm840, %v3117
      %3210 = vst.msk [vmem:[#allocation3 + $0x20] sm:$0xff] %vm840, %v3119
      %3211 = vst.msk [vmem:[#allocation3 + $0x28] sm:$0xff] %vm840, %v3121
      %3212 = vst.msk [vmem:[#allocation3 + $0x30] sm:$0xff] %vm840, %v3123
      %3213 = vst.msk [vmem:[#allocation3 + $0x38] sm:$0xff] %vm840, %v3125
      %3214 = vst.msk [vmem:[#allocation3 + $0x40] sm:$0xff] %vm840, %v3127
      %3215 = vst.msk [vmem:[#allocation3 + $0x48] sm:$0xff] %vm840, %v3129
      %3216 = vst.msk [vmem:[#allocation3 + $0x50] sm:$0xff] %vm840, %v3131
      %3217 = vst.msk [vmem:[#allocation3 + $0x58] sm:$0xff] %vm840, %v3133
      %3218 = vst.msk [vmem:[#allocation3 + $0x60] sm:$0xff] %vm840, %v3135
      %3219 = vst.msk [vmem:[#allocation3 + $0x68] sm:$0xff] %vm840, %v3137
      %3220 = vst.msk [vmem:[#allocation3 + $0x70] sm:$0xff] %vm840, %v3139
      %3221 = vst.msk [vmem:[#allocation3 + $0x78] sm:$0xff] %vm840, %v3141
      %3222 = vst.msk [vmem:[#allocation3 + $0x80] sm:$0xff] %vm840, %v3143
      %3223 = vst.msk [vmem:[#allocation3 + $0x88] sm:$0xff] %vm840, %v3145
      %3224 = vst.msk [vmem:[#allocation3 + $0x90] sm:$0xff] %vm840, %v3147
      %3225 = vst.msk [vmem:[#allocation3 + $0x98] sm:$0xff] %vm840, %v3149
      %3226 = vst.msk [vmem:[#allocation3 + $0xa0] sm:$0xff] %vm840, %v3151
      %3227 = vst.msk [vmem:[#allocation3 + $0xa8] sm:$0xff] %vm840, %v3153
      %3228 = vst.msk [vmem:[#allocation3 + $0xb0] sm:$0xff] %vm840, %v3155
      %3229 = vst.msk [vmem:[#allocation3 + $0xb8] sm:$0xff] %vm840, %v3157
      %3230 = vst.msk [vmem:[#allocation3 + $0xc0] sm:$0xff] %vm840, %v3159
      %3231 = vst.msk [vmem:[#allocation3 + $0xc8] sm:$0xff] %vm840, %v3161
      %3232 = vst.msk [vmem:[#allocation3 + $0xd0] sm:$0xff] %vm840, %v3163
      %3233 = vst.msk [vmem:[#allocation3 + $0xd8] sm:$0xff] %vm840, %v3165
      %3234 = vst.msk [vmem:[#allocation3 + $0xe0] sm:$0xff] %vm840, %v3167
      %3235 = vst.msk [vmem:[#allocation3 + $0xe8] sm:$0xff] %vm840, %v3169
      %3236 = vst.msk [vmem:[#allocation3 + $0xf0] sm:$0xff] %vm840, %v3171
      %3237 = vst.msk [vmem:[#allocation3 + $0xf8] sm:$0xff] %vm840, %v3173
      %v3238 = vld [vmem:[%s311] sm:$0xff]
      %v3239 = vld [vmem:[%s311 + $0x8] sm:$0xff]
      %v3240 = vld [vmem:[%s311 + $0x18] sm:$0xff]
      %v3241 = vld [vmem:[%s311 + $0x20] sm:$0xff]
      %v3242 = vld [vmem:[%s311 + $0x30] sm:$0xff]
      %v3243 = vld [vmem:[%s311 + $0x38] sm:$0xff]
      %v3244 = vld [vmem:[%s311 + $0x48] sm:$0xff]
      %v3245 = vld [vmem:[%s311 + $0x50] sm:$0xff]
      %v3246 = vld [vmem:[%s311 + $0x60] sm:$0xff]
      %v3247 = vld [vmem:[%s311 + $0x68] sm:$0xff]
      %v3248 = vld [vmem:[%s311 + $0x78] sm:$0xff]
      %v3249 = vld [vmem:[%s311 + $0x80] sm:$0xff]
      %v3250 = vld [vmem:[%s311 + $0x90] sm:$0xff]
      %v3251 = vld [vmem:[%s311 + $0x98] sm:$0xff]
      %v3252 = vld [vmem:[%s311 + $0xa8] sm:$0xff]
      %v3253 = vld [vmem:[%s311 + $0xb0] sm:$0xff]
      %v3254 = vld [vmem:[%s311 + $0xc0] sm:$0xff]
      %v3255 = vld [vmem:[%s311 + $0xc8] sm:$0xff]
      %v3256 = vld [vmem:[%s311 + $0xd8] sm:$0xff]
      %v3257 = vld [vmem:[%s311 + $0xe0] sm:$0xff]
      %v3258 = vld [vmem:[%s311 + $0xf0] sm:$0xff]
      %v3259 = vld [vmem:[%s311 + $0xf8] sm:$0xff]
      %v3260 = vld [vmem:[%s311 + $0x108] sm:$0xff]
      %v3261 = vld [vmem:[%s311 + $0x110] sm:$0xff]
      %v3262 = vld [vmem:[%s311 + $0x120] sm:$0xff]
      %v3263 = vld [vmem:[%s311 + $0x128] sm:$0xff]
      %v3264 = vld [vmem:[%s311 + $0x138] sm:$0xff]
      %v3265 = vld [vmem:[%s311 + $0x140] sm:$0xff]
      %v3266 = vld [vmem:[%s311 + $0x150] sm:$0xff]
      %v3267 = vld [vmem:[%s311 + $0x158] sm:$0xff]
      %v3268 = vld [vmem:[%s311 + $0x168] sm:$0xff]
      %v3269 = vld [vmem:[%s311 + $0x170] sm:$0xff]
      %3302 = vrot.lane.b32.xlu0 %v3238, 12
      %v3303 = vpop.permute.xlu0 %3302
      %3304 = vrot.lane.b32.xlu0 %v3239, 12
      %v3305 = vpop.permute.xlu0 %3304
      %3306 = vrot.lane.b32.xlu0 %v3240, 12
      %v3307 = vpop.permute.xlu0 %3306
      %3308 = vrot.lane.b32.xlu0 %v3241, 12
      %v3309 = vpop.permute.xlu0 %3308
      %3310 = vrot.lane.b32.xlu0 %v3242, 12
      %v3311 = vpop.permute.xlu0 %3310
      %3312 = vrot.lane.b32.xlu0 %v3243, 12
      %v3313 = vpop.permute.xlu0 %3312
      %3314 = vrot.lane.b32.xlu0 %v3244, 12
      %v3315 = vpop.permute.xlu0 %3314
      %3316 = vrot.lane.b32.xlu0 %v3245, 12
      %v3317 = vpop.permute.xlu0 %3316
      %3318 = vrot.lane.b32.xlu0 %v3246, 12
      %v3319 = vpop.permute.xlu0 %3318
      %3320 = vrot.lane.b32.xlu0 %v3247, 12
      %v3321 = vpop.permute.xlu0 %3320
      %3322 = vrot.lane.b32.xlu0 %v3248, 12
      %v3323 = vpop.permute.xlu0 %3322
      %3324 = vrot.lane.b32.xlu0 %v3249, 12
      %v3325 = vpop.permute.xlu0 %3324
      %3326 = vrot.lane.b32.xlu0 %v3250, 12
      %v3327 = vpop.permute.xlu0 %3326
      %3328 = vrot.lane.b32.xlu0 %v3251, 12
      %v3329 = vpop.permute.xlu0 %3328
      %3330 = vrot.lane.b32.xlu0 %v3252, 12
      %v3331 = vpop.permute.xlu0 %3330
      %3332 = vrot.lane.b32.xlu0 %v3253, 12
      %v3333 = vpop.permute.xlu0 %3332
      %3334 = vrot.lane.b32.xlu0 %v3254, 12
      %v3335 = vpop.permute.xlu0 %3334
      %3336 = vrot.lane.b32.xlu0 %v3255, 12
      %v3337 = vpop.permute.xlu0 %3336
      %3338 = vrot.lane.b32.xlu0 %v3256, 12
      %v3339 = vpop.permute.xlu0 %3338
      %3340 = vrot.lane.b32.xlu0 %v3257, 12
      %v3341 = vpop.permute.xlu0 %3340
      %3342 = vrot.lane.b32.xlu0 %v3258, 12
      %v3343 = vpop.permute.xlu0 %3342
      %3344 = vrot.lane.b32.xlu0 %v3259, 12
      %v3345 = vpop.permute.xlu0 %3344
      %3346 = vrot.lane.b32.xlu0 %v3260, 12
      %v3347 = vpop.permute.xlu0 %3346
      %3348 = vrot.lane.b32.xlu0 %v3261, 12
      %v3349 = vpop.permute.xlu0 %3348
      %3350 = vrot.lane.b32.xlu0 %v3262, 12
      %v3351 = vpop.permute.xlu0 %3350
      %3352 = vrot.lane.b32.xlu0 %v3263, 12
      %v3353 = vpop.permute.xlu0 %3352
      %3354 = vrot.lane.b32.xlu0 %v3264, 12
      %v3355 = vpop.permute.xlu0 %3354
      %3356 = vrot.lane.b32.xlu0 %v3265, 12
      %v3357 = vpop.permute.xlu0 %3356
      %3358 = vrot.lane.b32.xlu0 %v3266, 12
      %v3359 = vpop.permute.xlu0 %3358
      %3360 = vrot.lane.b32.xlu0 %v3267, 12
      %v3361 = vpop.permute.xlu0 %3360
      %3362 = vrot.lane.b32.xlu0 %v3268, 12
      %v3363 = vpop.permute.xlu0 %3362
      %3364 = vrot.lane.b32.xlu0 %v3269, 12
      %v3365 = vpop.permute.xlu0 %3364
      %3398 = vst.msk [vmem:[#allocation3] sm:$0xff] %vm1033, %v3303
      %3399 = vst.msk [vmem:[#allocation3 + $0x8] sm:$0xff] %vm1033, %v3305
      %3400 = vst.msk [vmem:[#allocation3 + $0x10] sm:$0xff] %vm1033, %v3307
      %3401 = vst.msk [vmem:[#allocation3 + $0x18] sm:$0xff] %vm1033, %v3309
      %3402 = vst.msk [vmem:[#allocation3 + $0x20] sm:$0xff] %vm1033, %v3311
      %3403 = vst.msk [vmem:[#allocation3 + $0x28] sm:$0xff] %vm1033, %v3313
      %3404 = vst.msk [vmem:[#allocation3 + $0x30] sm:$0xff] %vm1033, %v3315
      %3405 = vst.msk [vmem:[#allocation3 + $0x38] sm:$0xff] %vm1033, %v3317
      %3406 = vst.msk [vmem:[#allocation3 + $0x40] sm:$0xff] %vm1033, %v3319
      %3407 = vst.msk [vmem:[#allocation3 + $0x48] sm:$0xff] %vm1033, %v3321
      %3408 = vst.msk [vmem:[#allocation3 + $0x50] sm:$0xff] %vm1033, %v3323
      %3409 = vst.msk [vmem:[#allocation3 + $0x58] sm:$0xff] %vm1033, %v3325
      %3410 = vst.msk [vmem:[#allocation3 + $0x60] sm:$0xff] %vm1033, %v3327
      %3411 = vst.msk [vmem:[#allocation3 + $0x68] sm:$0xff] %vm1033, %v3329
      %3412 = vst.msk [vmem:[#allocation3 + $0x70] sm:$0xff] %vm1033, %v3331
      %3413 = vst.msk [vmem:[#allocation3 + $0x78] sm:$0xff] %vm1033, %v3333
      %3414 = vst.msk [vmem:[#allocation3 + $0x80] sm:$0xff] %vm1033, %v3335
      %3415 = vst.msk [vmem:[#allocation3 + $0x88] sm:$0xff] %vm1033, %v3337
      %3416 = vst.msk [vmem:[#allocation3 + $0x90] sm:$0xff] %vm1033, %v3339
      %3417 = vst.msk [vmem:[#allocation3 + $0x98] sm:$0xff] %vm1033, %v3341
      %3418 = vst.msk [vmem:[#allocation3 + $0xa0] sm:$0xff] %vm1033, %v3343
      %3419 = vst.msk [vmem:[#allocation3 + $0xa8] sm:$0xff] %vm1033, %v3345
      %3420 = vst.msk [vmem:[#allocation3 + $0xb0] sm:$0xff] %vm1033, %v3347
      %3421 = vst.msk [vmem:[#allocation3 + $0xb8] sm:$0xff] %vm1033, %v3349
      %3422 = vst.msk [vmem:[#allocation3 + $0xc0] sm:$0xff] %vm1033, %v3351
      %3423 = vst.msk [vmem:[#allocation3 + $0xc8] sm:$0xff] %vm1033, %v3353
      %3424 = vst.msk [vmem:[#allocation3 + $0xd0] sm:$0xff] %vm1033, %v3355
      %3425 = vst.msk [vmem:[#allocation3 + $0xd8] sm:$0xff] %vm1033, %v3357
      %3426 = vst.msk [vmem:[#allocation3 + $0xe0] sm:$0xff] %vm1033, %v3359
      %3427 = vst.msk [vmem:[#allocation3 + $0xe8] sm:$0xff] %vm1033, %v3361
      %3428 = vst.msk [vmem:[#allocation3 + $0xf0] sm:$0xff] %vm1033, %v3363
      %3429 = vst.msk [vmem:[#allocation3 + $0xf8] sm:$0xff] %vm1033, %v3365
      %v3430 = vld [vmem:[%s311 + $0x1] sm:$0xff]
      %v3431 = vld [vmem:[%s311 + $0x9] sm:$0xff]
      %v3432 = vld [vmem:[%s311 + $0x19] sm:$0xff]
      %v3433 = vld [vmem:[%s311 + $0x21] sm:$0xff]
      %v3434 = vld [vmem:[%s311 + $0x31] sm:$0xff]
      %v3435 = vld [vmem:[%s311 + $0x39] sm:$0xff]
      %v3436 = vld [vmem:[%s311 + $0x49] sm:$0xff]
      %v3437 = vld [vmem:[%s311 + $0x51] sm:$0xff]
      %v3438 = vld [vmem:[%s311 + $0x61] sm:$0xff]
      %v3439 = vld [vmem:[%s311 + $0x69] sm:$0xff]
      %v3440 = vld [vmem:[%s311 + $0x79] sm:$0xff]
      %v3441 = vld [vmem:[%s311 + $0x81] sm:$0xff]
      %v3442 = vld [vmem:[%s311 + $0x91] sm:$0xff]
      %v3443 = vld [vmem:[%s311 + $0x99] sm:$0xff]
      %v3444 = vld [vmem:[%s311 + $0xa9] sm:$0xff]
      %v3445 = vld [vmem:[%s311 + $0xb1] sm:$0xff]
      %v3446 = vld [vmem:[%s311 + $0xc1] sm:$0xff]
      %v3447 = vld [vmem:[%s311 + $0xc9] sm:$0xff]
      %v3448 = vld [vmem:[%s311 + $0xd9] sm:$0xff]
      %v3449 = vld [vmem:[%s311 + $0xe1] sm:$0xff]
      %v3450 = vld [vmem:[%s311 + $0xf1] sm:$0xff]
      %v3451 = vld [vmem:[%s311 + $0xf9] sm:$0xff]
      %v3452 = vld [vmem:[%s311 + $0x109] sm:$0xff]
      %v3453 = vld [vmem:[%s311 + $0x111] sm:$0xff]
      %v3454 = vld [vmem:[%s311 + $0x121] sm:$0xff]
      %v3455 = vld [vmem:[%s311 + $0x129] sm:$0xff]
      %v3456 = vld [vmem:[%s311 + $0x139] sm:$0xff]
      %v3457 = vld [vmem:[%s311 + $0x141] sm:$0xff]
      %v3458 = vld [vmem:[%s311 + $0x151] sm:$0xff]
      %v3459 = vld [vmem:[%s311 + $0x159] sm:$0xff]
      %v3460 = vld [vmem:[%s311 + $0x169] sm:$0xff]
      %v3461 = vld [vmem:[%s311 + $0x171] sm:$0xff]
      %3494 = vrot.lane.b32.xlu0 %v3430, 16
      %v3495 = vpop.permute.xlu0 %3494
      %3496 = vrot.lane.b32.xlu0 %v3431, 16
      %v3497 = vpop.permute.xlu0 %3496
      %3498 = vrot.lane.b32.xlu0 %v3432, 16
      %v3499 = vpop.permute.xlu0 %3498
      %3500 = vrot.lane.b32.xlu0 %v3433, 16
      %v3501 = vpop.permute.xlu0 %3500
      %3502 = vrot.lane.b32.xlu0 %v3434, 16
      %v3503 = vpop.permute.xlu0 %3502
      %3504 = vrot.lane.b32.xlu0 %v3435, 16
      %v3505 = vpop.permute.xlu0 %3504
      %3506 = vrot.lane.b32.xlu0 %v3436, 16
      %v3507 = vpop.permute.xlu0 %3506
      %3508 = vrot.lane.b32.xlu0 %v3437, 16
      %v3509 = vpop.permute.xlu0 %3508
      %3510 = vrot.lane.b32.xlu0 %v3438, 16
      %v3511 = vpop.permute.xlu0 %3510
      %3512 = vrot.lane.b32.xlu0 %v3439, 16
      %v3513 = vpop.permute.xlu0 %3512
      %3514 = vrot.lane.b32.xlu0 %v3440, 16
      %v3515 = vpop.permute.xlu0 %3514
      %3516 = vrot.lane.b32.xlu0 %v3441, 16
      %v3517 = vpop.permute.xlu0 %3516
      %3518 = vrot.lane.b32.xlu0 %v3442, 16
      %v3519 = vpop.permute.xlu0 %3518
      %3520 = vrot.lane.b32.xlu0 %v3443, 16
      %v3521 = vpop.permute.xlu0 %3520
      %3522 = vrot.lane.b32.xlu0 %v3444, 16
      %v3523 = vpop.permute.xlu0 %3522
      %3524 = vrot.lane.b32.xlu0 %v3445, 16
      %v3525 = vpop.permute.xlu0 %3524
      %3526 = vrot.lane.b32.xlu0 %v3446, 16
      %v3527 = vpop.permute.xlu0 %3526
      %3528 = vrot.lane.b32.xlu0 %v3447, 16
      %v3529 = vpop.permute.xlu0 %3528
      %3530 = vrot.lane.b32.xlu0 %v3448, 16
      %v3531 = vpop.permute.xlu0 %3530
      %3532 = vrot.lane.b32.xlu0 %v3449, 16
      %v3533 = vpop.permute.xlu0 %3532
      %3534 = vrot.lane.b32.xlu0 %v3450, 16
      %v3535 = vpop.permute.xlu0 %3534
      %3536 = vrot.lane.b32.xlu0 %v3451, 16
      %v3537 = vpop.permute.xlu0 %3536
      %3538 = vrot.lane.b32.xlu0 %v3452, 16
      %v3539 = vpop.permute.xlu0 %3538
      %3540 = vrot.lane.b32.xlu0 %v3453, 16
      %v3541 = vpop.permute.xlu0 %3540
      %3542 = vrot.lane.b32.xlu0 %v3454, 16
      %v3543 = vpop.permute.xlu0 %3542
      %3544 = vrot.lane.b32.xlu0 %v3455, 16
      %v3545 = vpop.permute.xlu0 %3544
      %3546 = vrot.lane.b32.xlu0 %v3456, 16
      %v3547 = vpop.permute.xlu0 %3546
      %3548 = vrot.lane.b32.xlu0 %v3457, 16
      %v3549 = vpop.permute.xlu0 %3548
      %3550 = vrot.lane.b32.xlu0 %v3458, 16
      %v3551 = vpop.permute.xlu0 %3550
      %3552 = vrot.lane.b32.xlu0 %v3459, 16
      %v3553 = vpop.permute.xlu0 %3552
      %3554 = vrot.lane.b32.xlu0 %v3460, 16
      %v3555 = vpop.permute.xlu0 %3554
      %3556 = vrot.lane.b32.xlu0 %v3461, 16
      %v3557 = vpop.permute.xlu0 %3556
      %3590 = vst.msk [vmem:[#allocation3] sm:$0xff] %vm1226, %v3495
      %3591 = vst.msk [vmem:[#allocation3 + $0x8] sm:$0xff] %vm1226, %v3497
      %3592 = vst.msk [vmem:[#allocation3 + $0x10] sm:$0xff] %vm1226, %v3499
      %3593 = vst.msk [vmem:[#allocation3 + $0x18] sm:$0xff] %vm1226, %v3501
      %3594 = vst.msk [vmem:[#allocation3 + $0x20] sm:$0xff] %vm1226, %v3503
      %3595 = vst.msk [vmem:[#allocation3 + $0x28] sm:$0xff] %vm1226, %v3505
      %3596 = vst.msk [vmem:[#allocation3 + $0x30] sm:$0xff] %vm1226, %v3507
      %3597 = vst.msk [vmem:[#allocation3 + $0x38] sm:$0xff] %vm1226, %v3509
      %3598 = vst.msk [vmem:[#allocation3 + $0x40] sm:$0xff] %vm1226, %v3511
      %3599 = vst.msk [vmem:[#allocation3 + $0x48] sm:$0xff] %vm1226, %v3513
      %3600 = vst.msk [vmem:[#allocation3 + $0x50] sm:$0xff] %vm1226, %v3515
      %3601 = vst.msk [vmem:[#allocation3 + $0x58] sm:$0xff] %vm1226, %v3517
      %3602 = vst.msk [vmem:[#allocation3 + $0x60] sm:$0xff] %vm1226, %v3519
      %3603 = vst.msk [vmem:[#allocation3 + $0x68] sm:$0xff] %vm1226, %v3521
      %3604 = vst.msk [vmem:[#allocation3 + $0x70] sm:$0xff] %vm1226, %v3523
      %3605 = vst.msk [vmem:[#allocation3 + $0x78] sm:$0xff] %vm1226, %v3525
      %3606 = vst.msk [vmem:[#allocation3 + $0x80] sm:$0xff] %vm1226, %v3527
      %3607 = vst.msk [vmem:[#allocation3 + $0x88] sm:$0xff] %vm1226, %v3529
      %3608 = vst.msk [vmem:[#allocation3 + $0x90] sm:$0xff] %vm1226, %v3531
      %3609 = vst.msk [vmem:[#allocation3 + $0x98] sm:$0xff] %vm1226, %v3533
      %3610 = vst.msk [vmem:[#allocation3 + $0xa0] sm:$0xff] %vm1226, %v3535
      %3611 = vst.msk [vmem:[#allocation3 + $0xa8] sm:$0xff] %vm1226, %v3537
      %3612 = vst.msk [vmem:[#allocation3 + $0xb0] sm:$0xff] %vm1226, %v3539
      %3613 = vst.msk [vmem:[#allocation3 + $0xb8] sm:$0xff] %vm1226, %v3541
      %3614 = vst.msk [vmem:[#allocation3 + $0xc0] sm:$0xff] %vm1226, %v3543
      %3615 = vst.msk [vmem:[#allocation3 + $0xc8] sm:$0xff] %vm1226, %v3545
      %3616 = vst.msk [vmem:[#allocation3 + $0xd0] sm:$0xff] %vm1226, %v3547
      %3617 = vst.msk [vmem:[#allocation3 + $0xd8] sm:$0xff] %vm1226, %v3549
      %3618 = vst.msk [vmem:[#allocation3 + $0xe0] sm:$0xff] %vm1226, %v3551
      %3619 = vst.msk [vmem:[#allocation3 + $0xe8] sm:$0xff] %vm1226, %v3553
      %3620 = vst.msk [vmem:[#allocation3 + $0xf0] sm:$0xff] %vm1226, %v3555
      %3621 = vst.msk [vmem:[#allocation3 + $0xf8] sm:$0xff] %vm1226, %v3557
      %v3622 = vld [vmem:[%s311 + $0x2] sm:$0xff]
      %v3623 = vld [vmem:[%s311 + $0xa] sm:$0xff]
      %v3624 = vld [vmem:[%s311 + $0x1a] sm:$0xff]
      %v3625 = vld [vmem:[%s311 + $0x22] sm:$0xff]
      %v3626 = vld [vmem:[%s311 + $0x32] sm:$0xff]
      %v3627 = vld [vmem:[%s311 + $0x3a] sm:$0xff]
      %v3628 = vld [vmem:[%s311 + $0x4a] sm:$0xff]
      %v3629 = vld [vmem:[%s311 + $0x52] sm:$0xff]
      %v3630 = vld [vmem:[%s311 + $0x62] sm:$0xff]
      %v3631 = vld [vmem:[%s311 + $0x6a] sm:$0xff]
      %v3632 = vld [vmem:[%s311 + $0x7a] sm:$0xff]
      %v3633 = vld [vmem:[%s311 + $0x82] sm:$0xff]
      %v3634 = vld [vmem:[%s311 + $0x92] sm:$0xff]
      %v3635 = vld [vmem:[%s311 + $0x9a] sm:$0xff]
      %v3636 = vld [vmem:[%s311 + $0xaa] sm:$0xff]
      %v3637 = vld [vmem:[%s311 + $0xb2] sm:$0xff]
      %v3638 = vld [vmem:[%s311 + $0xc2] sm:$0xff]
      %v3639 = vld [vmem:[%s311 + $0xca] sm:$0xff]
      %v3640 = vld [vmem:[%s311 + $0xda] sm:$0xff]
      %v3641 = vld [vmem:[%s311 + $0xe2] sm:$0xff]
      %v3642 = vld [vmem:[%s311 + $0xf2] sm:$0xff]
      %v3643 = vld [vmem:[%s311 + $0xfa] sm:$0xff]
      %v3644 = vld [vmem:[%s311 + $0x10a] sm:$0xff]
      %v3645 = vld [vmem:[%s311 + $0x112] sm:$0xff]
      %v3646 = vld [vmem:[%s311 + $0x122] sm:$0xff]
      %v3647 = vld [vmem:[%s311 + $0x12a] sm:$0xff]
      %v3648 = vld [vmem:[%s311 + $0x13a] sm:$0xff]
      %v3649 = vld [vmem:[%s311 + $0x142] sm:$0xff]
      %v3650 = vld [vmem:[%s311 + $0x152] sm:$0xff]
      %v3651 = vld [vmem:[%s311 + $0x15a] sm:$0xff]
      %v3652 = vld [vmem:[%s311 + $0x16a] sm:$0xff]
      %v3653 = vld [vmem:[%s311 + $0x172] sm:$0xff]
      %3686 = vrot.lane.b32.xlu0 %v3622, 20
      %v3687 = vpop.permute.xlu0 %3686
      %3688 = vrot.lane.b32.xlu0 %v3623, 20
      %v3689 = vpop.permute.xlu0 %3688
      %3690 = vrot.lane.b32.xlu0 %v3624, 20
      %v3691 = vpop.permute.xlu0 %3690
      %3692 = vrot.lane.b32.xlu0 %v3625, 20
      %v3693 = vpop.permute.xlu0 %3692
      %3694 = vrot.lane.b32.xlu0 %v3626, 20
      %v3695 = vpop.permute.xlu0 %3694
      %3696 = vrot.lane.b32.xlu0 %v3627, 20
      %v3697 = vpop.permute.xlu0 %3696
      %3698 = vrot.lane.b32.xlu0 %v3628, 20
      %v3699 = vpop.permute.xlu0 %3698
      %3700 = vrot.lane.b32.xlu0 %v3629, 20
      %v3701 = vpop.permute.xlu0 %3700
      %3702 = vrot.lane.b32.xlu0 %v3630, 20
      %v3703 = vpop.permute.xlu0 %3702
      %3704 = vrot.lane.b32.xlu0 %v3631, 20
      %v3705 = vpop.permute.xlu0 %3704
      %3706 = vrot.lane.b32.xlu0 %v3632, 20
      %v3707 = vpop.permute.xlu0 %3706
      %3708 = vrot.lane.b32.xlu0 %v3633, 20
      %v3709 = vpop.permute.xlu0 %3708
      %3710 = vrot.lane.b32.xlu0 %v3634, 20
      %v3711 = vpop.permute.xlu0 %3710
      %3712 = vrot.lane.b32.xlu0 %v3635, 20
      %v3713 = vpop.permute.xlu0 %3712
      %3714 = vrot.lane.b32.xlu0 %v3636, 20
      %v3715 = vpop.permute.xlu0 %3714
      %3716 = vrot.lane.b32.xlu0 %v3637, 20
      %v3717 = vpop.permute.xlu0 %3716
      %3718 = vrot.lane.b32.xlu0 %v3638, 20
      %v3719 = vpop.permute.xlu0 %3718
      %3720 = vrot.lane.b32.xlu0 %v3639, 20
      %v3721 = vpop.permute.xlu0 %3720
      %3722 = vrot.lane.b32.xlu0 %v3640, 20
      %v3723 = vpop.permute.xlu0 %3722
      %3724 = vrot.lane.b32.xlu0 %v3641, 20
      %v3725 = vpop.permute.xlu0 %3724
      %3726 = vrot.lane.b32.xlu0 %v3642, 20
      %v3727 = vpop.permute.xlu0 %3726
      %3728 = vrot.lane.b32.xlu0 %v3643, 20
      %v3729 = vpop.permute.xlu0 %3728
      %3730 = vrot.lane.b32.xlu0 %v3644, 20
      %v3731 = vpop.permute.xlu0 %3730
      %3732 = vrot.lane.b32.xlu0 %v3645, 20
      %v3733 = vpop.permute.xlu0 %3732
      %3734 = vrot.lane.b32.xlu0 %v3646, 20
      %v3735 = vpop.permute.xlu0 %3734
      %3736 = vrot.lane.b32.xlu0 %v3647, 20
      %v3737 = vpop.permute.xlu0 %3736
      %3738 = vrot.lane.b32.xlu0 %v3648, 20
      %v3739 = vpop.permute.xlu0 %3738
      %3740 = vrot.lane.b32.xlu0 %v3649, 20
      %v3741 = vpop.permute.xlu0 %3740
      %3742 = vrot.lane.b32.xlu0 %v3650, 20
      %v3743 = vpop.permute.xlu0 %3742
      %3744 = vrot.lane.b32.xlu0 %v3651, 20
      %v3745 = vpop.permute.xlu0 %3744
      %3746 = vrot.lane.b32.xlu0 %v3652, 20
      %v3747 = vpop.permute.xlu0 %3746
      %3748 = vrot.lane.b32.xlu0 %v3653, 20
      %v3749 = vpop.permute.xlu0 %3748
      %3782 = vst.msk [vmem:[#allocation3] sm:$0xff] %vm1419, %v3687
      %3783 = vst.msk [vmem:[#allocation3 + $0x8] sm:$0xff] %vm1419, %v3689
      %3784 = vst.msk [vmem:[#allocation3 + $0x10] sm:$0xff] %vm1419, %v3691
      %3785 = vst.msk [vmem:[#allocation3 + $0x18] sm:$0xff] %vm1419, %v3693
      %3786 = vst.msk [vmem:[#allocation3 + $0x20] sm:$0xff] %vm1419, %v3695
      %3787 = vst.msk [vmem:[#allocation3 + $0x28] sm:$0xff] %vm1419, %v3697
      %3788 = vst.msk [vmem:[#allocation3 + $0x30] sm:$0xff] %vm1419, %v3699
      %3789 = vst.msk [vmem:[#allocation3 + $0x38] sm:$0xff] %vm1419, %v3701
      %3790 = vst.msk [vmem:[#allocation3 + $0x40] sm:$0xff] %vm1419, %v3703
      %3791 = vst.msk [vmem:[#allocation3 + $0x48] sm:$0xff] %vm1419, %v3705
      %3792 = vst.msk [vmem:[#allocation3 + $0x50] sm:$0xff] %vm1419, %v3707
      %3793 = vst.msk [vmem:[#allocation3 + $0x58] sm:$0xff] %vm1419, %v3709
      %3794 = vst.msk [vmem:[#allocation3 + $0x60] sm:$0xff] %vm1419, %v3711
      %3795 = vst.msk [vmem:[#allocation3 + $0x68] sm:$0xff] %vm1419, %v3713
      %3796 = vst.msk [vmem:[#allocation3 + $0x70] sm:$0xff] %vm1419, %v3715
      %3797 = vst.msk [vmem:[#allocation3 + $0x78] sm:$0xff] %vm1419, %v3717
      %3798 = vst.msk [vmem:[#allocation3 + $0x80] sm:$0xff] %vm1419, %v3719
      %3799 = vst.msk [vmem:[#allocation3 + $0x88] sm:$0xff] %vm1419, %v3721
      %3800 = vst.msk [vmem:[#allocation3 + $0x90] sm:$0xff] %vm1419, %v3723
      %3801 = vst.msk [vmem:[#allocation3 + $0x98] sm:$0xff] %vm1419, %v3725
      %3802 = vst.msk [vmem:[#allocation3 + $0xa0] sm:$0xff] %vm1419, %v3727
      %3803 = vst.msk [vmem:[#allocation3 + $0xa8] sm:$0xff] %vm1419, %v3729
      %3804 = vst.msk [vmem:[#allocation3 + $0xb0] sm:$0xff] %vm1419, %v3731
      %3805 = vst.msk [vmem:[#allocation3 + $0xb8] sm:$0xff] %vm1419, %v3733
      %3806 = vst.msk [vmem:[#allocation3 + $0xc0] sm:$0xff] %vm1419, %v3735
      %3807 = vst.msk [vmem:[#allocation3 + $0xc8] sm:$0xff] %vm1419, %v3737
      %3808 = vst.msk [vmem:[#allocation3 + $0xd0] sm:$0xff] %vm1419, %v3739
      %3809 = vst.msk [vmem:[#allocation3 + $0xd8] sm:$0xff] %vm1419, %v3741
      %3810 = vst.msk [vmem:[#allocation3 + $0xe0] sm:$0xff] %vm1419, %v3743
      %3811 = vst.msk [vmem:[#allocation3 + $0xe8] sm:$0xff] %vm1419, %v3745
      %3812 = vst.msk [vmem:[#allocation3 + $0xf0] sm:$0xff] %vm1419, %v3747
      %3813 = vst.msk [vmem:[#allocation3 + $0xf8] sm:$0xff] %vm1419, %v3749
      %v3814 = vld [vmem:[%s1452] sm:$0xff]
      %v3815 = vld [vmem:[%s1452 + $0x8] sm:$0xff]
      %v3816 = vld [vmem:[%s1452 + $0x18] sm:$0xff]
      %v3817 = vld [vmem:[%s1452 + $0x20] sm:$0xff]
      %v3818 = vld [vmem:[%s1452 + $0x30] sm:$0xff]
      %v3819 = vld [vmem:[%s1452 + $0x38] sm:$0xff]
      %v3820 = vld [vmem:[%s1452 + $0x48] sm:$0xff]
      %v3821 = vld [vmem:[%s1452 + $0x50] sm:$0xff]
      %v3822 = vld [vmem:[%s1452 + $0x60] sm:$0xff]
      %v3823 = vld [vmem:[%s1452 + $0x68] sm:$0xff]
      %v3824 = vld [vmem:[%s1452 + $0x78] sm:$0xff]
      %v3825 = vld [vmem:[%s1452 + $0x80] sm:$0xff]
      %v3826 = vld [vmem:[%s1452 + $0x90] sm:$0xff]
      %v3827 = vld [vmem:[%s1452 + $0x98] sm:$0xff]
      %v3828 = vld [vmem:[%s1452 + $0xa8] sm:$0xff]
      %v3829 = vld [vmem:[%s1452 + $0xb0] sm:$0xff]
      %v3830 = vld [vmem:[%s1452 + $0xc0] sm:$0xff]
      %v3831 = vld [vmem:[%s1452 + $0xc8] sm:$0xff]
      %v3832 = vld [vmem:[%s1452 + $0xd8] sm:$0xff]
      %v3833 = vld [vmem:[%s1452 + $0xe0] sm:$0xff]
      %v3834 = vld [vmem:[%s1452 + $0xf0] sm:$0xff]
      %v3835 = vld [vmem:[%s1452 + $0xf8] sm:$0xff]
      %v3836 = vld [vmem:[%s1452 + $0x108] sm:$0xff]
      %v3837 = vld [vmem:[%s1452 + $0x110] sm:$0xff]
      %v3838 = vld [vmem:[%s1452 + $0x120] sm:$0xff]
      %v3839 = vld [vmem:[%s1452 + $0x128] sm:$0xff]
      %v3840 = vld [vmem:[%s1452 + $0x138] sm:$0xff]
      %v3841 = vld [vmem:[%s1452 + $0x140] sm:$0xff]
      %v3842 = vld [vmem:[%s1452 + $0x150] sm:$0xff]
      %v3843 = vld [vmem:[%s1452 + $0x158] sm:$0xff]
      %v3844 = vld [vmem:[%s1452 + $0x168] sm:$0xff]
      %v3845 = vld [vmem:[%s1452 + $0x170] sm:$0xff]
      %3878 = vrot.lane.b32.xlu0 %v3814, 24
      %v3879 = vpop.permute.xlu0 %3878
      %3880 = vrot.lane.b32.xlu0 %v3815, 24
      %v3881 = vpop.permute.xlu0 %3880
      %3882 = vrot.lane.b32.xlu0 %v3816, 24
      %v3883 = vpop.permute.xlu0 %3882
      %3884 = vrot.lane.b32.xlu0 %v3817, 24
      %v3885 = vpop.permute.xlu0 %3884
      %3886 = vrot.lane.b32.xlu0 %v3818, 24
      %v3887 = vpop.permute.xlu0 %3886
      %3888 = vrot.lane.b32.xlu0 %v3819, 24
      %v3889 = vpop.permute.xlu0 %3888
      %3890 = vrot.lane.b32.xlu0 %v3820, 24
      %v3891 = vpop.permute.xlu0 %3890
      %3892 = vrot.lane.b32.xlu0 %v3821, 24
      %v3893 = vpop.permute.xlu0 %3892
      %3894 = vrot.lane.b32.xlu0 %v3822, 24
      %v3895 = vpop.permute.xlu0 %3894
      %3896 = vrot.lane.b32.xlu0 %v3823, 24
      %v3897 = vpop.permute.xlu0 %3896
      %3898 = vrot.lane.b32.xlu0 %v3824, 24
      %v3899 = vpop.permute.xlu0 %3898
      %3900 = vrot.lane.b32.xlu0 %v3825, 24
      %v3901 = vpop.permute.xlu0 %3900
      %3902 = vrot.lane.b32.xlu0 %v3826, 24
      %v3903 = vpop.permute.xlu0 %3902
      %3904 = vrot.lane.b32.xlu0 %v3827, 24
      %v3905 = vpop.permute.xlu0 %3904
      %3906 = vrot.lane.b32.xlu0 %v3828, 24
      %v3907 = vpop.permute.xlu0 %3906
      %3908 = vrot.lane.b32.xlu0 %v3829, 24
      %v3909 = vpop.permute.xlu0 %3908
      %3910 = vrot.lane.b32.xlu0 %v3830, 24
      %v3911 = vpop.permute.xlu0 %3910
      %3912 = vrot.lane.b32.xlu0 %v3831, 24
      %v3913 = vpop.permute.xlu0 %3912
      %3914 = vrot.lane.b32.xlu0 %v3832, 24
      %v3915 = vpop.permute.xlu0 %3914
      %3916 = vrot.lane.b32.xlu0 %v3833, 24
      %v3917 = vpop.permute.xlu0 %3916
      %3918 = vrot.lane.b32.xlu0 %v3834, 24
      %v3919 = vpop.permute.xlu0 %3918
      %3920 = vrot.lane.b32.xlu0 %v3835, 24
      %v3921 = vpop.permute.xlu0 %3920
      %3922 = vrot.lane.b32.xlu0 %v3836, 24
      %v3923 = vpop.permute.xlu0 %3922
      %3924 = vrot.lane.b32.xlu0 %v3837, 24
      %v3925 = vpop.permute.xlu0 %3924
      %3926 = vrot.lane.b32.xlu0 %v3838, 24
      %v3927 = vpop.permute.xlu0 %3926
      %3928 = vrot.lane.b32.xlu0 %v3839, 24
      %v3929 = vpop.permute.xlu0 %3928
      %3930 = vrot.lane.b32.xlu0 %v3840, 24
      %v3931 = vpop.permute.xlu0 %3930
      %3932 = vrot.lane.b32.xlu0 %v3841, 24
      %v3933 = vpop.permute.xlu0 %3932
      %3934 = vrot.lane.b32.xlu0 %v3842, 24
      %v3935 = vpop.permute.xlu0 %3934
      %3936 = vrot.lane.b32.xlu0 %v3843, 24
      %v3937 = vpop.permute.xlu0 %3936
      %3938 = vrot.lane.b32.xlu0 %v3844, 24
      %v3939 = vpop.permute.xlu0 %3938
      %3940 = vrot.lane.b32.xlu0 %v3845, 24
      %v3941 = vpop.permute.xlu0 %3940
      %3974 = vst.msk [vmem:[#allocation3] sm:$0xff] %vm1613, %v3879
      %3975 = vst.msk [vmem:[#allocation3 + $0x8] sm:$0xff] %vm1613, %v3881
      %3976 = vst.msk [vmem:[#allocation3 + $0x10] sm:$0xff] %vm1613, %v3883
      %3977 = vst.msk [vmem:[#allocation3 + $0x18] sm:$0xff] %vm1613, %v3885
      %3978 = vst.msk [vmem:[#allocation3 + $0x20] sm:$0xff] %vm1613, %v3887
      %3979 = vst.msk [vmem:[#allocation3 + $0x28] sm:$0xff] %vm1613, %v3889
      %3980 = vst.msk [vmem:[#allocation3 + $0x30] sm:$0xff] %vm1613, %v3891
      %3981 = vst.msk [vmem:[#allocation3 + $0x38] sm:$0xff] %vm1613, %v3893
      %3982 = vst.msk [vmem:[#allocation3 + $0x40] sm:$0xff] %vm1613, %v3895
      %3983 = vst.msk [vmem:[#allocation3 + $0x48] sm:$0xff] %vm1613, %v3897
      %3984 = vst.msk [vmem:[#allocation3 + $0x50] sm:$0xff] %vm1613, %v3899
      %3985 = vst.msk [vmem:[#allocation3 + $0x58] sm:$0xff] %vm1613, %v3901
      %3986 = vst.msk [vmem:[#allocation3 + $0x60] sm:$0xff] %vm1613, %v3903
      %3987 = vst.msk [vmem:[#allocation3 + $0x68] sm:$0xff] %vm1613, %v3905
      %3988 = vst.msk [vmem:[#allocation3 + $0x70] sm:$0xff] %vm1613, %v3907
      %3989 = vst.msk [vmem:[#allocation3 + $0x78] sm:$0xff] %vm1613, %v3909
      %3990 = vst.msk [vmem:[#allocation3 + $0x80] sm:$0xff] %vm1613, %v3911
      %3991 = vst.msk [vmem:[#allocation3 + $0x88] sm:$0xff] %vm1613, %v3913
      %3992 = vst.msk [vmem:[#allocation3 + $0x90] sm:$0xff] %vm1613, %v3915
      %3993 = vst.msk [vmem:[#allocation3 + $0x98] sm:$0xff] %vm1613, %v3917
      %3994 = vst.msk [vmem:[#allocation3 + $0xa0] sm:$0xff] %vm1613, %v3919
      %3995 = vst.msk [vmem:[#allocation3 + $0xa8] sm:$0xff] %vm1613, %v3921
      %3996 = vst.msk [vmem:[#allocation3 + $0xb0] sm:$0xff] %vm1613, %v3923
      %3997 = vst.msk [vmem:[#allocation3 + $0xb8] sm:$0xff] %vm1613, %v3925
      %3998 = vst.msk [vmem:[#allocation3 + $0xc0] sm:$0xff] %vm1613, %v3927
      %3999 = vst.msk [vmem:[#allocation3 + $0xc8] sm:$0xff] %vm1613, %v3929
      %4000 = vst.msk [vmem:[#allocation3 + $0xd0] sm:$0xff] %vm1613, %v3931
      %4001 = vst.msk [vmem:[#allocation3 + $0xd8] sm:$0xff] %vm1613, %v3933
      %4002 = vst.msk [vmem:[#allocation3 + $0xe0] sm:$0xff] %vm1613, %v3935
      %4003 = vst.msk [vmem:[#allocation3 + $0xe8] sm:$0xff] %vm1613, %v3937
      %4004 = vst.msk [vmem:[#allocation3 + $0xf0] sm:$0xff] %vm1613, %v3939
      %4005 = vst.msk [vmem:[#allocation3 + $0xf8] sm:$0xff] %vm1613, %v3941
      %v4006 = vld [vmem:[%s1452 + $0x1] sm:$0xff]
      %v4007 = vld [vmem:[%s1452 + $0x9] sm:$0xff]
      %v4008 = vld [vmem:[%s1452 + $0x19] sm:$0xff]
      %v4009 = vld [vmem:[%s1452 + $0x21] sm:$0xff]
      %v4010 = vld [vmem:[%s1452 + $0x31] sm:$0xff]
      %v4011 = vld [vmem:[%s1452 + $0x39] sm:$0xff]
      %v4012 = vld [vmem:[%s1452 + $0x49] sm:$0xff]
      %v4013 = vld [vmem:[%s1452 + $0x51] sm:$0xff]
      %v4014 = vld [vmem:[%s1452 + $0x61] sm:$0xff]
      %v4015 = vld [vmem:[%s1452 + $0x69] sm:$0xff]
      %v4016 = vld [vmem:[%s1452 + $0x79] sm:$0xff]
      %v4017 = vld [vmem:[%s1452 + $0x81] sm:$0xff]
      %v4018 = vld [vmem:[%s1452 + $0x91] sm:$0xff]
      %v4019 = vld [vmem:[%s1452 + $0x99] sm:$0xff]
      %v4020 = vld [vmem:[%s1452 + $0xa9] sm:$0xff]
      %v4021 = vld [vmem:[%s1452 + $0xb1] sm:$0xff]
      %v4022 = vld [vmem:[%s1452 + $0xc1] sm:$0xff]
      %v4023 = vld [vmem:[%s1452 + $0xc9] sm:$0xff]
      %v4024 = vld [vmem:[%s1452 + $0xd9] sm:$0xff]
      %v4025 = vld [vmem:[%s1452 + $0xe1] sm:$0xff]
      %v4026 = vld [vmem:[%s1452 + $0xf1] sm:$0xff]
      %v4027 = vld [vmem:[%s1452 + $0xf9] sm:$0xff]
      %v4028 = vld [vmem:[%s1452 + $0x109] sm:$0xff]
      %v4029 = vld [vmem:[%s1452 + $0x111] sm:$0xff]
      %v4030 = vld [vmem:[%s1452 + $0x121] sm:$0xff]
      %v4031 = vld [vmem:[%s1452 + $0x129] sm:$0xff]
      %v4032 = vld [vmem:[%s1452 + $0x139] sm:$0xff]
      %v4033 = vld [vmem:[%s1452 + $0x141] sm:$0xff]
      %v4034 = vld [vmem:[%s1452 + $0x151] sm:$0xff]
      %v4035 = vld [vmem:[%s1452 + $0x159] sm:$0xff]
      %v4036 = vld [vmem:[%s1452 + $0x169] sm:$0xff]
      %v4037 = vld [vmem:[%s1452 + $0x171] sm:$0xff]
      %4070 = vrot.lane.b32.xlu0 %v4006, 28
      %v4071 = vpop.permute.xlu0 %4070
      %4072 = vrot.lane.b32.xlu0 %v4007, 28
      %v4073 = vpop.permute.xlu0 %4072
      %4074 = vrot.lane.b32.xlu0 %v4008, 28
      %v4075 = vpop.permute.xlu0 %4074
      %4076 = vrot.lane.b32.xlu0 %v4009, 28
      %v4077 = vpop.permute.xlu0 %4076
      %4078 = vrot.lane.b32.xlu0 %v4010, 28
      %v4079 = vpop.permute.xlu0 %4078
      %4080 = vrot.lane.b32.xlu0 %v4011, 28
      %v4081 = vpop.permute.xlu0 %4080
      %4082 = vrot.lane.b32.xlu0 %v4012, 28
      %v4083 = vpop.permute.xlu0 %4082
      %4084 = vrot.lane.b32.xlu0 %v4013, 28
      %v4085 = vpop.permute.xlu0 %4084
      %4086 = vrot.lane.b32.xlu0 %v4014, 28
      %v4087 = vpop.permute.xlu0 %4086
      %4088 = vrot.lane.b32.xlu0 %v4015, 28
      %v4089 = vpop.permute.xlu0 %4088
      %4090 = vrot.lane.b32.xlu0 %v4016, 28
      %v4091 = vpop.permute.xlu0 %4090
      %4092 = vrot.lane.b32.xlu0 %v4017, 28
      %v4093 = vpop.permute.xlu0 %4092
      %4094 = vrot.lane.b32.xlu0 %v4018, 28
      %v4095 = vpop.permute.xlu0 %4094
      %4096 = vrot.lane.b32.xlu0 %v4019, 28
      %v4097 = vpop.permute.xlu0 %4096
      %4098 = vrot.lane.b32.xlu0 %v4020, 28
      %v4099 = vpop.permute.xlu0 %4098
      %4100 = vrot.lane.b32.xlu0 %v4021, 28
      %v4101 = vpop.permute.xlu0 %4100
      %4102 = vrot.lane.b32.xlu0 %v4022, 28
      %v4103 = vpop.permute.xlu0 %4102
      %4104 = vrot.lane.b32.xlu0 %v4023, 28
      %v4105 = vpop.permute.xlu0 %4104
      %4106 = vrot.lane.b32.xlu0 %v4024, 28
      %v4107 = vpop.permute.xlu0 %4106
      %4108 = vrot.lane.b32.xlu0 %v4025, 28
      %v4109 = vpop.permute.xlu0 %4108
      %4110 = vrot.lane.b32.xlu0 %v4026, 28
      %v4111 = vpop.permute.xlu0 %4110
      %4112 = vrot.lane.b32.xlu0 %v4027, 28
      %v4113 = vpop.permute.xlu0 %4112
      %4114 = vrot.lane.b32.xlu0 %v4028, 28
      %v4115 = vpop.permute.xlu0 %4114
      %4116 = vrot.lane.b32.xlu0 %v4029, 28
      %v4117 = vpop.permute.xlu0 %4116
      %4118 = vrot.lane.b32.xlu0 %v4030, 28
      %v4119 = vpop.permute.xlu0 %4118
      %4120 = vrot.lane.b32.xlu0 %v4031, 28
      %v4121 = vpop.permute.xlu0 %4120
      %4122 = vrot.lane.b32.xlu0 %v4032, 28
      %v4123 = vpop.permute.xlu0 %4122
      %4124 = vrot.lane.b32.xlu0 %v4033, 28
      %v4125 = vpop.permute.xlu0 %4124
      %4126 = vrot.lane.b32.xlu0 %v4034, 28
      %v4127 = vpop.permute.xlu0 %4126
      %4128 = vrot.lane.b32.xlu0 %v4035, 28
      %v4129 = vpop.permute.xlu0 %4128
      %4130 = vrot.lane.b32.xlu0 %v4036, 28
      %v4131 = vpop.permute.xlu0 %4130
      %4132 = vrot.lane.b32.xlu0 %v4037, 28
      %v4133 = vpop.permute.xlu0 %4132
      %4166 = vst.msk [vmem:[#allocation3] sm:$0xff] %vm1806, %v4071
      %4167 = vst.msk [vmem:[#allocation3 + $0x8] sm:$0xff] %vm1806, %v4073
      %4168 = vst.msk [vmem:[#allocation3 + $0x10] sm:$0xff] %vm1806, %v4075
      %4169 = vst.msk [vmem:[#allocation3 + $0x18] sm:$0xff] %vm1806, %v4077
      %4170 = vst.msk [vmem:[#allocation3 + $0x20] sm:$0xff] %vm1806, %v4079
      %4171 = vst.msk [vmem:[#allocation3 + $0x28] sm:$0xff] %vm1806, %v4081
      %4172 = vst.msk [vmem:[#allocation3 + $0x30] sm:$0xff] %vm1806, %v4083
      %4173 = vst.msk [vmem:[#allocation3 + $0x38] sm:$0xff] %vm1806, %v4085
      %4174 = vst.msk [vmem:[#allocation3 + $0x40] sm:$0xff] %vm1806, %v4087
      %4175 = vst.msk [vmem:[#allocation3 + $0x48] sm:$0xff] %vm1806, %v4089
      %4176 = vst.msk [vmem:[#allocation3 + $0x50] sm:$0xff] %vm1806, %v4091
      %4177 = vst.msk [vmem:[#allocation3 + $0x58] sm:$0xff] %vm1806, %v4093
      %4178 = vst.msk [vmem:[#allocation3 + $0x60] sm:$0xff] %vm1806, %v4095
      %4179 = vst.msk [vmem:[#allocation3 + $0x68] sm:$0xff] %vm1806, %v4097
      %4180 = vst.msk [vmem:[#allocation3 + $0x70] sm:$0xff] %vm1806, %v4099
      %4181 = vst.msk [vmem:[#allocation3 + $0x78] sm:$0xff] %vm1806, %v4101
      %4182 = vst.msk [vmem:[#allocation3 + $0x80] sm:$0xff] %vm1806, %v4103
      %4183 = vst.msk [vmem:[#allocation3 + $0x88] sm:$0xff] %vm1806, %v4105
      %4184 = vst.msk [vmem:[#allocation3 + $0x90] sm:$0xff] %vm1806, %v4107
      %4185 = vst.msk [vmem:[#allocation3 + $0x98] sm:$0xff] %vm1806, %v4109
      %4186 = vst.msk [vmem:[#allocation3 + $0xa0] sm:$0xff] %vm1806, %v4111
      %4187 = vst.msk [vmem:[#allocation3 + $0xa8] sm:$0xff] %vm1806, %v4113
      %4188 = vst.msk [vmem:[#allocation3 + $0xb0] sm:$0xff] %vm1806, %v4115
      %4189 = vst.msk [vmem:[#allocation3 + $0xb8] sm:$0xff] %vm1806, %v4117
      %4190 = vst.msk [vmem:[#allocation3 + $0xc0] sm:$0xff] %vm1806, %v4119
      %4191 = vst.msk [vmem:[#allocation3 + $0xc8] sm:$0xff] %vm1806, %v4121
      %4192 = vst.msk [vmem:[#allocation3 + $0xd0] sm:$0xff] %vm1806, %v4123
      %4193 = vst.msk [vmem:[#allocation3 + $0xd8] sm:$0xff] %vm1806, %v4125
      %4194 = vst.msk [vmem:[#allocation3 + $0xe0] sm:$0xff] %vm1806, %v4127
      %4195 = vst.msk [vmem:[#allocation3 + $0xe8] sm:$0xff] %vm1806, %v4129
      %4196 = vst.msk [vmem:[#allocation3 + $0xf0] sm:$0xff] %vm1806, %v4131
      %4197 = vst.msk [vmem:[#allocation3 + $0xf8] sm:$0xff] %vm1806, %v4133
      %v4198 = vld [vmem:[%s1452 + $0x2] sm:$0xff]
      %v4199 = vld [vmem:[%s1452 + $0xa] sm:$0xff]
      %v4200 = vld [vmem:[%s1452 + $0x1a] sm:$0xff]
      %v4201 = vld [vmem:[%s1452 + $0x22] sm:$0xff]
      %v4202 = vld [vmem:[%s1452 + $0x32] sm:$0xff]
      %v4203 = vld [vmem:[%s1452 + $0x3a] sm:$0xff]
      %v4204 = vld [vmem:[%s1452 + $0x4a] sm:$0xff]
      %v4205 = vld [vmem:[%s1452 + $0x52] sm:$0xff]
      %v4206 = vld [vmem:[%s1452 + $0x62] sm:$0xff]
      %v4207 = vld [vmem:[%s1452 + $0x6a] sm:$0xff]
      %v4208 = vld [vmem:[%s1452 + $0x7a] sm:$0xff]
      %v4209 = vld [vmem:[%s1452 + $0x82] sm:$0xff]
      %v4210 = vld [vmem:[%s1452 + $0x92] sm:$0xff]
      %v4211 = vld [vmem:[%s1452 + $0x9a] sm:$0xff]
      %v4212 = vld [vmem:[%s1452 + $0xaa] sm:$0xff]
      %v4213 = vld [vmem:[%s1452 + $0xb2] sm:$0xff]
      %v4214 = vld [vmem:[%s1452 + $0xc2] sm:$0xff]
      %v4215 = vld [vmem:[%s1452 + $0xca] sm:$0xff]
      %v4216 = vld [vmem:[%s1452 + $0xda] sm:$0xff]
      %v4217 = vld [vmem:[%s1452 + $0xe2] sm:$0xff]
      %v4218 = vld [vmem:[%s1452 + $0xf2] sm:$0xff]
      %v4219 = vld [vmem:[%s1452 + $0xfa] sm:$0xff]
      %v4220 = vld [vmem:[%s1452 + $0x10a] sm:$0xff]
      %v4221 = vld [vmem:[%s1452 + $0x112] sm:$0xff]
      %v4222 = vld [vmem:[%s1452 + $0x122] sm:$0xff]
      %v4223 = vld [vmem:[%s1452 + $0x12a] sm:$0xff]
      %v4224 = vld [vmem:[%s1452 + $0x13a] sm:$0xff]
      %v4225 = vld [vmem:[%s1452 + $0x142] sm:$0xff]
      %v4226 = vld [vmem:[%s1452 + $0x152] sm:$0xff]
      %v4227 = vld [vmem:[%s1452 + $0x15a] sm:$0xff]
      %v4228 = vld [vmem:[%s1452 + $0x16a] sm:$0xff]
      %v4229 = vld [vmem:[%s1452 + $0x172] sm:$0xff]
      %4262 = vrot.lane.b32.xlu0 %v4198, 32
      %v4263 = vpop.permute.xlu0 %4262
      %4264 = vrot.lane.b32.xlu0 %v4199, 32
      %v4265 = vpop.permute.xlu0 %4264
      %4266 = vrot.lane.b32.xlu0 %v4200, 32
      %v4267 = vpop.permute.xlu0 %4266
      %4268 = vrot.lane.b32.xlu0 %v4201, 32
      %v4269 = vpop.permute.xlu0 %4268
      %4270 = vrot.lane.b32.xlu0 %v4202, 32
      %v4271 = vpop.permute.xlu0 %4270
      %4272 = vrot.lane.b32.xlu0 %v4203, 32
      %v4273 = vpop.permute.xlu0 %4272
      %4274 = vrot.lane.b32.xlu0 %v4204, 32
      %v4275 = vpop.permute.xlu0 %4274
      %4276 = vrot.lane.b32.xlu0 %v4205, 32
      %v4277 = vpop.permute.xlu0 %4276
      %4278 = vrot.lane.b32.xlu0 %v4206, 32
      %v4279 = vpop.permute.xlu0 %4278
      %4280 = vrot.lane.b32.xlu0 %v4207, 32
      %v4281 = vpop.permute.xlu0 %4280
      %4282 = vrot.lane.b32.xlu0 %v4208, 32
      %v4283 = vpop.permute.xlu0 %4282
      %4284 = vrot.lane.b32.xlu0 %v4209, 32
      %v4285 = vpop.permute.xlu0 %4284
      %4286 = vrot.lane.b32.xlu0 %v4210, 32
      %v4287 = vpop.permute.xlu0 %4286
      %4288 = vrot.lane.b32.xlu0 %v4211, 32
      %v4289 = vpop.permute.xlu0 %4288
      %4290 = vrot.lane.b32.xlu0 %v4212, 32
      %v4291 = vpop.permute.xlu0 %4290
      %4292 = vrot.lane.b32.xlu0 %v4213, 32
      %v4293 = vpop.permute.xlu0 %4292
      %4294 = vrot.lane.b32.xlu0 %v4214, 32
      %v4295 = vpop.permute.xlu0 %4294
      %4296 = vrot.lane.b32.xlu0 %v4215, 32
      %v4297 = vpop.permute.xlu0 %4296
      %4298 = vrot.lane.b32.xlu0 %v4216, 32
      %v4299 = vpop.permute.xlu0 %4298
      %4300 = vrot.lane.b32.xlu0 %v4217, 32
      %v4301 = vpop.permute.xlu0 %4300
      %4302 = vrot.lane.b32.xlu0 %v4218, 32
      %v4303 = vpop.permute.xlu0 %4302
      %4304 = vrot.lane.b32.xlu0 %v4219, 32
      %v4305 = vpop.permute.xlu0 %4304
      %4306 = vrot.lane.b32.xlu0 %v4220, 32
      %v4307 = vpop.permute.xlu0 %4306
      %4308 = vrot.lane.b32.xlu0 %v4221, 32
      %v4309 = vpop.permute.xlu0 %4308
      %4310 = vrot.lane.b32.xlu0 %v4222, 32
      %v4311 = vpop.permute.xlu0 %4310
      %4312 = vrot.lane.b32.xlu0 %v4223, 32
      %v4313 = vpop.permute.xlu0 %4312
      %4314 = vrot.lane.b32.xlu0 %v4224, 32
      %v4315 = vpop.permute.xlu0 %4314
      %4316 = vrot.lane.b32.xlu0 %v4225, 32
      %v4317 = vpop.permute.xlu0 %4316
      %4318 = vrot.lane.b32.xlu0 %v4226, 32
      %v4319 = vpop.permute.xlu0 %4318
      %4320 = vrot.lane.b32.xlu0 %v4227, 32
      %v4321 = vpop.permute.xlu0 %4320
      %4322 = vrot.lane.b32.xlu0 %v4228, 32
      %v4323 = vpop.permute.xlu0 %4322
      %4324 = vrot.lane.b32.xlu0 %v4229, 32
      %v4325 = vpop.permute.xlu0 %4324
      %4358 = vst.msk [vmem:[#allocation3] sm:$0xff] %vm1999, %v4263
      %4359 = vst.msk [vmem:[#allocation3 + $0x8] sm:$0xff] %vm1999, %v4265
      %4360 = vst.msk [vmem:[#allocation3 + $0x10] sm:$0xff] %vm1999, %v4267
      %4361 = vst.msk [vmem:[#allocation3 + $0x18] sm:$0xff] %vm1999, %v4269
      %4362 = vst.msk [vmem:[#allocation3 + $0x20] sm:$0xff] %vm1999, %v4271
      %4363 = vst.msk [vmem:[#allocation3 + $0x28] sm:$0xff] %vm1999, %v4273
      %4364 = vst.msk [vmem:[#allocation3 + $0x30] sm:$0xff] %vm1999, %v4275
      %4365 = vst.msk [vmem:[#allocation3 + $0x38] sm:$0xff] %vm1999, %v4277
      %4366 = vst.msk [vmem:[#allocation3 + $0x40] sm:$0xff] %vm1999, %v4279
      %4367 = vst.msk [vmem:[#allocation3 + $0x48] sm:$0xff] %vm1999, %v4281
      %4368 = vst.msk [vmem:[#allocation3 + $0x50] sm:$0xff] %vm1999, %v4283
      %4369 = vst.msk [vmem:[#allocation3 + $0x58] sm:$0xff] %vm1999, %v4285
      %4370 = vst.msk [vmem:[#allocation3 + $0x60] sm:$0xff] %vm1999, %v4287
      %4371 = vst.msk [vmem:[#allocation3 + $0x68] sm:$0xff] %vm1999, %v4289
      %4372 = vst.msk [vmem:[#allocation3 + $0x70] sm:$0xff] %vm1999, %v4291
      %4373 = vst.msk [vmem:[#allocation3 + $0x78] sm:$0xff] %vm1999, %v4293
      %4374 = vst.msk [vmem:[#allocation3 + $0x80] sm:$0xff] %vm1999, %v4295
      %4375 = vst.msk [vmem:[#allocation3 + $0x88] sm:$0xff] %vm1999, %v4297
      %4376 = vst.msk [vmem:[#allocation3 + $0x90] sm:$0xff] %vm1999, %v4299
      %4377 = vst.msk [vmem:[#allocation3 + $0x98] sm:$0xff] %vm1999, %v4301
      %4378 = vst.msk [vmem:[#allocation3 + $0xa0] sm:$0xff] %vm1999, %v4303
      %4379 = vst.msk [vmem:[#allocation3 + $0xa8] sm:$0xff] %vm1999, %v4305
      %4380 = vst.msk [vmem:[#allocation3 + $0xb0] sm:$0xff] %vm1999, %v4307
      %4381 = vst.msk [vmem:[#allocation3 + $0xb8] sm:$0xff] %vm1999, %v4309
      %4382 = vst.msk [vmem:[#allocation3 + $0xc0] sm:$0xff] %vm1999, %v4311
      %4383 = vst.msk [vmem:[#allocation3 + $0xc8] sm:$0xff] %vm1999, %v4313
      %4384 = vst.msk [vmem:[#allocation3 + $0xd0] sm:$0xff] %vm1999, %v4315
      %4385 = vst.msk [vmem:[#allocation3 + $0xd8] sm:$0xff] %vm1999, %v4317
      %4386 = vst.msk [vmem:[#allocation3 + $0xe0] sm:$0xff] %vm1999, %v4319
      %4387 = vst.msk [vmem:[#allocation3 + $0xe8] sm:$0xff] %vm1999, %v4321
      %4388 = vst.msk [vmem:[#allocation3 + $0xf0] sm:$0xff] %vm1999, %v4323
      %4389 = vst.msk [vmem:[#allocation3 + $0xf8] sm:$0xff] %vm1999, %v4325
      %v4390 = vld [vmem:[#allocation3] sm:$0xff]
      %v4391 = vld [vmem:[#allocation3 + $0x8] sm:$0xff]
      %v4392 = vld [vmem:[#allocation3 + $0x10] sm:$0xff]
      %v4393 = vld [vmem:[#allocation3 + $0x18] sm:$0xff]
      %v4394 = vld [vmem:[#allocation3 + $0x20] sm:$0xff]
      %v4395 = vld [vmem:[#allocation3 + $0x28] sm:$0xff]
      %v4396 = vld [vmem:[#allocation3 + $0x30] sm:$0xff]
      %v4397 = vld [vmem:[#allocation3 + $0x38] sm:$0xff]
      %v4398 = vld [vmem:[#allocation3 + $0x40] sm:$0xff]
      %v4399 = vld [vmem:[#allocation3 + $0x48] sm:$0xff]
      %v4400 = vld [vmem:[#allocation3 + $0x50] sm:$0xff]
      %v4401 = vld [vmem:[#allocation3 + $0x58] sm:$0xff]
      %v4402 = vld [vmem:[#allocation3 + $0x60] sm:$0xff]
      %v4403 = vld [vmem:[#allocation3 + $0x68] sm:$0xff]
      %v4404 = vld [vmem:[#allocation3 + $0x70] sm:$0xff]
      %v4405 = vld [vmem:[#allocation3 + $0x78] sm:$0xff]
      %v4406 = vld [vmem:[#allocation3 + $0x80] sm:$0xff]
      %v4407 = vld [vmem:[#allocation3 + $0x88] sm:$0xff]
      %v4408 = vld [vmem:[#allocation3 + $0x90] sm:$0xff]
      %v4409 = vld [vmem:[#allocation3 + $0x98] sm:$0xff]
      %v4410 = vld [vmem:[#allocation3 + $0xa0] sm:$0xff]
      %v4411 = vld [vmem:[#allocation3 + $0xa8] sm:$0xff]
      %v4412 = vld [vmem:[#allocation3 + $0xb0] sm:$0xff]
      %v4413 = vld [vmem:[#allocation3 + $0xb8] sm:$0xff]
      %v4414 = vld [vmem:[#allocation3 + $0xc0] sm:$0xff]
      %v4415 = vld [vmem:[#allocation3 + $0xc8] sm:$0xff]
      %v4416 = vld [vmem:[#allocation3 + $0xd0] sm:$0xff]
      %v4417 = vld [vmem:[#allocation3 + $0xd8] sm:$0xff]
      %v4418 = vld [vmem:[#allocation3 + $0xe0] sm:$0xff]
      %v4419 = vld [vmem:[#allocation3 + $0xe8] sm:$0xff]
      %v4420 = vld [vmem:[#allocation3 + $0xf0] sm:$0xff]
      %v4421 = vld [vmem:[#allocation3 + $0xf8] sm:$0xff]
      %v4422 = vld [vmem:[%s4] sm:$0xff]
      %v4423 = vld [vmem:[%s4 + $0x8] sm:$0xff]
      %v4424 = vld [vmem:[%s4 + $0x10] sm:$0xff]
      %v4425 = vld [vmem:[%s4 + $0x18] sm:$0xff]
      %v4426 = vld [vmem:[%s4 + $0x20] sm:$0xf]
      %v4428 = vsel %vm2069, %v4390, 0
      %v4431 = vsel %vm2069, %v4391, 0
      %v4434 = vsel %vm2069, %v4392, 0
      %v4437 = vsel %vm2069, %v4393, 0
      %v4440 = vsel %vm2069, %v4394, 0
      %v4443 = vsel %vm2069, %v4395, 0
      %v4446 = vsel %vm2069, %v4396, 0
      %v4449 = vsel %vm2069, %v4397, 0
      %v4452 = vsel %vm2069, %v4398, 0
      %v4455 = vsel %vm2069, %v4399, 0
      %v4458 = vsel %vm2069, %v4400, 0
      %v4461 = vsel %vm2069, %v4401, 0
      %v4464 = vsel %vm2069, %v4402, 0
      %v4467 = vsel %vm2069, %v4403, 0
      %v4470 = vsel %vm2069, %v4404, 0
      %v4473 = vsel %vm2069, %v4405, 0
      %v4476 = vsel %vm2069, %v4406, 0
      %v4479 = vsel %vm2069, %v4407, 0
      %v4482 = vsel %vm2069, %v4408, 0
      %v4485 = vsel %vm2069, %v4409, 0
      %v4488 = vsel %vm2069, %v4410, 0
      %v4491 = vsel %vm2069, %v4411, 0
      %v4494 = vsel %vm2069, %v4412, 0
      %v4497 = vsel %vm2069, %v4413, 0
      %v4500 = vsel %vm2069, %v4414, 0
      %v4503 = vsel %vm2069, %v4415, 0
      %v4506 = vsel %vm2069, %v4416, 0
      %v4509 = vsel %vm2069, %v4417, 0
      %v4512 = vsel %vm2069, %v4418, 0
      %v4515 = vsel %vm2069, %v4419, 0
      %v4518 = vsel %vm2069, %v4420, 0
      %v4521 = vsel %vm2069, %v4421, 0
      %v4524 = vsel %vm2166, %v4426, 0
      %4526 = vmatprep.subr.mxu0 0.0
      %4527 = vmatpush1.msra.mxu0 0.0
      %4528 = vmatprep.subr.mxu0 0.0
      %4529 = vmatpush1.msra.mxu0 0.0
      %4530 = vmatprep.subr.mxu0 0.0
      %4531 = vmatpush1.msra.mxu0 0.0
      %4532 = vmatprep.subr.mxu0 0.0
      %4533 = vmatpush1.msra.mxu0 0.0
      %4534 = vmatprep.subr.mxu0 0.0
      %4535 = vmatpush1.msra.mxu0 0.0
      %4536 = vmatprep.subr.mxu0 0.0
      %4537 = vmatpush1.msra.mxu0 0.0
      %4538 = vmatprep.subr.mxu0 0.0
      %4539 = vmatpush1.msra.mxu0 0.0
      %4540 = vmatprep.subr.mxu0 0.0
      %4541 = vmatpush1.msra.mxu0 0.0
      %4542 = vmatprep.subr.mxu0 0.0
      %4543 = vmatpush1.msra.mxu0 0.0
      %4544 = vmatprep.subr.mxu0 0.0
      %4545 = vmatpush1.msra.mxu0 0.0
      %4546 = vmatprep.subr.mxu0 0.0
      %4547 = vmatpush1.msra.mxu0 0.0
      %4548 = vmatprep.subr.mxu0 0.0
      %4549 = vmatpush1.msra.mxu0 %v4524
      %4550 = vmatprep.subr.mxu0 0.0
      %4551 = vmatpush1.msra.mxu0 %v4425
      %4552 = vmatprep.subr.mxu0 0.0
      %4553 = vmatpush1.msra.mxu0 %v4424
      %4554 = vmatprep.subr.mxu0 0.0
      %4555 = vmatpush1.msra.mxu0 %v4423
      %4556 = vmatprep.subr.mxu0 0.0
      %4557 = vmatpush1.msra.mxu0 %v4422
      %4558 = vmatprep.subr.mxu0 0.0
      %4559 = vmatpush2.msra.mxu0 0.0
      %4560 = vmatprep.subr.mxu0 0.0
      %4561 = vmatpush2.msra.mxu0 0.0
      %4562 = vmatprep.subr.mxu0 0.0
      %4563 = vmatpush2.msra.mxu0 0.0
      %4564 = vmatprep.subr.mxu0 0.0
      %4565 = vmatpush2.msra.mxu0 0.0
      %4566 = vmatprep.subr.mxu0 0.0
      %4567 = vmatpush2.msra.mxu0 0.0
      %4568 = vmatprep.subr.mxu0 0.0
      %4569 = vmatpush2.msra.mxu0 0.0
      %4570 = vmatprep.subr.mxu0 0.0
      %4571 = vmatpush2.msra.mxu0 0.0
      %4572 = vmatprep.subr.mxu0 0.0
      %4573 = vmatpush2.msra.mxu0 0.0
      %4574 = vmatprep.subr.mxu0 0.0
      %4575 = vmatpush2.msra.mxu0 0.0
      %4576 = vmatprep.subr.mxu0 0.0
      %4577 = vmatpush2.msra.mxu0 0.0
      %4578 = vmatprep.subr.mxu0 0.0
      %4579 = vmatpush2.msra.mxu0 0.0
      %4580 = vmatprep.subr.mxu0 0.0
      %4581 = vmatpush2.msra.mxu0 0.0
      %4582 = vmatprep.subr.mxu0 0.0
      %4583 = vmatpush2.msra.mxu0 0.0
      %4584 = vmatprep.subr.mxu0 0.0
      %4585 = vmatpush2.msra.mxu0 0.0
      %4586 = vmatprep.subr.mxu0 0.0
      %4587 = vmatpush2.msra.mxu0 0.0
      %4588 = vmatprep.subr.mxu0 0.0
      %4589 = vmatpush2.msra.mxu0 0.0
      %4590 = vmatprep.mubr.f32.mxu0 0.0
      %4591 = vmatmul.mubr.f32.gmra.mxu0 %v4428
      %v4592 = vpop.f32.mrf.mxu0
      %v4593 = vadd.f32 0.0, %v4592
      %v4594 = vpop.f32.mrf.mxu0
      %4595 = vmatprep.mubr.f32.mxu0 0.0
      %4596 = vmatmul.mubr.f32.gmra.mxu0 %v4431
      %v4597 = vpop.f32.mrf.mxu0
      %v4598 = vadd.f32 0.0, %v4597
      %v4599 = vpop.f32.mrf.mxu0
      %4600 = vmatprep.mubr.f32.mxu0 0.0
      %4601 = vmatmul.mubr.f32.gmra.mxu0 %v4434
      %v4602 = vpop.f32.mrf.mxu0
      %v4603 = vadd.f32 0.0, %v4602
      %v4604 = vpop.f32.mrf.mxu0
      %4605 = vmatprep.mubr.f32.mxu0 0.0
      %4606 = vmatmul.mubr.f32.gmra.mxu0 %v4437
      %v4607 = vpop.f32.mrf.mxu0
      %v4608 = vadd.f32 0.0, %v4607
      %v4609 = vpop.f32.mrf.mxu0
      %4610 = vmatprep.mubr.f32.mxu0 0.0
      %4611 = vmatmul.mubr.f32.gmra.mxu0 %v4440
      %v4612 = vpop.f32.mrf.mxu0
      %v4613 = vadd.f32 0.0, %v4612
      %v4614 = vpop.f32.mrf.mxu0
      %4615 = vmatprep.mubr.f32.mxu0 0.0
      %4616 = vmatmul.mubr.f32.gmra.mxu0 %v4443
      %v4617 = vpop.f32.mrf.mxu0
      %v4618 = vadd.f32 0.0, %v4617
      %v4619 = vpop.f32.mrf.mxu0
      %4620 = vmatprep.mubr.f32.mxu0 0.0
      %4621 = vmatmul.mubr.f32.gmra.mxu0 %v4446
      %v4622 = vpop.f32.mrf.mxu0
      %v4623 = vadd.f32 0.0, %v4622
      %v4624 = vpop.f32.mrf.mxu0
      %4625 = vmatprep.mubr.f32.mxu0 0.0
      %4626 = vmatmul.mubr.f32.gmra.mxu0 %v4449
      %v4627 = vpop.f32.mrf.mxu0
      %v4628 = vadd.f32 0.0, %v4627
      %v4629 = vpop.f32.mrf.mxu0
      %4630 = vmatprep.mubr.f32.mxu0 0.0
      %4631 = vmatmul.mubr.f32.gmra.mxu0 %v4452
      %v4632 = vpop.f32.mrf.mxu0
      %v4633 = vadd.f32 0.0, %v4632
      %v4634 = vpop.f32.mrf.mxu0
      %4635 = vmatprep.mubr.f32.mxu0 0.0
      %4636 = vmatmul.mubr.f32.gmra.mxu0 %v4455
      %v4637 = vpop.f32.mrf.mxu0
      %v4638 = vadd.f32 0.0, %v4637
      %v4639 = vpop.f32.mrf.mxu0
      %4640 = vmatprep.mubr.f32.mxu0 0.0
      %4641 = vmatmul.mubr.f32.gmra.mxu0 %v4458
      %v4642 = vpop.f32.mrf.mxu0
      %v4643 = vadd.f32 0.0, %v4642
      %v4644 = vpop.f32.mrf.mxu0
      %4645 = vmatprep.mubr.f32.mxu0 0.0
      %4646 = vmatmul.mubr.f32.gmra.mxu0 %v4461
      %v4647 = vpop.f32.mrf.mxu0
      %v4648 = vadd.f32 0.0, %v4647
      %v4649 = vpop.f32.mrf.mxu0
      %4650 = vmatprep.mubr.f32.mxu0 0.0
      %4651 = vmatmul.mubr.f32.gmra.mxu0 %v4464
      %v4652 = vpop.f32.mrf.mxu0
      %v4653 = vadd.f32 0.0, %v4652
      %v4654 = vpop.f32.mrf.mxu0
      %4655 = vmatprep.mubr.f32.mxu0 0.0
      %4656 = vmatmul.mubr.f32.gmra.mxu0 %v4467
      %v4657 = vpop.f32.mrf.mxu0
      %v4658 = vadd.f32 0.0, %v4657
      %v4659 = vpop.f32.mrf.mxu0
      %4660 = vmatprep.mubr.f32.mxu0 0.0
      %4661 = vmatmul.mubr.f32.gmra.mxu0 %v4470
      %v4662 = vpop.f32.mrf.mxu0
      %v4663 = vadd.f32 0.0, %v4662
      %v4664 = vpop.f32.mrf.mxu0
      %4665 = vmatprep.mubr.f32.mxu0 0.0
      %4666 = vmatmul.mubr.f32.gmra.mxu0 %v4473
      %v4667 = vpop.f32.mrf.mxu0
      %v4668 = vadd.f32 0.0, %v4667
      %v4669 = vpop.f32.mrf.mxu0
      %4670 = vmatprep.mubr.f32.mxu0 0.0
      %4671 = vmatmul.mubr.f32.gmra.mxu0 %v4476
      %v4672 = vpop.f32.mrf.mxu0
      %v4673 = vadd.f32 0.0, %v4672
      %v4674 = vpop.f32.mrf.mxu0
      %4675 = vmatprep.mubr.f32.mxu0 0.0
      %4676 = vmatmul.mubr.f32.gmra.mxu0 %v4479
      %v4677 = vpop.f32.mrf.mxu0
      %v4678 = vadd.f32 0.0, %v4677
      %v4679 = vpop.f32.mrf.mxu0
      %4680 = vmatprep.mubr.f32.mxu0 0.0
      %4681 = vmatmul.mubr.f32.gmra.mxu0 %v4482
      %v4682 = vpop.f32.mrf.mxu0
      %v4683 = vadd.f32 0.0, %v4682
      %v4684 = vpop.f32.mrf.mxu0
      %4685 = vmatprep.mubr.f32.mxu0 0.0
      %4686 = vmatmul.mubr.f32.gmra.mxu0 %v4485
      %v4687 = vpop.f32.mrf.mxu0
      %v4688 = vadd.f32 0.0, %v4687
      %v4689 = vpop.f32.mrf.mxu0
      %4690 = vmatprep.mubr.f32.mxu0 0.0
      %4691 = vmatmul.mubr.f32.gmra.mxu0 %v4488
      %v4692 = vpop.f32.mrf.mxu0
      %v4693 = vadd.f32 0.0, %v4692
      %v4694 = vpop.f32.mrf.mxu0
      %4695 = vmatprep.mubr.f32.mxu0 0.0
      %4696 = vmatmul.mubr.f32.gmra.mxu0 %v4491
      %v4697 = vpop.f32.mrf.mxu0
      %v4698 = vadd.f32 0.0, %v4697
      %v4699 = vpop.f32.mrf.mxu0
      %4700 = vmatprep.mubr.f32.mxu0 0.0
      %4701 = vmatmul.mubr.f32.gmra.mxu0 %v4494
      %v4702 = vpop.f32.mrf.mxu0
      %v4703 = vadd.f32 0.0, %v4702
      %v4704 = vpop.f32.mrf.mxu0
      %4705 = vmatprep.mubr.f32.mxu0 0.0
      %4706 = vmatmul.mubr.f32.gmra.mxu0 %v4497
      %v4707 = vpop.f32.mrf.mxu0
      %v4708 = vadd.f32 0.0, %v4707
      %v4709 = vpop.f32.mrf.mxu0
      %4710 = vmatprep.mubr.f32.mxu0 0.0
      %4711 = vmatmul.mubr.f32.gmra.mxu0 %v4500
      %v4712 = vpop.f32.mrf.mxu0
      %v4713 = vadd.f32 0.0, %v4712
      %v4714 = vpop.f32.mrf.mxu0
      %4715 = vmatprep.mubr.f32.mxu0 0.0
      %4716 = vmatmul.mubr.f32.gmra.mxu0 %v4503
      %v4717 = vpop.f32.mrf.mxu0
      %v4718 = vadd.f32 0.0, %v4717
      %v4719 = vpop.f32.mrf.mxu0
      %4720 = vmatprep.mubr.f32.mxu0 0.0
      %4721 = vmatmul.mubr.f32.gmra.mxu0 %v4506
      %v4722 = vpop.f32.mrf.mxu0
      %v4723 = vadd.f32 0.0, %v4722
      %v4724 = vpop.f32.mrf.mxu0
      %4725 = vmatprep.mubr.f32.mxu0 0.0
      %4726 = vmatmul.mubr.f32.gmra.mxu0 %v4509
      %v4727 = vpop.f32.mrf.mxu0
      %v4728 = vadd.f32 0.0, %v4727
      %v4729 = vpop.f32.mrf.mxu0
      %4730 = vmatprep.mubr.f32.mxu0 0.0
      %4731 = vmatmul.mubr.f32.gmra.mxu0 %v4512
      %v4732 = vpop.f32.mrf.mxu0
      %v4733 = vadd.f32 0.0, %v4732
      %v4734 = vpop.f32.mrf.mxu0
      %4735 = vmatprep.mubr.f32.mxu0 0.0
      %4736 = vmatmul.mubr.f32.gmra.mxu0 %v4515
      %v4737 = vpop.f32.mrf.mxu0
      %v4738 = vadd.f32 0.0, %v4737
      %v4739 = vpop.f32.mrf.mxu0
      %4740 = vmatprep.mubr.f32.mxu0 0.0
      %4741 = vmatmul.mubr.f32.gmra.mxu0 %v4518
      %v4742 = vpop.f32.mrf.mxu0
      %v4743 = vadd.f32 0.0, %v4742
      %v4744 = vpop.f32.mrf.mxu0
      %4745 = vmatprep.mubr.f32.mxu0 0.0
      %4746 = vmatmul.mubr.f32.gmra.mxu0 %v4521
      %v4747 = vpop.f32.mrf.mxu0
      %v4748 = vadd.f32 0.0, %v4747
      %v4749 = vpop.f32.mrf.mxu0
      %4750 = vdwg.mxu0
      %v4751 = vsel %vm312, %v4593, 0.0
      %v4752 = vsel %vm312, %v4598, 0.0
      %v4753 = vadd.f32 %v4751, %v4752
      %v4754 = vsel %vm312, %v4603, 0.0
      %v4755 = vadd.f32 %v4753, %v4754
      %v4756 = vsel %vm312, %v4608, 0.0
      %v4757 = vadd.f32 %v4755, %v4756
      %v4758 = vsel %vm312, %v4613, 0.0
      %v4759 = vadd.f32 %v4757, %v4758
      %v4760 = vsel %vm312, %v4618, 0.0
      %v4761 = vadd.f32 %v4759, %v4760
      %v4762 = vsel %vm312, %v4623, 0.0
      %v4763 = vadd.f32 %v4761, %v4762
      %v4764 = vsel %vm312, %v4628, 0.0
      %v4765 = vadd.f32 %v4763, %v4764
      %v4766 = vsel %vm312, %v4633, 0.0
      %v4767 = vadd.f32 %v4765, %v4766
      %v4768 = vsel %vm312, %v4638, 0.0
      %v4769 = vadd.f32 %v4767, %v4768
      %v4770 = vsel %vm312, %v4643, 0.0
      %v4771 = vadd.f32 %v4769, %v4770
      %v4772 = vsel %vm312, %v4648, 0.0
      %v4773 = vadd.f32 %v4771, %v4772
      %v4774 = vsel %vm312, %v4653, 0.0
      %v4775 = vadd.f32 %v4773, %v4774
      %v4776 = vsel %vm312, %v4658, 0.0
      %v4777 = vadd.f32 %v4775, %v4776
      %v4778 = vsel %vm312, %v4663, 0.0
      %v4779 = vadd.f32 %v4777, %v4778
      %v4780 = vsel %vm312, %v4668, 0.0
      %v4781 = vadd.f32 %v4779, %v4780
      %v4782 = vsel %vm312, %v4673, 0.0
      %v4783 = vadd.f32 %v4781, %v4782
      %v4784 = vsel %vm312, %v4678, 0.0
      %v4785 = vadd.f32 %v4783, %v4784
      %v4786 = vsel %vm312, %v4683, 0.0
      %v4787 = vadd.f32 %v4785, %v4786
      %v4788 = vsel %vm312, %v4688, 0.0
      %v4789 = vadd.f32 %v4787, %v4788
      %v4790 = vsel %vm312, %v4693, 0.0
      %v4791 = vadd.f32 %v4789, %v4790
      %v4792 = vsel %vm312, %v4698, 0.0
      %v4793 = vadd.f32 %v4791, %v4792
      %v4794 = vsel %vm312, %v4703, 0.0
      %v4795 = vadd.f32 %v4793, %v4794
      %v4796 = vsel %vm312, %v4708, 0.0
      %v4797 = vadd.f32 %v4795, %v4796
      %v4798 = vsel %vm312, %v4713, 0.0
      %v4799 = vadd.f32 %v4797, %v4798
      %v4800 = vsel %vm312, %v4718, 0.0
      %v4801 = vadd.f32 %v4799, %v4800
      %v4802 = vsel %vm312, %v4723, 0.0
      %v4803 = vadd.f32 %v4801, %v4802
      %v4804 = vsel %vm312, %v4728, 0.0
      %v4805 = vadd.f32 %v4803, %v4804
      %v4806 = vsel %vm312, %v4733, 0.0
      %v4807 = vadd.f32 %v4805, %v4806
      %v4808 = vsel %vm312, %v4738, 0.0
      %v4809 = vadd.f32 %v4807, %v4808
      %v4810 = vsel %vm312, %v4743, 0.0
      %v4811 = vadd.f32 %v4809, %v4810
      %v4812 = vsel %vm312, %v4748, 0.0
      %v4813 = vadd.f32 %v4811, %v4812
      %v4814 = vrot.slane %v4813, 4
      %v4815 = vadd.f32 %v4813, %v4814
      %v4816 = vrot.slane %v4815, 2
      %v4817 = vadd.f32 %v4815, %v4816
      %v4818 = vrot.slane %v4817, 1
      %v4819 = vadd.f32 %v4817, %v4818
      %v4820 = vmul.f32 %v4819, 0.00390625
      %v4821 = vmul.f32 %v4593, %v4593
      %v4822 = vmul.f32 %v4598, %v4598
      %v4823 = vmul.f32 %v4603, %v4603
      %v4824 = vmul.f32 %v4608, %v4608
      %v4825 = vmul.f32 %v4613, %v4613
      %v4826 = vmul.f32 %v4618, %v4618
      %v4827 = vmul.f32 %v4623, %v4623
      %v4828 = vmul.f32 %v4628, %v4628
      %v4829 = vmul.f32 %v4633, %v4633
      %v4830 = vmul.f32 %v4638, %v4638
      %v4831 = vmul.f32 %v4643, %v4643
      %v4832 = vmul.f32 %v4648, %v4648
      %v4833 = vmul.f32 %v4653, %v4653
      %v4834 = vmul.f32 %v4658, %v4658
      %v4835 = vmul.f32 %v4663, %v4663
      %v4836 = vmul.f32 %v4668, %v4668
      %v4837 = vmul.f32 %v4673, %v4673
      %v4838 = vmul.f32 %v4678, %v4678
      %v4839 = vmul.f32 %v4683, %v4683
      %v4840 = vmul.f32 %v4688, %v4688
      %v4841 = vmul.f32 %v4693, %v4693
      %v4842 = vmul.f32 %v4698, %v4698
      %v4843 = vmul.f32 %v4703, %v4703
      %v4844 = vmul.f32 %v4708, %v4708
      %v4845 = vmul.f32 %v4713, %v4713
      %v4846 = vmul.f32 %v4718, %v4718
      %v4847 = vmul.f32 %v4723, %v4723
      %v4848 = vmul.f32 %v4728, %v4728
      %v4849 = vmul.f32 %v4733, %v4733
      %v4850 = vmul.f32 %v4738, %v4738
      %v4851 = vmul.f32 %v4743, %v4743
      %v4852 = vmul.f32 %v4748, %v4748
      %v4853 = vsel %vm312, %v4821, 0.0
      %v4854 = vsel %vm312, %v4822, 0.0
      %v4855 = vadd.f32 %v4853, %v4854
      %v4856 = vsel %vm312, %v4823, 0.0
      %v4857 = vadd.f32 %v4855, %v4856
      %v4858 = vsel %vm312, %v4824, 0.0
      %v4859 = vadd.f32 %v4857, %v4858
      %v4860 = vsel %vm312, %v4825, 0.0
      %v4861 = vadd.f32 %v4859, %v4860
      %v4862 = vsel %vm312, %v4826, 0.0
      %v4863 = vadd.f32 %v4861, %v4862
      %v4864 = vsel %vm312, %v4827, 0.0
      %v4865 = vadd.f32 %v4863, %v4864
      %v4866 = vsel %vm312, %v4828, 0.0
      %v4867 = vadd.f32 %v4865, %v4866
      %v4868 = vsel %vm312, %v4829, 0.0
      %v4869 = vadd.f32 %v4867, %v4868
      %v4870 = vsel %vm312, %v4830, 0.0
      %v4871 = vadd.f32 %v4869, %v4870
      %v4872 = vsel %vm312, %v4831, 0.0
      %v4873 = vadd.f32 %v4871, %v4872
      %v4874 = vsel %vm312, %v4832, 0.0
      %v4875 = vadd.f32 %v4873, %v4874
      %v4876 = vsel %vm312, %v4833, 0.0
      %v4877 = vadd.f32 %v4875, %v4876
      %v4878 = vsel %vm312, %v4834, 0.0
      %v4879 = vadd.f32 %v4877, %v4878
      %v4880 = vsel %vm312, %v4835, 0.0
      %v4881 = vadd.f32 %v4879, %v4880
      %v4882 = vsel %vm312, %v4836, 0.0
      %v4883 = vadd.f32 %v4881, %v4882
      %v4884 = vsel %vm312, %v4837, 0.0
      %v4885 = vadd.f32 %v4883, %v4884
      %v4886 = vsel %vm312, %v4838, 0.0
      %v4887 = vadd.f32 %v4885, %v4886
      %v4888 = vsel %vm312, %v4839, 0.0
      %v4889 = vadd.f32 %v4887, %v4888
      %v4890 = vsel %vm312, %v4840, 0.0
      %v4891 = vadd.f32 %v4889, %v4890
      %v4892 = vsel %vm312, %v4841, 0.0
      %v4893 = vadd.f32 %v4891, %v4892
      %v4894 = vsel %vm312, %v4842, 0.0
      %v4895 = vadd.f32 %v4893, %v4894
      %v4896 = vsel %vm312, %v4843, 0.0
      %v4897 = vadd.f32 %v4895, %v4896
      %v4898 = vsel %vm312, %v4844, 0.0
      %v4899 = vadd.f32 %v4897, %v4898
      %v4900 = vsel %vm312, %v4845, 0.0
      %v4901 = vadd.f32 %v4899, %v4900
      %v4902 = vsel %vm312, %v4846, 0.0
      %v4903 = vadd.f32 %v4901, %v4902
      %v4904 = vsel %vm312, %v4847, 0.0
      %v4905 = vadd.f32 %v4903, %v4904
      %v4906 = vsel %vm312, %v4848, 0.0
      %v4907 = vadd.f32 %v4905, %v4906
      %v4908 = vsel %vm312, %v4849, 0.0
      %v4909 = vadd.f32 %v4907, %v4908
      %v4910 = vsel %vm312, %v4850, 0.0
      %v4911 = vadd.f32 %v4909, %v4910
      %v4912 = vsel %vm312, %v4851, 0.0
      %v4913 = vadd.f32 %v4911, %v4912
      %v4914 = vsel %vm312, %v4852, 0.0
      %v4915 = vadd.f32 %v4913, %v4914
      %v4916 = vrot.slane %v4915, 4
      %v4917 = vadd.f32 %v4915, %v4916
      %v4918 = vrot.slane %v4917, 2
      %v4919 = vadd.f32 %v4917, %v4918
      %v4920 = vrot.slane %v4919, 1
      %v4921 = vadd.f32 %v4919, %v4920
      %v4922 = vmul.f32 %v4921, 0.00390625
      %v4923 = vmul.f32 %v4820, %v4820
      %v4924 = vsub.f32 %v4922, %v4923
      %v4925 = vadd.f32 %v4924, 1e-05
      %v4926 = vrsqrt.pop %v4925
      %v4927 = vld [vmem:[%s5] sm:$0x1]
      %v4928 = vmul.f32 %v4926, %v4927
      %v4929 = vld [vmem:[%s6] sm:$0x1]
      %v4930 = vmul.f32 %v4820, %v4928
      %v4931 = vsub.f32 %v4929, %v4930
      %v4932 = vlaneseq
      %v4933 = vshrl.u32 %v4932, 7
      %v4934 = vsub.s32 0, %v4933
      %v4935 = vrot.slane %v4928, %v4934
      %v4936 = vmul.f32 %v4593, %v4935
      %v4937 = vmul.f32 %v4598, %v4935
      %v4938 = vmul.f32 %v4603, %v4935
      %v4939 = vmul.f32 %v4608, %v4935
      %v4940 = vmul.f32 %v4613, %v4935
      %v4941 = vmul.f32 %v4618, %v4935
      %v4942 = vmul.f32 %v4623, %v4935
      %v4943 = vmul.f32 %v4628, %v4935
      %v4944 = vmul.f32 %v4633, %v4935
      %v4945 = vmul.f32 %v4638, %v4935
      %v4946 = vmul.f32 %v4643, %v4935
      %v4947 = vmul.f32 %v4648, %v4935
      %v4948 = vmul.f32 %v4653, %v4935
      %v4949 = vmul.f32 %v4658, %v4935
      %v4950 = vmul.f32 %v4663, %v4935
      %v4951 = vmul.f32 %v4668, %v4935
      %v4952 = vmul.f32 %v4673, %v4935
      %v4953 = vmul.f32 %v4678, %v4935
      %v4954 = vmul.f32 %v4683, %v4935
      %v4955 = vmul.f32 %v4688, %v4935
      %v4956 = vmul.f32 %v4693, %v4935
      %v4957 = vmul.f32 %v4698, %v4935
      %v4958 = vmul.f32 %v4703, %v4935
      %v4959 = vmul.f32 %v4708, %v4935
      %v4960 = vmul.f32 %v4713, %v4935
      %v4961 = vmul.f32 %v4718, %v4935
      %v4962 = vmul.f32 %v4723, %v4935
      %v4963 = vmul.f32 %v4728, %v4935
      %v4964 = vmul.f32 %v4733, %v4935
      %v4965 = vmul.f32 %v4738, %v4935
      %v4966 = vmul.f32 %v4743, %v4935
      %v4967 = vmul.f32 %v4748, %v4935
      %v4969 = vlaneseq
      %v4970 = vshrl.u32 %v4969, 7
      %v4971 = vsub.s32 0, %v4970
      %v4972 = vrot.slane %v4931, %v4971
      %v4974 = vadd.f32 %v4936, %v4972
      %v4975 = vadd.f32 %v4937, %v4972
      %v4976 = vadd.f32 %v4938, %v4972
      %v4977 = vadd.f32 %v4939, %v4972
      %v4978 = vadd.f32 %v4940, %v4972
      %v4979 = vadd.f32 %v4941, %v4972
      %v4980 = vadd.f32 %v4942, %v4972
      %v4981 = vadd.f32 %v4943, %v4972
      %v4982 = vadd.f32 %v4944, %v4972
      %v4983 = vadd.f32 %v4945, %v4972
      %v4984 = vadd.f32 %v4946, %v4972
      %v4985 = vadd.f32 %v4947, %v4972
      %v4986 = vadd.f32 %v4948, %v4972
      %v4987 = vadd.f32 %v4949, %v4972
      %v4988 = vadd.f32 %v4950, %v4972
      %v4989 = vadd.f32 %v4951, %v4972
      %v4990 = vadd.f32 %v4952, %v4972
      %v4991 = vadd.f32 %v4953, %v4972
      %v4992 = vadd.f32 %v4954, %v4972
      %v4993 = vadd.f32 %v4955, %v4972
      %v4994 = vadd.f32 %v4956, %v4972
      %v4995 = vadd.f32 %v4957, %v4972
      %v4996 = vadd.f32 %v4958, %v4972
      %v4997 = vadd.f32 %v4959, %v4972
      %v4998 = vadd.f32 %v4960, %v4972
      %v4999 = vadd.f32 %v4961, %v4972
      %v5000 = vadd.f32 %v4962, %v4972
      %v5001 = vadd.f32 %v4963, %v4972
      %v5002 = vadd.f32 %v4964, %v4972
      %v5003 = vadd.f32 %v4965, %v4972
      %v5004 = vadd.f32 %v4966, %v4972
      %v5005 = vadd.f32 %v4967, %v4972
      %v5006 = vadd.f32 %v4974, %v279
      %v5007 = vadd.f32 %v4975, %v280
      %v5008 = vadd.f32 %v4976, %v281
      %v5009 = vadd.f32 %v4977, %v282
      %v5010 = vadd.f32 %v4978, %v283
      %v5011 = vadd.f32 %v4979, %v284
      %v5012 = vadd.f32 %v4980, %v285
      %v5013 = vadd.f32 %v4981, %v286
      %v5014 = vadd.f32 %v4982, %v287
      %v5015 = vadd.f32 %v4983, %v288
      %v5016 = vadd.f32 %v4984, %v289
      %v5017 = vadd.f32 %v4985, %v290
      %v5018 = vadd.f32 %v4986, %v291
      %v5019 = vadd.f32 %v4987, %v292
      %v5020 = vadd.f32 %v4988, %v293
      %v5021 = vadd.f32 %v4989, %v294
      %v5022 = vadd.f32 %v4990, %v295
      %v5023 = vadd.f32 %v4991, %v296
      %v5024 = vadd.f32 %v4992, %v297
      %v5025 = vadd.f32 %v4993, %v298
      %v5026 = vadd.f32 %v4994, %v299
      %v5027 = vadd.f32 %v4995, %v300
      %v5028 = vadd.f32 %v4996, %v301
      %v5029 = vadd.f32 %v4997, %v302
      %v5030 = vadd.f32 %v4998, %v303
      %v5031 = vadd.f32 %v4999, %v304
      %v5032 = vadd.f32 %v5000, %v305
      %v5033 = vadd.f32 %v5001, %v306
      %v5034 = vadd.f32 %v5002, %v307
      %v5035 = vadd.f32 %v5003, %v308
      %v5036 = vadd.f32 %v5004, %v309
      %v5037 = vadd.f32 %v5005, %v310
      %5038 = vst.msk [vmem:[%s278] sm:$0xff] %vm312, %v5006
      %5039 = vst.msk [vmem:[%s278 + $0x8] sm:$0xff] %vm312, %v5007
      %5040 = vst.msk [vmem:[%s278 + $0x10] sm:$0xff] %vm312, %v5008
      %5041 = vst.msk [vmem:[%s278 + $0x18] sm:$0xff] %vm312, %v5009
      %5042 = vst.msk [vmem:[%s278 + $0x20] sm:$0xff] %vm312, %v5010
      %5043 = vst.msk [vmem:[%s278 + $0x28] sm:$0xff] %vm312, %v5011
      %5044 = vst.msk [vmem:[%s278 + $0x30] sm:$0xff] %vm312, %v5012
      %5045 = vst.msk [vmem:[%s278 + $0x38] sm:$0xff] %vm312, %v5013
      %5046 = vst.msk [vmem:[%s278 + $0x40] sm:$0xff] %vm312, %v5014
      %5047 = vst.msk [vmem:[%s278 + $0x48] sm:$0xff] %vm312, %v5015
      %5048 = vst.msk [vmem:[%s278 + $0x50] sm:$0xff] %vm312, %v5016
      %5049 = vst.msk [vmem:[%s278 + $0x58] sm:$0xff] %vm312, %v5017
      %5050 = vst.msk [vmem:[%s278 + $0x60] sm:$0xff] %vm312, %v5018
      %5051 = vst.msk [vmem:[%s278 + $0x68] sm:$0xff] %vm312, %v5019
      %5052 = vst.msk [vmem:[%s278 + $0x70] sm:$0xff] %vm312, %v5020
      %5053 = vst.msk [vmem:[%s278 + $0x78] sm:$0xff] %vm312, %v5021
      %5054 = vst.msk [vmem:[%s278 + $0x80] sm:$0xff] %vm312, %v5022
      %5055 = vst.msk [vmem:[%s278 + $0x88] sm:$0xff] %vm312, %v5023
      %5056 = vst.msk [vmem:[%s278 + $0x90] sm:$0xff] %vm312, %v5024
      %5057 = vst.msk [vmem:[%s278 + $0x98] sm:$0xff] %vm312, %v5025
      %5058 = vst.msk [vmem:[%s278 + $0xa0] sm:$0xff] %vm312, %v5026
      %5059 = vst.msk [vmem:[%s278 + $0xa8] sm:$0xff] %vm312, %v5027
      %5060 = vst.msk [vmem:[%s278 + $0xb0] sm:$0xff] %vm312, %v5028
      %5061 = vst.msk [vmem:[%s278 + $0xb8] sm:$0xff] %vm312, %v5029
      %5062 = vst.msk [vmem:[%s278 + $0xc0] sm:$0xff] %vm312, %v5030
      %5063 = vst.msk [vmem:[%s278 + $0xc8] sm:$0xff] %vm312, %v5031
      %5064 = vst.msk [vmem:[%s278 + $0xd0] sm:$0xff] %vm312, %v5032
      %5065 = vst.msk [vmem:[%s278 + $0xd8] sm:$0xff] %vm312, %v5033
      %5066 = vst.msk [vmem:[%s278 + $0xe0] sm:$0xff] %vm312, %v5034
      %5067 = vst.msk [vmem:[%s278 + $0xe8] sm:$0xff] %vm312, %v5035
      %5068 = vst.msk [vmem:[%s278 + $0xf0] sm:$0xff] %vm312, %v5036
      %5069 = vst.msk [vmem:[%s278 + $0xf8] sm:$0xff] %vm312, %v5037
      %p5070 = scmp.lt.s32.totalorder %s18, 1
      %s5071 = scalar_select %p5070, %s18, 1
      %s5072 = smul.addr %s5071, 32
      %s5073 = smul.addr %s5072, 8
      %s5074 = scalar_lea.vmem %s7, %s5073
      // Predicated region
      $region49: #{tpu_custom_call.1} parent=47 // pred_check
        %p5075 = pneg %p188
      $region50: #{tpu_custom_call.1} parent=47 // pred_check_branch
        %5077 = sbr.rel (%p5075) target = $region52
      $region51: #{tpu_custom_call.1} parent=47 // pred_region
        _
      $region52: #{tpu_custom_call.1} parent=47 // pred_fallthru
        _
    $region48: #{tpu_custom_call.1} parent=5 // pred_fallthru
      _
    %p5078 = scmp.le.s32.totalorder 2, %s13
    // Predicated region
    $region53: #{tpu_custom_call.1} parent=5 // pred_check
      %p5079 = pneg %p5078
    $region54: #{tpu_custom_call.1} parent=5 // pred_check_branch
      %5081 = sbr.rel (%p5079) target = $region56
    $region55: #{tpu_custom_call.1} parent=5 // pred_region
      %s5082 = ssub.s32 %s13, 2
      // Predicated region
      $region57: #{tpu_custom_call.1} parent=55 // pred_check
        %p5083 = pneg %p194
      $region58: #{tpu_custom_call.1} parent=55 // pred_check_branch
        %5085 = sbr.rel (%p5083) target = $region60
      $region59: #{tpu_custom_call.1} parent=55 // pred_region
        %p5086 = scmp.lt.s32.totalorder %s19, 1
        %s5087 = scalar_select %p5086, %s19, 1
        %s5088 = smul.addr %s5087, 32
        %s5089 = smul.addr %s5088, 8
        %s5090 = scalar_lea.vmem %s7, %s5089
      $region60: #{tpu_custom_call.1} parent=55 // pred_fallthru
        _
    $region56: #{tpu_custom_call.1} parent=5 // pred_fallthru
      _
  $region6: #{tpu_custom_call.1} parent=0 // loop_footer
    %s17 = sadd.s32 1, %s13
  $region7: #{tpu_custom_call.1} parent=0 // loop_footer_branch
    %12 = sbr.rel target = $region3
  $region8: #{tpu_custom_call.1} parent=0 // loop_exit
    _

</llo_original>
